<compile_context>
chip_gen: v7x
topology: tpu7x:2x2x1
jax: 0.10.0
libtpu: 0.0.40
codegen_flags: <defaults>
</compile_context>

<pallas_src>
import math
import functools

import numpy as np
import jax
import jax.numpy as jnp
from jax import lax
from jax.experimental import pallas as pl
from jax.experimental.pallas import tpu as pltpu


# ---------------------------------------------------------------------------
# LayerNorm helper (float32, eps matches nn.LayerNorm default)
# ---------------------------------------------------------------------------
def _layernorm(x, gamma, beta, eps=1e-5):
    mu = jnp.mean(x, axis=-1, keepdims=True)
    var = jnp.mean((x - mu) ** 2, axis=-1, keepdims=True)
    return (x - mu) * lax.rsqrt(var + eps) * gamma + beta


# ---------------------------------------------------------------------------
# Fused per-batch encoder kernel: PE add + num_layers * (MHA + LN + FF + LN).
# One grid step == one batch element; weights resident across the whole grid.
# ---------------------------------------------------------------------------
def _encoder_kernel(
    emb_ref, pe_ref, mask_ref,
    wqkv_ref, bqkv_ref, wo_ref, bo_ref,
    w1_ref, b1_ref, w2_ref, b2_ref,
    g1_ref, be1_ref, g2_ref, be2_ref,
    out_ref, *, num_layers, d_model, num_heads,
):
    f32 = jnp.float32
    bf16 = jnp.bfloat16

    _, S, D = emb_ref.shape            # (1, S, D) block for this batch element
    H = num_heads
    dep = D // H

    s = math.sqrt(d_model)
    emb_scale = f32(s * s)             # emb *= sqrt(d); then sqrt(d)*emb + PE
    inv_sqrt_dep = f32(1.0 / math.sqrt(dep))

    # Fused embedding scale + positional encoding (dropout_1 = identity, eval mode).
    x = emb_ref[0] * emb_scale + pe_ref[...]           # (S, D) f32

    # Additive key-padding mask bias, hoisted out of the layer loop: (1, 1, S).
    mask_bias = mask_ref[...] * f32(-1e9)

    # Weights: constant index_maps -> DMA'd once, stay resident in VMEM.
    wqkv = wqkv_ref[...]; bqkv = bqkv_ref[...]
    wo = wo_ref[...];     bo = bo_ref[...]
    w1 = w1_ref[...];     b1 = b1_ref[...]
    w2 = w2_ref[...];     b2 = b2_ref[...]
    g1 = g1_ref[...];     be1 = be1_ref[...]
    g2 = g2_ref[...];     be2 = be2_ref[...]

    def layer(_, x):
        xb = x.astype(bf16)

        # Fused Q|K|V projection: one lane-dense (S, D) @ (D, 3D) MXU push.
        qkv = jnp.dot(xb, wqkv, preferred_element_type=f32) + bqkv       # (S, 3D)
        q3 = qkv[:, 0 * D:1 * D].reshape(S, H, dep).astype(bf16)
        k3 = qkv[:, 1 * D:2 * D].reshape(S, H, dep).astype(bf16)
        v3 = qkv[:, 2 * D:3 * D].reshape(S, H, dep).astype(bf16)

        # Scaled dot-product attention, batched over heads.
        logits = jnp.einsum("qhe,khe->hqk", q3, k3,
                            preferred_element_type=f32) * inv_sqrt_dep    # (H, S, S)
        logits = logits + mask_bias                                       # key padding
        logits = logits - jnp.max(logits, axis=-1, keepdims=True)
        p = jnp.exp(logits)
        p = p * pl.reciprocal(jnp.sum(p, axis=-1, keepdims=True), approx=True)

        o = jnp.einsum("hqk,khe->qhe", p.astype(bf16), v3,
                       preferred_element_type=f32)                        # (S, H, dep)

        # Output projection: single (S, H*dep) @ (D, D) matmul == concat @ Wo.
        attn = jnp.dot(o.reshape(S, D).astype(bf16), wo,
                       preferred_element_type=f32) + bo                   # (S, D)

        # dropout_1 is identity (eval mode)
        h1 = _layernorm(x + attn, g1, be1)

        ff = jnp.dot(h1.astype(bf16), w1, preferred_element_type=f32) + b1
        ff = jnp.maximum(ff, 0.0)
        ff = jnp.dot(ff.astype(bf16), w2, preferred_element_type=f32) + b2

        # dropout_2 is identity (eval mode)
        return _layernorm(h1 + ff, g2, be2)

    if num_layers > 4:
        # Deep stacks: bound live ranges / code size; weights stay closure-resident.
        x = lax.fori_loop(0, num_layers, layer, x)
    else:
        for i in range(num_layers):
            x = layer(i, x)

    # TODO(synk): D=32 (< 128 lanes) output remains a masked partial store at these
    # demo sizes; at production model sizes pad D / d_ff / head_dim to multiples of
    # 128 (256 for v6e/v7x MXU fill) for lane-dense stores and full MXU columns.
    out_ref[0] = x


# ---------------------------------------------------------------------------
# Positional encoding table (matches the PyTorch double-loop formula exactly,
# including the 2*i exponent quirk).
# ---------------------------------------------------------------------------
def make_positional_encoding(position, d_model):
    pe = np.zeros((position, d_model), dtype=np.float32)
    for pos in range(position):
        for i in range(0, d_model, 2):
            pe[pos, i] = math.sin(pos / 10000 ** (2 * i / d_model))
            pe[pos, i + 1] = math.cos(pos / 10000 ** (2 * i / d_model))
    return jnp.asarray(pe)


# ---------------------------------------------------------------------------
# Full Encoder forward (wrapper: gather + layout plumbing + one pallas_call)
# ---------------------------------------------------------------------------
def encoder_forward(token_ids, padding_mask, params, *, d_model, num_layers, num_heads):
    B, S = token_ids.shape
    D = d_model
    d_ff = params["w1"].shape[1]
    bf16 = jnp.bfloat16

    # Embedding gather (plain JAX glue; not the hot path at these sizes).
    # TODO(synk): at production B*S, gather inside the kernel instead (scalar-prefetch
    # token ids + row-gather DMA) to skip one (B*S, D) HBM write+read round trip.
    emb = jnp.take(params["embedding"], token_ids, axis=0)               # (B, S, D) f32
    pe = params["pe"][:S]                                                # (S, D), no B× tile

    # Fused Q|K|V weight (column-stacked wq|wk|wv) and bias, prepared once, bf16.
    wqkv = jnp.concatenate(
        [params["wq"], params["wk"], params["wv"]], axis=1).astype(bf16)  # (D, 3D)
    bqkv = jnp.concatenate(
        [params["bq"], params["bk"], params["bv"]], axis=1)               # (1, 3D) f32

    const = lambda b: (0, 0)        # weights: same block every step -> DMA'd once
    batch3 = lambda b: (b, 0, 0)    # activations / mask / output: tiled per batch

    grid_spec = pltpu.PrefetchScalarGridSpec(
        num_scalar_prefetch=0,
        grid=(B,),
        in_specs=[
            pl.BlockSpec((1, S, D), batch3),          # emb
            pl.BlockSpec((S, D), const),              # positional encoding
            pl.BlockSpec((1, 1, S), batch3),          # padding mask
            pl.BlockSpec((D, 3 * D), const),          # wqkv (bf16)
            pl.BlockSpec((1, 3 * D), const),          # bqkv
            pl.BlockSpec((D, D), const),              # wo (bf16)
            pl.BlockSpec((1, D), const),              # bo
            pl.BlockSpec((D, d_ff), const),           # w1 (bf16)
            pl.BlockSpec((1, d_ff), const),           # b1
            pl.BlockSpec((d_ff, D), const),           # w2 (bf16)
            pl.BlockSpec((1, D), const),              # b2
            pl.BlockSpec((1, D), const),              # ln1 gamma
            pl.BlockSpec((1, D), const),              # ln1 beta
            pl.BlockSpec((1, D), const),              # ln2 gamma
            pl.BlockSpec((1, D), const),              # ln2 beta
        ],
        out_specs=pl.BlockSpec((1, S, D), batch3),
    )

    out = pl.pallas_call(
        functools.partial(_encoder_kernel, num_layers=num_layers,
                          d_model=d_model, num_heads=num_heads),
        out_shape=jax.ShapeDtypeStruct((B, S, D), jnp.float32),
        grid_spec=grid_spec,
        compiler_params=pltpu.CompilerParams(
            # Batch axis is independent -> megacore-shardable on v7x (harmless on
            # single-TC v5e/v6e).  Explicit VMEM budget (weights + double-buffered
            # per-batch activation tiles fit easily at these sizes).
            dimension_semantics=("parallel",),
            vmem_limit_bytes=32 * 1024 * 1024,
        ),
    )(
        emb, pe, padding_mask,
        wqkv, bqkv, params["wo"].astype(bf16), params["bo"],
        params["w1"].astype(bf16), params["b1"],
        params["w2"].astype(bf16), params["b2"],
        params["ln1_g"], params["ln1_b"], params["ln2_g"], params["ln2_b"],
    )
    return out


# ---------------------------------------------------------------------------
# Deterministic parameter construction
# ---------------------------------------------------------------------------
def init_params(key, text_embedding_vectors, vocab_size, d_model, d_ff):
    ks = jax.random.split(key, 12)
    s = 0.02
    params = {
        "embedding": jax.random.normal(ks[0], (text_embedding_vectors, d_model), jnp.float32) * s,
        "pe": make_positional_encoding(vocab_size, d_model),
        "wq": jax.random.normal(ks[1], (d_model, d_model), jnp.float32) * s,
        "bq": jax.random.normal(ks[2], (1, d_model), jnp.float32) * s,
        "wk": jax.random.normal(ks[3], (d_model, d_model), jnp.float32) * s,
        "bk": jax.random.normal(ks[4], (1, d_model), jnp.float32) * s,
        "wv": jax.random.normal(ks[5], (d_model, d_model), jnp.float32) * s,
        "bv": jax.random.normal(ks[6], (1, d_model), jnp.float32) * s,
        "wo": jax.random.normal(ks[7], (d_model, d_model), jnp.float32) * s,
        "bo": jax.random.normal(ks[8], (1, d_model), jnp.float32) * s,
        "w1": jax.random.normal(ks[9], (d_model, d_ff), jnp.float32) * s,
        "b1": jax.random.normal(ks[10], (1, d_ff), jnp.float32) * s,
        "w2": jax.random.normal(ks[11], (d_ff, d_model), jnp.float32) * s,
        "b2": jnp.zeros((1, d_model), jnp.float32),
        "ln1_g": jnp.ones((1, d_model), jnp.float32),
        "ln1_b": jnp.zeros((1, d_model), jnp.float32),
        "ln2_g": jnp.ones((1, d_model), jnp.float32),
        "ln2_b": jnp.zeros((1, d_model), jnp.float32),
    }
    return params


if __name__ == "__main__":
    # Small, deterministic config
    B = 2                 # batch
    S = 8                 # sequence length (== vocab_size / fix_length in the module)
    D_MODEL = 32
    D_FF = 64
    NUM_HEADS = 4
    NUM_LAYERS = 2
    TEXT_EMB_VECTORS = 50  # embedding table rows

    key = jax.random.PRNGKey(0)
    k_ids, k_params = jax.random.split(key)

    token_ids = jax.random.randint(k_ids, (B, S), 0, TEXT_EMB_VECTORS, dtype=jnp.int32)
    # padding mask: 1.0 where token id == 0 (pad), 0.0 otherwise; shape (B, 1, S)
    padding_mask = (token_ids == 0).astype(jnp.float32)[:, None, :]

    params = init_params(k_params, TEXT_EMB_VECTORS, S, D_MODEL, D_FF)

    out = encoder_forward(
        token_ids, padding_mask, params,
        d_model=D_MODEL, num_layers=NUM_LAYERS, num_heads=NUM_HEADS,
    )
    out = jax.block_until_ready(out)
    assert out.shape == (B, S, D_MODEL) and out.dtype == jnp.float32
    assert bool(jnp.all(jnp.isfinite(out)))
    print("KERNEL_OK")
</pallas_src>

<mosaic_0001>
module attributes {stable_mosaic.version = 11 : i64} {
  func.func @_encoder_kernel(%arg0: i32, %arg1: memref<1x8x32xf32, #tpu.memory_space<vmem>>, %arg2: memref<8x32xf32, #tpu.memory_space<vmem>>, %arg3: memref<1x1x8xf32, #tpu.memory_space<vmem>>, %arg4: memref<32x96xbf16, #tpu.memory_space<vmem>>, %arg5: memref<1x96xf32, #tpu.memory_space<vmem>>, %arg6: memref<32x32xbf16, #tpu.memory_space<vmem>>, %arg7: memref<1x32xf32, #tpu.memory_space<vmem>>, %arg8: memref<32x64xbf16, #tpu.memory_space<vmem>>, %arg9: memref<1x64xf32, #tpu.memory_space<vmem>>, %arg10: memref<64x32xbf16, #tpu.memory_space<vmem>>, %arg11: memref<1x32xf32, #tpu.memory_space<vmem>>, %arg12: memref<1x32xf32, #tpu.memory_space<vmem>>, %arg13: memref<1x32xf32, #tpu.memory_space<vmem>>, %arg14: memref<1x32xf32, #tpu.memory_space<vmem>>, %arg15: memref<1x32xf32, #tpu.memory_space<vmem>>, %arg16: memref<1x8x32xf32, #tpu.memory_space<vmem>>) attributes {dimension_semantics = [#tpu.dimension_semantics<parallel>], iteration_bounds = array<i64: 2>, scalar_prefetch = 0 : i64, scratch_operands = 0 : i64, tpu.core_type = #tpu.core_type<tc>, window_params = [{transform_indices = @transform_0, window_bounds = array<i64: 1, 8, 32>}, {pipeline_mode = #tpu.pipeline_mode<synchronous>, transform_indices = @transform_1, window_bounds = array<i64: 8, 32>}, {transform_indices = @transform_2, window_bounds = array<i64: 1, 1, 8>}, {pipeline_mode = #tpu.pipeline_mode<synchronous>, transform_indices = @transform_3, window_bounds = array<i64: 32, 96>}, {pipeline_mode = #tpu.pipeline_mode<synchronous>, transform_indices = @transform_4, window_bounds = array<i64: 1, 96>}, {pipeline_mode = #tpu.pipeline_mode<synchronous>, transform_indices = @transform_5, window_bounds = array<i64: 32, 32>}, {pipeline_mode = #tpu.pipeline_mode<synchronous>, transform_indices = @transform_6, window_bounds = array<i64: 1, 32>}, {pipeline_mode = #tpu.pipeline_mode<synchronous>, transform_indices = @transform_7, window_bounds = array<i64: 32, 64>}, {pipeline_mode = #tpu.pipeline_mode<synchronous>, transform_indices = @transform_8, window_bounds = array<i64: 1, 64>}, {pipeline_mode = #tpu.pipeline_mode<synchronous>, transform_indices = @transform_9, window_bounds = array<i64: 64, 32>}, {pipeline_mode = #tpu.pipeline_mode<synchronous>, transform_indices = @transform_10, window_bounds = array<i64: 1, 32>}, {pipeline_mode = #tpu.pipeline_mode<synchronous>, transform_indices = @transform_11, window_bounds = array<i64: 1, 32>}, {pipeline_mode = #tpu.pipeline_mode<synchronous>, transform_indices = @transform_12, window_bounds = array<i64: 1, 32>}, {pipeline_mode = #tpu.pipeline_mode<synchronous>, transform_indices = @transform_13, window_bounds = array<i64: 1, 32>}, {pipeline_mode = #tpu.pipeline_mode<synchronous>, transform_indices = @transform_14, window_bounds = array<i64: 1, 32>}, {transform_indices = @transform_15, window_bounds = array<i64: 1, 8, 32>}]} {
    %c0 = arith.constant 0 : index
    %c0_0 = arith.constant 0 : index
    %c0_1 = arith.constant 0 : index
    %0 = vector.load %arg1[%c0, %c0_0, %c0_1] : memref<1x8x32xf32, #tpu.memory_space<vmem>>, vector<1x8x32xf32>
    %1 = vector.shape_cast %0 : vector<1x8x32xf32> to vector<8x32xf32>
    %cst = arith.constant 3.200000e+01 : f32
    %2 = vector.broadcast %cst : f32 to vector<8x32xf32>
    %3 = arith.mulf %1, %2 : vector<8x32xf32>
    %c0_2 = arith.constant 0 : index
    %c0_3 = arith.constant 0 : index
    %4 = vector.load %arg2[%c0_2, %c0_3] : memref<8x32xf32, #tpu.memory_space<vmem>>, vector<8x32xf32>
    %5 = arith.addf %3, %4 : vector<8x32xf32>
    %c0_4 = arith.constant 0 : index
    %c0_5 = arith.constant 0 : index
    %c0_6 = arith.constant 0 : index
    %6 = vector.load %arg3[%c0_4, %c0_5, %c0_6] : memref<1x1x8xf32, #tpu.memory_space<vmem>>, vector<1x1x8xf32>
    %cst_7 = arith.constant -1.000000e+09 : f32
    %7 = vector.broadcast %cst_7 : f32 to vector<1x1x8xf32>
    %8 = arith.mulf %6, %7 : vector<1x1x8xf32>
    %c0_8 = arith.constant 0 : index
    %c0_9 = arith.constant 0 : index
    %9 = vector.load %arg4[%c0_8, %c0_9] : memref<32x96xbf16, #tpu.memory_space<vmem>>, vector<32x96xbf16>
    %c0_10 = arith.constant 0 : index
    %c0_11 = arith.constant 0 : index
    %10 = vector.load %arg5[%c0_10, %c0_11] : memref<1x96xf32, #tpu.memory_space<vmem>>, vector<1x96xf32>
    %c0_12 = arith.constant 0 : index
    %c0_13 = arith.constant 0 : index
    %11 = vector.load %arg6[%c0_12, %c0_13] : memref<32x32xbf16, #tpu.memory_space<vmem>>, vector<32x32xbf16>
    %c0_14 = arith.constant 0 : index
    %c0_15 = arith.constant 0 : index
    %12 = vector.load %arg7[%c0_14, %c0_15] : memref<1x32xf32, #tpu.memory_space<vmem>>, vector<1x32xf32>
    %c0_16 = arith.constant 0 : index
    %c0_17 = arith.constant 0 : index
    %13 = vector.load %arg8[%c0_16, %c0_17] : memref<32x64xbf16, #tpu.memory_space<vmem>>, vector<32x64xbf16>
    %c0_18 = arith.constant 0 : index
    %c0_19 = arith.constant 0 : index
    %14 = vector.load %arg9[%c0_18, %c0_19] : memref<1x64xf32, #tpu.memory_space<vmem>>, vector<1x64xf32>
    %c0_20 = arith.constant 0 : index
    %c0_21 = arith.constant 0 : index
    %15 = vector.load %arg10[%c0_20, %c0_21] : memref<64x32xbf16, #tpu.memory_space<vmem>>, vector<64x32xbf16>
    %c0_22 = arith.constant 0 : index
    %c0_23 = arith.constant 0 : index
    %16 = vector.load %arg11[%c0_22, %c0_23] : memref<1x32xf32, #tpu.memory_space<vmem>>, vector<1x32xf32>
    %c0_24 = arith.constant 0 : index
    %c0_25 = arith.constant 0 : index
    %17 = vector.load %arg12[%c0_24, %c0_25] : memref<1x32xf32, #tpu.memory_space<vmem>>, vector<1x32xf32>
    %c0_26 = arith.constant 0 : index
    %c0_27 = arith.constant 0 : index
    %18 = vector.load %arg13[%c0_26, %c0_27] : memref<1x32xf32, #tpu.memory_space<vmem>>, vector<1x32xf32>
    %c0_28 = arith.constant 0 : index
    %c0_29 = arith.constant 0 : index
    %19 = vector.load %arg14[%c0_28, %c0_29] : memref<1x32xf32, #tpu.memory_space<vmem>>, vector<1x32xf32>
    %c0_30 = arith.constant 0 : index
    %c0_31 = arith.constant 0 : index
    %20 = vector.load %arg15[%c0_30, %c0_31] : memref<1x32xf32, #tpu.memory_space<vmem>>, vector<1x32xf32>
    %21 = arith.truncf %5 : vector<8x32xf32> to vector<8x32xbf16>
    %cst_32 = arith.constant dense<0.000000e+00> : vector<8x96xf32>
    %22 = tpu.matmul %21, %9, %cst_32 {dimension_numbers = #tpu.dot_dimension_numbers<[1], [0], [0], [1], [0, 0, 1, 1], [], []>} : vector<8x32xbf16>, vector<32x96xbf16>, vector<8x96xf32> -> vector<8x96xf32>
    %23 = vector.broadcast %10 : vector<1x96xf32> to vector<8x96xf32>
    %24 = arith.addf %22, %23 : vector<8x96xf32>
    %25 = vector.extract_strided_slice %24 {offsets = [0, 0], sizes = [8, 32], strides = [1, 1]} : vector<8x96xf32> to vector<8x32xf32>
    %26 = vector.shape_cast %25 : vector<8x32xf32> to vector<8x4x8xf32>
    %27 = arith.truncf %26 : vector<8x4x8xf32> to vector<8x4x8xbf16>
    %28 = vector.extract_strided_slice %24 {offsets = [0, 32], sizes = [8, 32], strides = [1, 1]} : vector<8x96xf32> to vector<8x32xf32>
    %29 = vector.shape_cast %28 : vector<8x32xf32> to vector<8x4x8xf32>
    %30 = arith.truncf %29 : vector<8x4x8xf32> to vector<8x4x8xbf16>
    %31 = vector.extract_strided_slice %24 {offsets = [0, 64], sizes = [8, 32], strides = [1, 1]} : vector<8x96xf32> to vector<8x32xf32>
    %32 = vector.shape_cast %31 : vector<8x32xf32> to vector<8x4x8xf32>
    %33 = arith.truncf %32 : vector<8x4x8xf32> to vector<8x4x8xbf16>
    "tpu.trace_start"() <{level = 10 : i32, message = "qhe,khe->hqk"}> : () -> ()
    %cst_33 = arith.constant dense<0.000000e+00> : vector<4x8x8xf32>
    %34 = tpu.matmul %27, %30, %cst_33 {dimension_numbers = #tpu.dot_dimension_numbers<[2], [2], [0], [0], [0, 1, 0, 0, 1, 0], [1], [1]>} : vector<8x4x8xbf16>, vector<8x4x8xbf16>, vector<4x8x8xf32> -> vector<4x8x8xf32>
    "tpu.trace_stop"() : () -> ()
    %cst_34 = arith.constant 0.353553385 : f32
    %35 = vector.broadcast %cst_34 : f32 to vector<4x8x8xf32>
    %36 = arith.mulf %34, %35 : vector<4x8x8xf32>
    %37 = vector.broadcast %8 : vector<1x1x8xf32> to vector<4x8x8xf32>
    %38 = arith.addf %36, %37 : vector<4x8x8xf32>
    %cst_35 = arith.constant dense<0xFF800000> : vector<4x8xf32>
    %39 = vector.multi_reduction <maximumf>, %38, %cst_35 [2] : vector<4x8x8xf32> to vector<4x8xf32>
    %40 = vector.shape_cast %39 : vector<4x8xf32> to vector<4x8x1xf32>
    %41 = vector.broadcast %40 : vector<4x8x1xf32> to vector<4x8x8xf32>
    %42 = arith.subf %38, %41 : vector<4x8x8xf32>
    %43 = math.exp %42 : vector<4x8x8xf32>
    %cst_36 = arith.constant dense<0.000000e+00> : vector<4x8xf32>
    %44 = vector.multi_reduction <add>, %43, %cst_36 [2] : vector<4x8x8xf32> to vector<4x8xf32>
    %45 = vector.shape_cast %44 : vector<4x8xf32> to vector<4x8x1xf32>
    %46 = tpu.reciprocal %45 {approx = true} : vector<4x8x1xf32> -> vector<4x8x1xf32>
    %47 = vector.broadcast %46 : vector<4x8x1xf32> to vector<4x8x8xf32>
    %48 = arith.mulf %43, %47 : vector<4x8x8xf32>
    %49 = arith.truncf %48 : vector<4x8x8xf32> to vector<4x8x8xbf16>
    "tpu.trace_start"() <{level = 10 : i32, message = "hqk,khe->qhe"}> : () -> ()
    %cst_37 = arith.constant dense<0.000000e+00> : vector<4x8x8xf32>
    %50 = tpu.matmul %33, %49, %cst_37 {dimension_numbers = #tpu.dot_dimension_numbers<[0], [2], [2], [1], [0, 1, 0, 2, 1, 1], [1], [0]>} : vector<8x4x8xbf16>, vector<4x8x8xbf16>, vector<4x8x8xf32> -> vector<4x8x8xf32>
    %51 = tpu.transpose %50, [2, 0, 1] : vector<4x8x8xf32> -> vector<8x4x8xf32>
    "tpu.trace_stop"() : () -> ()
    %52 = vector.shape_cast %51 : vector<8x4x8xf32> to vector<8x32xf32>
    %53 = arith.truncf %52 : vector<8x32xf32> to vector<8x32xbf16>
    %cst_38 = arith.constant dense<0.000000e+00> : vector<8x32xf32>
    %54 = tpu.matmul %53, %11, %cst_38 {dimension_numbers = #tpu.dot_dimension_numbers<[1], [0], [0], [1], [0, 0, 1, 1], [], []>} : vector<8x32xbf16>, vector<32x32xbf16>, vector<8x32xf32> -> vector<8x32xf32>
    %55 = vector.broadcast %12 : vector<1x32xf32> to vector<8x32xf32>
    %56 = arith.addf %54, %55 : vector<8x32xf32>
    %57 = arith.addf %5, %56 : vector<8x32xf32>
    %cst_39 = arith.constant dense<0.000000e+00> : vector<8xf32>
    %58 = vector.multi_reduction <add>, %57, %cst_39 [1] : vector<8x32xf32> to vector<8xf32>
    %59 = vector.shape_cast %58 : vector<8xf32> to vector<8x1xf32>
    %cst_40 = arith.constant 3.200000e+01 : f32
    %60 = vector.broadcast %cst_40 : f32 to vector<8x1xf32>
    %61 = arith.divf %59, %60 : vector<8x1xf32>
    %62 = vector.broadcast %61 : vector<8x1xf32> to vector<8x32xf32>
    %63 = arith.subf %57, %62 : vector<8x32xf32>
    %64 = arith.mulf %63, %63 : vector<8x32xf32>
    %cst_41 = arith.constant dense<0.000000e+00> : vector<8xf32>
    %65 = vector.multi_reduction <add>, %64, %cst_41 [1] : vector<8x32xf32> to vector<8xf32>
    %66 = vector.shape_cast %65 : vector<8xf32> to vector<8x1xf32>
    %cst_42 = arith.constant 3.200000e+01 : f32
    %67 = vector.broadcast %cst_42 : f32 to vector<8x1xf32>
    %68 = arith.divf %66, %67 : vector<8x1xf32>
    %69 = vector.broadcast %61 : vector<8x1xf32> to vector<8x32xf32>
    %70 = arith.subf %57, %69 : vector<8x32xf32>
    %cst_43 = arith.constant 9.99999974E-6 : f32
    %71 = vector.broadcast %cst_43 : f32 to vector<8x1xf32>
    %72 = arith.addf %68, %71 : vector<8x1xf32>
    %73 = math.rsqrt %72 : vector<8x1xf32>
    %74 = vector.broadcast %73 : vector<8x1xf32> to vector<8x32xf32>
    %75 = arith.mulf %70, %74 : vector<8x32xf32>
    %76 = vector.broadcast %17 : vector<1x32xf32> to vector<8x32xf32>
    %77 = arith.mulf %75, %76 : vector<8x32xf32>
    %78 = vector.broadcast %18 : vector<1x32xf32> to vector<8x32xf32>
    %79 = arith.addf %77, %78 : vector<8x32xf32>
    %80 = arith.truncf %79 : vector<8x32xf32> to vector<8x32xbf16>
    %cst_44 = arith.constant dense<0.000000e+00> : vector<8x64xf32>
    %81 = tpu.matmul %80, %13, %cst_44 {dimension_numbers = #tpu.dot_dimension_numbers<[1], [0], [0], [1], [0, 0, 1, 1], [], []>} : vector<8x32xbf16>, vector<32x64xbf16>, vector<8x64xf32> -> vector<8x64xf32>
    %82 = vector.broadcast %14 : vector<1x64xf32> to vector<8x64xf32>
    %83 = arith.addf %81, %82 : vector<8x64xf32>
    %cst_45 = arith.constant 0.000000e+00 : f32
    %84 = vector.broadcast %cst_45 : f32 to vector<8x64xf32>
    %85 = arith.maximumf %83, %84 : vector<8x64xf32>
    %86 = arith.truncf %85 : vector<8x64xf32> to vector<8x64xbf16>
    %cst_46 = arith.constant dense<0.000000e+00> : vector<8x32xf32>
    %87 = tpu.matmul %86, %15, %cst_46 {dimension_numbers = #tpu.dot_dimension_numbers<[1], [0], [0], [1], [0, 0, 1, 1], [], []>} : vector<8x64xbf16>, vector<64x32xbf16>, vector<8x32xf32> -> vector<8x32xf32>
    %88 = vector.broadcast %16 : vector<1x32xf32> to vector<8x32xf32>
    %89 = arith.addf %87, %88 : vector<8x32xf32>
    %90 = arith.addf %79, %89 : vector<8x32xf32>
    %cst_47 = arith.constant dense<0.000000e+00> : vector<8xf32>
    %91 = vector.multi_reduction <add>, %90, %cst_47 [1] : vector<8x32xf32> to vector<8xf32>
    %92 = vector.shape_cast %91 : vector<8xf32> to vector<8x1xf32>
    %cst_48 = arith.constant 3.200000e+01 : f32
    %93 = vector.broadcast %cst_48 : f32 to vector<8x1xf32>
    %94 = arith.divf %92, %93 : vector<8x1xf32>
    %95 = vector.broadcast %94 : vector<8x1xf32> to vector<8x32xf32>
    %96 = arith.subf %90, %95 : vector<8x32xf32>
    %97 = arith.mulf %96, %96 : vector<8x32xf32>
    %cst_49 = arith.constant dense<0.000000e+00> : vector<8xf32>
    %98 = vector.multi_reduction <add>, %97, %cst_49 [1] : vector<8x32xf32> to vector<8xf32>
    %99 = vector.shape_cast %98 : vector<8xf32> to vector<8x1xf32>
    %cst_50 = arith.constant 3.200000e+01 : f32
    %100 = vector.broadcast %cst_50 : f32 to vector<8x1xf32>
    %101 = arith.divf %99, %100 : vector<8x1xf32>
    %102 = vector.broadcast %94 : vector<8x1xf32> to vector<8x32xf32>
    %103 = arith.subf %90, %102 : vector<8x32xf32>
    %cst_51 = arith.constant 9.99999974E-6 : f32
    %104 = vector.broadcast %cst_51 : f32 to vector<8x1xf32>
    %105 = arith.addf %101, %104 : vector<8x1xf32>
    %106 = math.rsqrt %105 : vector<8x1xf32>
    %107 = vector.broadcast %106 : vector<8x1xf32> to vector<8x32xf32>
    %108 = arith.mulf %103, %107 : vector<8x32xf32>
    %109 = vector.broadcast %19 : vector<1x32xf32> to vector<8x32xf32>
    %110 = arith.mulf %108, %109 : vector<8x32xf32>
    %111 = vector.broadcast %20 : vector<1x32xf32> to vector<8x32xf32>
    %112 = arith.addf %110, %111 : vector<8x32xf32>
    %113 = arith.truncf %112 : vector<8x32xf32> to vector<8x32xbf16>
    %cst_52 = arith.constant dense<0.000000e+00> : vector<8x96xf32>
    %114 = tpu.matmul %113, %9, %cst_52 {dimension_numbers = #tpu.dot_dimension_numbers<[1], [0], [0], [1], [0, 0, 1, 1], [], []>} : vector<8x32xbf16>, vector<32x96xbf16>, vector<8x96xf32> -> vector<8x96xf32>
    %115 = vector.broadcast %10 : vector<1x96xf32> to vector<8x96xf32>
    %116 = arith.addf %114, %115 : vector<8x96xf32>
    %117 = vector.extract_strided_slice %116 {offsets = [0, 0], sizes = [8, 32], strides = [1, 1]} : vector<8x96xf32> to vector<8x32xf32>
    %118 = vector.shape_cast %117 : vector<8x32xf32> to vector<8x4x8xf32>
    %119 = arith.truncf %118 : vector<8x4x8xf32> to vector<8x4x8xbf16>
    %120 = vector.extract_strided_slice %116 {offsets = [0, 32], sizes = [8, 32], strides = [1, 1]} : vector<8x96xf32> to vector<8x32xf32>
    %121 = vector.shape_cast %120 : vector<8x32xf32> to vector<8x4x8xf32>
    %122 = arith.truncf %121 : vector<8x4x8xf32> to vector<8x4x8xbf16>
    %123 = vector.extract_strided_slice %116 {offsets = [0, 64], sizes = [8, 32], strides = [1, 1]} : vector<8x96xf32> to vector<8x32xf32>
    %124 = vector.shape_cast %123 : vector<8x32xf32> to vector<8x4x8xf32>
    %125 = arith.truncf %124 : vector<8x4x8xf32> to vector<8x4x8xbf16>
    "tpu.trace_start"() <{level = 10 : i32, message = "qhe,khe->hqk"}> : () -> ()
    %cst_53 = arith.constant dense<0.000000e+00> : vector<4x8x8xf32>
    %126 = tpu.matmul %119, %122, %cst_53 {dimension_numbers = #tpu.dot_dimension_numbers<[2], [2], [0], [0], [0, 1, 0, 0, 1, 0], [1], [1]>} : vector<8x4x8xbf16>, vector<8x4x8xbf16>, vector<4x8x8xf32> -> vector<4x8x8xf32>
    "tpu.trace_stop"() : () -> ()
    %cst_54 = arith.constant 0.353553385 : f32
    %127 = vector.broadcast %cst_54 : f32 to vector<4x8x8xf32>
    %128 = arith.mulf %126, %127 : vector<4x8x8xf32>
    %129 = vector.broadcast %8 : vector<1x1x8xf32> to vector<4x8x8xf32>
    %130 = arith.addf %128, %129 : vector<4x8x8xf32>
    %cst_55 = arith.constant dense<0xFF800000> : vector<4x8xf32>
    %131 = vector.multi_reduction <maximumf>, %130, %cst_55 [2] : vector<4x8x8xf32> to vector<4x8xf32>
    %132 = vector.shape_cast %131 : vector<4x8xf32> to vector<4x8x1xf32>
    %133 = vector.broadcast %132 : vector<4x8x1xf32> to vector<4x8x8xf32>
    %134 = arith.subf %130, %133 : vector<4x8x8xf32>
    %135 = math.exp %134 : vector<4x8x8xf32>
    %cst_56 = arith.constant dense<0.000000e+00> : vector<4x8xf32>
    %136 = vector.multi_reduction <add>, %135, %cst_56 [2] : vector<4x8x8xf32> to vector<4x8xf32>
    %137 = vector.shape_cast %136 : vector<4x8xf32> to vector<4x8x1xf32>
    %138 = tpu.reciprocal %137 {approx = true} : vector<4x8x1xf32> -> vector<4x8x1xf32>
    %139 = vector.broadcast %138 : vector<4x8x1xf32> to vector<4x8x8xf32>
    %140 = arith.mulf %135, %139 : vector<4x8x8xf32>
    %141 = arith.truncf %140 : vector<4x8x8xf32> to vector<4x8x8xbf16>
    "tpu.trace_start"() <{level = 10 : i32, message = "hqk,khe->qhe"}> : () -> ()
    %cst_57 = arith.constant dense<0.000000e+00> : vector<4x8x8xf32>
    %142 = tpu.matmul %125, %141, %cst_57 {dimension_numbers = #tpu.dot_dimension_numbers<[0], [2], [2], [1], [0, 1, 0, 2, 1, 1], [1], [0]>} : vector<8x4x8xbf16>, vector<4x8x8xbf16>, vector<4x8x8xf32> -> vector<4x8x8xf32>
    %143 = tpu.transpose %142, [2, 0, 1] : vector<4x8x8xf32> -> vector<8x4x8xf32>
    "tpu.trace_stop"() : () -> ()
    %144 = vector.shape_cast %143 : vector<8x4x8xf32> to vector<8x32xf32>
    %145 = arith.truncf %144 : vector<8x32xf32> to vector<8x32xbf16>
    %cst_58 = arith.constant dense<0.000000e+00> : vector<8x32xf32>
    %146 = tpu.matmul %145, %11, %cst_58 {dimension_numbers = #tpu.dot_dimension_numbers<[1], [0], [0], [1], [0, 0, 1, 1], [], []>} : vector<8x32xbf16>, vector<32x32xbf16>, vector<8x32xf32> -> vector<8x32xf32>
    %147 = vector.broadcast %12 : vector<1x32xf32> to vector<8x32xf32>
    %148 = arith.addf %146, %147 : vector<8x32xf32>
    %149 = arith.addf %112, %148 : vector<8x32xf32>
    %cst_59 = arith.constant dense<0.000000e+00> : vector<8xf32>
    %150 = vector.multi_reduction <add>, %149, %cst_59 [1] : vector<8x32xf32> to vector<8xf32>
    %151 = vector.shape_cast %150 : vector<8xf32> to vector<8x1xf32>
    %cst_60 = arith.constant 3.200000e+01 : f32
    %152 = vector.broadcast %cst_60 : f32 to vector<8x1xf32>
    %153 = arith.divf %151, %152 : vector<8x1xf32>
    %154 = vector.broadcast %153 : vector<8x1xf32> to vector<8x32xf32>
    %155 = arith.subf %149, %154 : vector<8x32xf32>
    %156 = arith.mulf %155, %155 : vector<8x32xf32>
    %cst_61 = arith.constant dense<0.000000e+00> : vector<8xf32>
    %157 = vector.multi_reduction <add>, %156, %cst_61 [1] : vector<8x32xf32> to vector<8xf32>
    %158 = vector.shape_cast %157 : vector<8xf32> to vector<8x1xf32>
    %cst_62 = arith.constant 3.200000e+01 : f32
    %159 = vector.broadcast %cst_62 : f32 to vector<8x1xf32>
    %160 = arith.divf %158, %159 : vector<8x1xf32>
    %161 = vector.broadcast %153 : vector<8x1xf32> to vector<8x32xf32>
    %162 = arith.subf %149, %161 : vector<8x32xf32>
    %cst_63 = arith.constant 9.99999974E-6 : f32
    %163 = vector.broadcast %cst_63 : f32 to vector<8x1xf32>
    %164 = arith.addf %160, %163 : vector<8x1xf32>
    %165 = math.rsqrt %164 : vector<8x1xf32>
    %166 = vector.broadcast %165 : vector<8x1xf32> to vector<8x32xf32>
    %167 = arith.mulf %162, %166 : vector<8x32xf32>
    %168 = vector.broadcast %17 : vector<1x32xf32> to vector<8x32xf32>
    %169 = arith.mulf %167, %168 : vector<8x32xf32>
    %170 = vector.broadcast %18 : vector<1x32xf32> to vector<8x32xf32>
    %171 = arith.addf %169, %170 : vector<8x32xf32>
    %172 = arith.truncf %171 : vector<8x32xf32> to vector<8x32xbf16>
    %cst_64 = arith.constant dense<0.000000e+00> : vector<8x64xf32>
    %173 = tpu.matmul %172, %13, %cst_64 {dimension_numbers = #tpu.dot_dimension_numbers<[1], [0], [0], [1], [0, 0, 1, 1], [], []>} : vector<8x32xbf16>, vector<32x64xbf16>, vector<8x64xf32> -> vector<8x64xf32>
    %174 = vector.broadcast %14 : vector<1x64xf32> to vector<8x64xf32>
    %175 = arith.addf %173, %174 : vector<8x64xf32>
    %cst_65 = arith.constant 0.000000e+00 : f32
    %176 = vector.broadcast %cst_65 : f32 to vector<8x64xf32>
    %177 = arith.maximumf %175, %176 : vector<8x64xf32>
    %178 = arith.truncf %177 : vector<8x64xf32> to vector<8x64xbf16>
    %cst_66 = arith.constant dense<0.000000e+00> : vector<8x32xf32>
    %179 = tpu.matmul %178, %15, %cst_66 {dimension_numbers = #tpu.dot_dimension_numbers<[1], [0], [0], [1], [0, 0, 1, 1], [], []>} : vector<8x64xbf16>, vector<64x32xbf16>, vector<8x32xf32> -> vector<8x32xf32>
    %180 = vector.broadcast %16 : vector<1x32xf32> to vector<8x32xf32>
    %181 = arith.addf %179, %180 : vector<8x32xf32>
    %182 = arith.addf %171, %181 : vector<8x32xf32>
    %cst_67 = arith.constant dense<0.000000e+00> : vector<8xf32>
    %183 = vector.multi_reduction <add>, %182, %cst_67 [1] : vector<8x32xf32> to vector<8xf32>
    %184 = vector.shape_cast %183 : vector<8xf32> to vector<8x1xf32>
    %cst_68 = arith.constant 3.200000e+01 : f32
    %185 = vector.broadcast %cst_68 : f32 to vector<8x1xf32>
    %186 = arith.divf %184, %185 : vector<8x1xf32>
    %187 = vector.broadcast %186 : vector<8x1xf32> to vector<8x32xf32>
    %188 = arith.subf %182, %187 : vector<8x32xf32>
    %189 = arith.mulf %188, %188 : vector<8x32xf32>
    %cst_69 = arith.constant dense<0.000000e+00> : vector<8xf32>
    %190 = vector.multi_reduction <add>, %189, %cst_69 [1] : vector<8x32xf32> to vector<8xf32>
    %191 = vector.shape_cast %190 : vector<8xf32> to vector<8x1xf32>
    %cst_70 = arith.constant 3.200000e+01 : f32
    %192 = vector.broadcast %cst_70 : f32 to vector<8x1xf32>
    %193 = arith.divf %191, %192 : vector<8x1xf32>
    %194 = vector.broadcast %186 : vector<8x1xf32> to vector<8x32xf32>
    %195 = arith.subf %182, %194 : vector<8x32xf32>
    %cst_71 = arith.constant 9.99999974E-6 : f32
    %196 = vector.broadcast %cst_71 : f32 to vector<8x1xf32>
    %197 = arith.addf %193, %196 : vector<8x1xf32>
    %198 = math.rsqrt %197 : vector<8x1xf32>
    %199 = vector.broadcast %198 : vector<8x1xf32> to vector<8x32xf32>
    %200 = arith.mulf %195, %199 : vector<8x32xf32>
    %201 = vector.broadcast %19 : vector<1x32xf32> to vector<8x32xf32>
    %202 = arith.mulf %200, %201 : vector<8x32xf32>
    %203 = vector.broadcast %20 : vector<1x32xf32> to vector<8x32xf32>
    %204 = arith.addf %202, %203 : vector<8x32xf32>
    %c0_72 = arith.constant 0 : index
    %c0_73 = arith.constant 0 : index
    %c0_74 = arith.constant 0 : index
    %205 = vector.load %arg16[%c0_72, %c0_73, %c0_74] : memref<1x8x32xf32, #tpu.memory_space<vmem>>, vector<1x8x32xf32>
    %206 = vector.shape_cast %205 : vector<1x8x32xf32> to vector<8x32xf32>
    %207 = vector.shape_cast %204 : vector<8x32xf32> to vector<1x8x32xf32>
    tpu.vector_store %arg16[%c0_72, %c0_73, %c0_74], %207 {strides = array<i32>} : memref<1x8x32xf32, #tpu.memory_space<vmem>>, vector<1x8x32xf32>,
    return
  }
  func.func @transform_0(%arg0: i32) -> (i32, i32, i32) {
    %c0_i32 = arith.constant 0 : i32
    %c0_i32_0 = arith.constant 0 : i32
    %c0_i32_1 = arith.constant 0 : i32
    return %arg0, %c0_i32, %c0_i32_0 : i32, i32, i32
  }
  func.func @transform_1(%arg0: i32) -> (i32, i32) {
    %c0_i32 = arith.constant 0 : i32
    %c0_i32_0 = arith.constant 0 : i32
    %c0_i32_1 = arith.constant 0 : i32
    return %c0_i32, %c0_i32_0 : i32, i32
  }
  func.func @transform_2(%arg0: i32) -> (i32, i32, i32) {
    %c0_i32 = arith.constant 0 : i32
    %c0_i32_0 = arith.constant 0 : i32
    %c0_i32_1 = arith.constant 0 : i32
    return %arg0, %c0_i32, %c0_i32_0 : i32, i32, i32
  }
  func.func @transform_3(%arg0: i32) -> (i32, i32) {
    %c0_i32 = arith.constant 0 : i32
    %c0_i32_0 = arith.constant 0 : i32
    %c0_i32_1 = arith.constant 0 : i32
    return %c0_i32, %c0_i32_0 : i32, i32
  }
  func.func @transform_4(%arg0: i32) -> (i32, i32) {
    %c0_i32 = arith.constant 0 : i32
    %c0_i32_0 = arith.constant 0 : i32
    %c0_i32_1 = arith.constant 0 : i32
    return %c0_i32, %c0_i32_0 : i32, i32
  }
  func.func @transform_5(%arg0: i32) -> (i32, i32) {
    %c0_i32 = arith.constant 0 : i32
    %c0_i32_0 = arith.constant 0 : i32
    %c0_i32_1 = arith.constant 0 : i32
    return %c0_i32, %c0_i32_0 : i32, i32
  }
  func.func @transform_6(%arg0: i32) -> (i32, i32) {
    %c0_i32 = arith.constant 0 : i32
    %c0_i32_0 = arith.constant 0 : i32
    %c0_i32_1 = arith.constant 0 : i32
    return %c0_i32, %c0_i32_0 : i32, i32
  }
  func.func @transform_7(%arg0: i32) -> (i32, i32) {
    %c0_i32 = arith.constant 0 : i32
    %c0_i32_0 = arith.constant 0 : i32
    %c0_i32_1 = arith.constant 0 : i32
    return %c0_i32, %c0_i32_0 : i32, i32
  }
  func.func @transform_8(%arg0: i32) -> (i32, i32) {
    %c0_i32 = arith.constant 0 : i32
    %c0_i32_0 = arith.constant 0 : i32
    %c0_i32_1 = arith.constant 0 : i32
    return %c0_i32, %c0_i32_0 : i32, i32
  }
  func.func @transform_9(%arg0: i32) -> (i32, i32) {
    %c0_i32 = arith.constant 0 : i32
    %c0_i32_0 = arith.constant 0 : i32
    %c0_i32_1 = arith.constant 0 : i32
    return %c0_i32, %c0_i32_0 : i32, i32
  }
  func.func @transform_10(%arg0: i32) -> (i32, i32) {
    %c0_i32 = arith.constant 0 : i32
    %c0_i32_0 = arith.constant 0 : i32
    %c0_i32_1 = arith.constant 0 : i32
    return %c0_i32, %c0_i32_0 : i32, i32
  }
  func.func @transform_11(%arg0: i32) -> (i32, i32) {
    %c0_i32 = arith.constant 0 : i32
    %c0_i32_0 = arith.constant 0 : i32
    %c0_i32_1 = arith.constant 0 : i32
    return %c0_i32, %c0_i32_0 : i32, i32
  }
  func.func @transform_12(%arg0: i32) -> (i32, i32) {
    %c0_i32 = arith.constant 0 : i32
    %c0_i32_0 = arith.constant 0 : i32
    %c0_i32_1 = arith.constant 0 : i32
    return %c0_i32, %c0_i32_0 : i32, i32
  }
  func.func @transform_13(%arg0: i32) -> (i32, i32) {
    %c0_i32 = arith.constant 0 : i32
    %c0_i32_0 = arith.constant 0 : i32
    %c0_i32_1 = arith.constant 0 : i32
    return %c0_i32, %c0_i32_0 : i32, i32
  }
  func.func @transform_14(%arg0: i32) -> (i32, i32) {
    %c0_i32 = arith.constant 0 : i32
    %c0_i32_0 = arith.constant 0 : i32
    %c0_i32_1 = arith.constant 0 : i32
    return %c0_i32, %c0_i32_0 : i32, i32
  }
  func.func @transform_15(%arg0: i32) -> (i32, i32, i32) {
    %c0_i32 = arith.constant 0 : i32
    %c0_i32_0 = arith.constant 0 : i32
    %c0_i32_1 = arith.constant 0 : i32
    return %arg0, %c0_i32, %c0_i32_0 : i32, i32, i32
  }
}

</mosaic_0001>

<llo_original>
// kernel: tpu_custom_call.1
$region0: #{tpu_custom_call.1}
  #allocation0 [shape = 'u32[]', space=smem, size = 0x4, offset = 0x4, fixed_abs, tag = 'smem constant byte address 0x4 - core index']
  #allocation1 [shape = 'u32[144,128]{1,0:T(1,128)}', space=vmem, size = 0x12000, scoped, tag = 'internal scratch']
  %s0 = inlined_call_operand.vmem [shape: f32[2,8,32], index: 0, kind: input, shape index: {}]
  %s1 = inlined_call_operand.hbm [shape: f32[8,32], index: 1, kind: input, shape index: {}]
  %s2 = inlined_call_operand.vmem [shape: f32[2,1,8], index: 2, kind: input, shape index: {}]
  %s3 = inlined_call_operand.vmem [shape: bf16[32,96], index: 3, kind: input, shape index: {}]
  %s4 = inlined_call_operand.vmem [shape: f32[1,96], index: 4, kind: input, shape index: {}]
  %s5 = inlined_call_operand.vmem [shape: bf16[32,32], index: 5, kind: input, shape index: {}]
  %s6 = inlined_call_operand.vmem [shape: f32[1,32], index: 6, kind: input, shape index: {}]
  %s7 = inlined_call_operand.hbm [shape: bf16[32,64], index: 7, kind: input, shape index: {}]
  %s8 = inlined_call_operand.vmem [shape: f32[1,64], index: 8, kind: input, shape index: {}]
  %s9 = inlined_call_operand.vmem [shape: bf16[64,32], index: 9, kind: input, shape index: {}]
  %s10 = inlined_call_operand.vmem [shape: f32[1,32], index: 10, kind: input, shape index: {}]
  %s11 = inlined_call_operand.vmem [shape: f32[1,32], index: 11, kind: input, shape index: {}]
  %s12 = inlined_call_operand.vmem [shape: f32[1,32], index: 12, kind: input, shape index: {}]
  %s13 = inlined_call_operand.vmem [shape: f32[1,32], index: 13, kind: input, shape index: {}]
  %s14 = inlined_call_operand.vmem [shape: f32[1,32], index: 14, kind: input, shape index: {}]
  %s15 = inlined_call_operand.hbm [shape: f32[2,8,32], index: 15, kind: output, shape index: {}]
  %s16 = sld [smem:[#allocation0]]
  $region101: #{tpu_custom_call.1} parent=0
    _
  %s18 = ssub.s32 1, %s16
  %s19 = scalar_select 0, %s18, %s16
  $region1: #{tpu_custom_call.1} parent=0
    #allocation2 [shape = 'u8[4096]{0}', space=vmem, size = 0x1000, scoped, tag = 'input window, operand 1, single buffered']
    #allocation3 [shape = 's32[2]{0}', space=sflag, size = 0x8, scoped, tag = 'scoped memory for tpu_custom_call.1']
    #allocation4 [shape = 's32[2]{0}', space=sflag, size = 0x8, scoped, tag = 'scoped memory for tpu_custom_call.1']
    #allocation5 [shape = 'u8[8192]{0}', space=vmem, size = 0x2000, scoped, tag = 'input window, operand 7, single buffered']
    #allocation6 [shape = 's32[1]{0}', space=sflag, size = 0x4, scoped, tag = 'scoped memory for tpu_custom_call.1']
    #allocation7 [shape = 'u8[8192]{0}', space=vmem, size = 0x2000, scoped, tag = 'output window, operand 0']
    %20 = vsyncpa [#allocation3], 0
    %21 = vsyncpa [#allocation6], 0
    %22 = vsyncpa [#allocation4], 0
    %s23 = scalar_lea.sflag [#allocation4], 1
    %24 = vsyncpa %s23, 0
    loop: start=0, step=1, limit=4
    $region2: #{tpu_custom_call.1} parent=1 // loop_pre_header
      _
    $region3: #{tpu_custom_call.1} parent=1 // loop_header
      %s26 = sphi 0, %s30
      %p27 = scmp.ge.s32.totalorder %s26, 4
      %s36 = sphi 0, %s38
      %s39 = sphi 0, %s36
      %s40 = sphi 0, %s39
      %s56 = sphi 0, %s40
      %s60 = sphi 0, %s60
      %s62 = sphi 0, %s60
      %s63 = sphi 0, %s62
      %s77 = sphi 0, %s63
      %s83 = sphi 0, %s85
      %s86 = sphi 0, %s83
      %s87 = sphi 0, %s86
      %s103 = sphi 0, %s87
      %s107 = sphi 0, %s107
      %s109 = sphi 0, %s107
      %s110 = sphi 0, %s109
      %s124 = sphi 0, %s110
      %s128 = sphi 0, %s128
      %s130 = sphi 0, %s128
      %s131 = sphi 0, %s130
      %s145 = sphi 0, %s131
      %s149 = sphi 0, %s149
      %s151 = sphi 0, %s149
      %s152 = sphi 0, %s151
      %s166 = sphi 0, %s152
      %s170 = sphi 0, %s170
      %s172 = sphi 0, %s170
      %s173 = sphi 0, %s172
      %s187 = sphi 0, %s173
      %s191 = sphi 0, %s191
      %s193 = sphi 0, %s191
      %s194 = sphi 0, %s193
      %s208 = sphi 0, %s194
      %s212 = sphi 0, %s212
      %s214 = sphi 0, %s212
      %s215 = sphi 0, %s214
      %s229 = sphi 0, %s215
      %s233 = sphi 0, %s233
      %s235 = sphi 0, %s233
      %s236 = sphi 0, %s235
      %s250 = sphi 0, %s236
      %s254 = sphi 0, %s254
      %s256 = sphi 0, %s254
      %s257 = sphi 0, %s256
      %s271 = sphi 0, %s257
      %s275 = sphi 0, %s275
      %s277 = sphi 0, %s275
      %s278 = sphi 0, %s277
      %s292 = sphi 0, %s278
      %s296 = sphi 0, %s296
      %s298 = sphi 0, %s296
      %s299 = sphi 0, %s298
      %s313 = sphi 0, %s299
      %s317 = sphi 0, %s317
      %s319 = sphi 0, %s317
      %s320 = sphi 0, %s319
      %s334 = sphi 0, %s320
      %s338 = sphi 0, %s338
      %s340 = sphi 0, %s338
      %s341 = sphi 0, %s340
      %s355 = sphi 0, %s341
      %s361 = sphi 0, %s363
      %s364 = sphi 0, %s361
      %s365 = sphi 0, %s364
      %s381 = sphi 0, %s365
    $region4: #{tpu_custom_call.1} parent=1 // loop_header_branch
      %29 = sbr.rel (%p27) target = $region8
    $region5: #{tpu_custom_call.1} parent=1 // loop_body
      %s31 = ssub.s32 %s26, 1
      %s32 = ssub.s32 %s26, 2
      %s33 = sadd.s32 %s26, 1
      %s34 = ssub.s32 %s26, %s33
      %p35 = scmp.eq.s32.totalorder %s34, 0
      %s37 = sadd.s32 %s36, 1
      %s38 = scalar_select %p35, %s36, %s37
      %p41 = pneg %p35
      %p42 = scmp.eq.s32.totalorder %s26, 1
      %p43 = por %p41, %p42
      %p44 = scmp.ne.s32.totalorder %s36, %s39
      %p45 = scmp.eq.s32.totalorder %s26, 0
      %p46 = por %p44, %p45
      %p47 = scmp.ne.s32.totalorder %s36, %s39
      %p48 = scmp.eq.s32.totalorder %s31, 1
      %p49 = por %p47, %p48
      %p50 = scmp.ne.s32.totalorder %s39, %s40
      %p51 = scmp.eq.s32.totalorder %s31, 0
      %p52 = por %p50, %p51
      %p53 = scmp.ne.s32.totalorder %s39, %s40
      %p54 = scmp.eq.s32.totalorder %s32, 1
      %p55 = por %p53, %p54
      %p57 = scmp.ne.s32.totalorder %s40, %s56
      %p58 = scmp.eq.s32.totalorder %s32, 0
      %p59 = por %p57, %p58
      %s61 = sadd.s32 %s60, 1
      %p64 = scmp.eq.s32.totalorder %s26, 1
      %p65 = scmp.ne.s32.totalorder %s60, %s62
      %p66 = scmp.eq.s32.totalorder %s26, 0
      %p67 = por %p65, %p66
      %p68 = scmp.ne.s32.totalorder %s60, %s62
      %p69 = scmp.eq.s32.totalorder %s31, 1
      %p70 = por %p68, %p69
      %p71 = scmp.ne.s32.totalorder %s62, %s63
      %p72 = scmp.eq.s32.totalorder %s31, 0
      %p73 = por %p71, %p72
      %p74 = scmp.ne.s32.totalorder %s62, %s63
      %p75 = scmp.eq.s32.totalorder %s32, 1
      %p76 = por %p74, %p75
      %p78 = scmp.ne.s32.totalorder %s63, %s77
      %p79 = scmp.eq.s32.totalorder %s32, 0
      %p80 = por %p78, %p79
      %s81 = ssub.s32 %s26, %s33
      %p82 = scmp.eq.s32.totalorder %s81, 0
      %s84 = sadd.s32 %s83, 1
      %s85 = scalar_select %p82, %s83, %s84
      %p88 = pneg %p82
      %p89 = scmp.eq.s32.totalorder %s26, 1
      %p90 = por %p88, %p89
      %p91 = scmp.ne.s32.totalorder %s83, %s86
      %p92 = scmp.eq.s32.totalorder %s26, 0
      %p93 = por %p91, %p92
      %p94 = scmp.ne.s32.totalorder %s83, %s86
      %p95 = scmp.eq.s32.totalorder %s31, 1
      %p96 = por %p94, %p95
      %p97 = scmp.ne.s32.totalorder %s86, %s87
      %p98 = scmp.eq.s32.totalorder %s31, 0
      %p99 = por %p97, %p98
      %p100 = scmp.ne.s32.totalorder %s86, %s87
      %p101 = scmp.eq.s32.totalorder %s32, 1
      %p102 = por %p100, %p101
      %p104 = scmp.ne.s32.totalorder %s87, %s103
      %p105 = scmp.eq.s32.totalorder %s32, 0
      %p106 = por %p104, %p105
      %s108 = sadd.s32 %s107, 1
      %p111 = scmp.eq.s32.totalorder %s26, 1
      %p112 = scmp.ne.s32.totalorder %s107, %s109
      %p113 = scmp.eq.s32.totalorder %s26, 0
      %p114 = por %p112, %p113
      %p115 = scmp.ne.s32.totalorder %s107, %s109
      %p116 = scmp.eq.s32.totalorder %s31, 1
      %p117 = por %p115, %p116
      %p118 = scmp.ne.s32.totalorder %s109, %s110
      %p119 = scmp.eq.s32.totalorder %s31, 0
      %p120 = por %p118, %p119
      %p121 = scmp.ne.s32.totalorder %s109, %s110
      %p122 = scmp.eq.s32.totalorder %s32, 1
      %p123 = por %p121, %p122
      %p125 = scmp.ne.s32.totalorder %s110, %s124
      %p126 = scmp.eq.s32.totalorder %s32, 0
      %p127 = por %p125, %p126
      %s129 = sadd.s32 %s128, 1
      %p132 = scmp.eq.s32.totalorder %s26, 1
      %p133 = scmp.ne.s32.totalorder %s128, %s130
      %p134 = scmp.eq.s32.totalorder %s26, 0
      %p135 = por %p133, %p134
      %p136 = scmp.ne.s32.totalorder %s128, %s130
      %p137 = scmp.eq.s32.totalorder %s31, 1
      %p138 = por %p136, %p137
      %p139 = scmp.ne.s32.totalorder %s130, %s131
      %p140 = scmp.eq.s32.totalorder %s31, 0
      %p141 = por %p139, %p140
      %p142 = scmp.ne.s32.totalorder %s130, %s131
      %p143 = scmp.eq.s32.totalorder %s32, 1
      %p144 = por %p142, %p143
      %p146 = scmp.ne.s32.totalorder %s131, %s145
      %p147 = scmp.eq.s32.totalorder %s32, 0
      %p148 = por %p146, %p147
      %s150 = sadd.s32 %s149, 1
      %p153 = scmp.eq.s32.totalorder %s26, 1
      %p154 = scmp.ne.s32.totalorder %s149, %s151
      %p155 = scmp.eq.s32.totalorder %s26, 0
      %p156 = por %p154, %p155
      %p157 = scmp.ne.s32.totalorder %s149, %s151
      %p158 = scmp.eq.s32.totalorder %s31, 1
      %p159 = por %p157, %p158
      %p160 = scmp.ne.s32.totalorder %s151, %s152
      %p161 = scmp.eq.s32.totalorder %s31, 0
      %p162 = por %p160, %p161
      %p163 = scmp.ne.s32.totalorder %s151, %s152
      %p164 = scmp.eq.s32.totalorder %s32, 1
      %p165 = por %p163, %p164
      %p167 = scmp.ne.s32.totalorder %s152, %s166
      %p168 = scmp.eq.s32.totalorder %s32, 0
      %p169 = por %p167, %p168
      %s171 = sadd.s32 %s170, 1
      %p174 = scmp.eq.s32.totalorder %s26, 1
      %p175 = scmp.ne.s32.totalorder %s170, %s172
      %p176 = scmp.eq.s32.totalorder %s26, 0
      %p177 = por %p175, %p176
      %p178 = scmp.ne.s32.totalorder %s170, %s172
      %p179 = scmp.eq.s32.totalorder %s31, 1
      %p180 = por %p178, %p179
      %p181 = scmp.ne.s32.totalorder %s172, %s173
      %p182 = scmp.eq.s32.totalorder %s31, 0
      %p183 = por %p181, %p182
      %p184 = scmp.ne.s32.totalorder %s172, %s173
      %p185 = scmp.eq.s32.totalorder %s32, 1
      %p186 = por %p184, %p185
      %p188 = scmp.ne.s32.totalorder %s173, %s187
      %p189 = scmp.eq.s32.totalorder %s32, 0
      %p190 = por %p188, %p189
      %s192 = sadd.s32 %s191, 1
      %p195 = scmp.eq.s32.totalorder %s26, 1
      %p196 = scmp.ne.s32.totalorder %s191, %s193
      %p197 = scmp.eq.s32.totalorder %s26, 0
      %p198 = por %p196, %p197
      %p199 = scmp.ne.s32.totalorder %s191, %s193
      %p200 = scmp.eq.s32.totalorder %s31, 1
      %p201 = por %p199, %p200
      %p202 = scmp.ne.s32.totalorder %s193, %s194
      %p203 = scmp.eq.s32.totalorder %s31, 0
      %p204 = por %p202, %p203
      %p205 = scmp.ne.s32.totalorder %s193, %s194
      %p206 = scmp.eq.s32.totalorder %s32, 1
      %p207 = por %p205, %p206
      %p209 = scmp.ne.s32.totalorder %s194, %s208
      %p210 = scmp.eq.s32.totalorder %s32, 0
      %p211 = por %p209, %p210
      %s213 = sadd.s32 %s212, 1
      %p216 = scmp.eq.s32.totalorder %s26, 1
      %p217 = scmp.ne.s32.totalorder %s212, %s214
      %p218 = scmp.eq.s32.totalorder %s26, 0
      %p219 = por %p217, %p218
      %p220 = scmp.ne.s32.totalorder %s212, %s214
      %p221 = scmp.eq.s32.totalorder %s31, 1
      %p222 = por %p220, %p221
      %p223 = scmp.ne.s32.totalorder %s214, %s215
      %p224 = scmp.eq.s32.totalorder %s31, 0
      %p225 = por %p223, %p224
      %p226 = scmp.ne.s32.totalorder %s214, %s215
      %p227 = scmp.eq.s32.totalorder %s32, 1
      %p228 = por %p226, %p227
      %p230 = scmp.ne.s32.totalorder %s215, %s229
      %p231 = scmp.eq.s32.totalorder %s32, 0
      %p232 = por %p230, %p231
      %s234 = sadd.s32 %s233, 1
      %p237 = scmp.eq.s32.totalorder %s26, 1
      %p238 = scmp.ne.s32.totalorder %s233, %s235
      %p239 = scmp.eq.s32.totalorder %s26, 0
      %p240 = por %p238, %p239
      %p241 = scmp.ne.s32.totalorder %s233, %s235
      %p242 = scmp.eq.s32.totalorder %s31, 1
      %p243 = por %p241, %p242
      %p244 = scmp.ne.s32.totalorder %s235, %s236
      %p245 = scmp.eq.s32.totalorder %s31, 0
      %p246 = por %p244, %p245
      %p247 = scmp.ne.s32.totalorder %s235, %s236
      %p248 = scmp.eq.s32.totalorder %s32, 1
      %p249 = por %p247, %p248
      %p251 = scmp.ne.s32.totalorder %s236, %s250
      %p252 = scmp.eq.s32.totalorder %s32, 0
      %p253 = por %p251, %p252
      %s255 = sadd.s32 %s254, 1
      %p258 = scmp.eq.s32.totalorder %s26, 1
      %p259 = scmp.ne.s32.totalorder %s254, %s256
      %p260 = scmp.eq.s32.totalorder %s26, 0
      %p261 = por %p259, %p260
      %p262 = scmp.ne.s32.totalorder %s254, %s256
      %p263 = scmp.eq.s32.totalorder %s31, 1
      %p264 = por %p262, %p263
      %p265 = scmp.ne.s32.totalorder %s256, %s257
      %p266 = scmp.eq.s32.totalorder %s31, 0
      %p267 = por %p265, %p266
      %p268 = scmp.ne.s32.totalorder %s256, %s257
      %p269 = scmp.eq.s32.totalorder %s32, 1
      %p270 = por %p268, %p269
      %p272 = scmp.ne.s32.totalorder %s257, %s271
      %p273 = scmp.eq.s32.totalorder %s32, 0
      %p274 = por %p272, %p273
      %s276 = sadd.s32 %s275, 1
      %p279 = scmp.eq.s32.totalorder %s26, 1
      %p280 = scmp.ne.s32.totalorder %s275, %s277
      %p281 = scmp.eq.s32.totalorder %s26, 0
      %p282 = por %p280, %p281
      %p283 = scmp.ne.s32.totalorder %s275, %s277
      %p284 = scmp.eq.s32.totalorder %s31, 1
      %p285 = por %p283, %p284
      %p286 = scmp.ne.s32.totalorder %s277, %s278
      %p287 = scmp.eq.s32.totalorder %s31, 0
      %p288 = por %p286, %p287
      %p289 = scmp.ne.s32.totalorder %s277, %s278
      %p290 = scmp.eq.s32.totalorder %s32, 1
      %p291 = por %p289, %p290
      %p293 = scmp.ne.s32.totalorder %s278, %s292
      %p294 = scmp.eq.s32.totalorder %s32, 0
      %p295 = por %p293, %p294
      %s297 = sadd.s32 %s296, 1
      %p300 = scmp.eq.s32.totalorder %s26, 1
      %p301 = scmp.ne.s32.totalorder %s296, %s298
      %p302 = scmp.eq.s32.totalorder %s26, 0
      %p303 = por %p301, %p302
      %p304 = scmp.ne.s32.totalorder %s296, %s298
      %p305 = scmp.eq.s32.totalorder %s31, 1
      %p306 = por %p304, %p305
      %p307 = scmp.ne.s32.totalorder %s298, %s299
      %p308 = scmp.eq.s32.totalorder %s31, 0
      %p309 = por %p307, %p308
      %p310 = scmp.ne.s32.totalorder %s298, %s299
      %p311 = scmp.eq.s32.totalorder %s32, 1
      %p312 = por %p310, %p311
      %p314 = scmp.ne.s32.totalorder %s299, %s313
      %p315 = scmp.eq.s32.totalorder %s32, 0
      %p316 = por %p314, %p315
      %s318 = sadd.s32 %s317, 1
      %p321 = scmp.eq.s32.totalorder %s26, 1
      %p322 = scmp.ne.s32.totalorder %s317, %s319
      %p323 = scmp.eq.s32.totalorder %s26, 0
      %p324 = por %p322, %p323
      %p325 = scmp.ne.s32.totalorder %s317, %s319
      %p326 = scmp.eq.s32.totalorder %s31, 1
      %p327 = por %p325, %p326
      %p328 = scmp.ne.s32.totalorder %s319, %s320
      %p329 = scmp.eq.s32.totalorder %s31, 0
      %p330 = por %p328, %p329
      %p331 = scmp.ne.s32.totalorder %s319, %s320
      %p332 = scmp.eq.s32.totalorder %s32, 1
      %p333 = por %p331, %p332
      %p335 = scmp.ne.s32.totalorder %s320, %s334
      %p336 = scmp.eq.s32.totalorder %s32, 0
      %p337 = por %p335, %p336
      %s339 = sadd.s32 %s338, 1
      %p342 = scmp.eq.s32.totalorder %s26, 1
      %p343 = scmp.ne.s32.totalorder %s338, %s340
      %p344 = scmp.eq.s32.totalorder %s26, 0
      %p345 = por %p343, %p344
      %p346 = scmp.ne.s32.totalorder %s338, %s340
      %p347 = scmp.eq.s32.totalorder %s31, 1
      %p348 = por %p346, %p347
      %p349 = scmp.ne.s32.totalorder %s340, %s341
      %p350 = scmp.eq.s32.totalorder %s31, 0
      %p351 = por %p349, %p350
      %p352 = scmp.ne.s32.totalorder %s340, %s341
      %p353 = scmp.eq.s32.totalorder %s32, 1
      %p354 = por %p352, %p353
      %p356 = scmp.ne.s32.totalorder %s341, %s355
      %p357 = scmp.eq.s32.totalorder %s32, 0
      %p358 = por %p356, %p357
      %s359 = ssub.s32 %s26, %s33
      %p360 = scmp.eq.s32.totalorder %s359, 0
      %s362 = sadd.s32 %s361, 1
      %s363 = scalar_select %p360, %s361, %s362
      %p366 = pneg %p360
      %p367 = scmp.eq.s32.totalorder %s26, 1
      %p368 = por %p366, %p367
      %p369 = scmp.ne.s32.totalorder %s361, %s364
      %p370 = scmp.eq.s32.totalorder %s26, 0
      %p371 = por %p369, %p370
      %p372 = scmp.ne.s32.totalorder %s361, %s364
      %p373 = scmp.eq.s32.totalorder %s31, 1
      %p374 = por %p372, %p373
      %p375 = scmp.ne.s32.totalorder %s364, %s365
      %p376 = scmp.eq.s32.totalorder %s31, 0
      %p377 = por %p375, %p376
      %p378 = scmp.ne.s32.totalorder %s364, %s365
      %p379 = scmp.eq.s32.totalorder %s32, 1
      %p380 = por %p378, %p379
      %p382 = scmp.ne.s32.totalorder %s365, %s381
      %p383 = scmp.eq.s32.totalorder %s32, 0
      %p384 = por %p382, %p383
      %p385 = scmp.le.s32.totalorder 1, %s26
      %p386 = scmp.lt.s32.totalorder %s26, 3
      %p387 = pnand %p385, %p386
      %p388 = pneg %p387
      // Predicated region
      $region9: #{tpu_custom_call.1} parent=5 // pred_check
        _
      $region10: #{tpu_custom_call.1} parent=5 // pred_check_branch
        %390 = sbr.rel (%p387) target = $region12
      $region11: #{tpu_custom_call.1} parent=5 // pred_region
        %s391 = ssub.s32 %s26, 1
        // Predicated region
        $region13: #{tpu_custom_call.1} parent=11 // pred_check
          %p392 = pneg %p73
        $region14: #{tpu_custom_call.1} parent=11 // pred_check_branch
          %394 = sbr.rel (%p392) target = $region16
        $region15: #{tpu_custom_call.1} parent=11 // pred_region
          %s396 = ssub.s32 128, 128
          %397 = vsyncadd [#allocation3], %s396
          %s399 = sshll.u32 [#allocation2], 4
          %s400 = int_to_ptr.vmem [resolvable:$true] %s399
          %402 = dma.hbm_to_vmem [thread:$0]  %s1, 128, %s400, [#allocation3]
        $region16: #{tpu_custom_call.1} parent=11 // pred_fallthru
          _
        // Predicated region
        $region17: #{tpu_custom_call.1} parent=11 // pred_check
          %p403 = pneg %p120
        $region18: #{tpu_custom_call.1} parent=11 // pred_check_branch
          %405 = sbr.rel (%p403) target = $region20
        $region19: #{tpu_custom_call.1} parent=11 // pred_region
          _
        $region20: #{tpu_custom_call.1} parent=11 // pred_fallthru
          _
        // Predicated region
        $region21: #{tpu_custom_call.1} parent=11 // pred_check
          %p406 = pneg %p141
        $region22: #{tpu_custom_call.1} parent=11 // pred_check_branch
          %408 = sbr.rel (%p406) target = $region24
        $region23: #{tpu_custom_call.1} parent=11 // pred_region
          _
        $region24: #{tpu_custom_call.1} parent=11 // pred_fallthru
          _
        // Predicated region
        $region25: #{tpu_custom_call.1} parent=11 // pred_check
          %p409 = pneg %p162
        $region26: #{tpu_custom_call.1} parent=11 // pred_check_branch
          %411 = sbr.rel (%p409) target = $region28
        $region27: #{tpu_custom_call.1} parent=11 // pred_region
          _
        $region28: #{tpu_custom_call.1} parent=11 // pred_fallthru
          _
        // Predicated region
        $region29: #{tpu_custom_call.1} parent=11 // pred_check
          %p412 = pneg %p183
        $region30: #{tpu_custom_call.1} parent=11 // pred_check_branch
          %414 = sbr.rel (%p412) target = $region32
        $region31: #{tpu_custom_call.1} parent=11 // pred_region
          _
        $region32: #{tpu_custom_call.1} parent=11 // pred_fallthru
          _
        // Predicated region
        $region33: #{tpu_custom_call.1} parent=11 // pred_check
          %p415 = pneg %p204
        $region34: #{tpu_custom_call.1} parent=11 // pred_check_branch
          %417 = sbr.rel (%p415) target = $region36
        $region35: #{tpu_custom_call.1} parent=11 // pred_region
          %s419 = ssub.s32 256, 256
          %420 = vsyncadd [#allocation6], %s419
          %s421 = sshll.u32 [#allocation5], 4
          %s422 = int_to_ptr.vmem [resolvable:$true] %s421
          %427 = dma.hbm_to_vmem [thread:$0]  %s7, 256, %s422, [#allocation6], 64, 64, 4
        $region36: #{tpu_custom_call.1} parent=11 // pred_fallthru
          _
        // Predicated region
        $region37: #{tpu_custom_call.1} parent=11 // pred_check
          %p428 = pneg %p225
        $region38: #{tpu_custom_call.1} parent=11 // pred_check_branch
          %430 = sbr.rel (%p428) target = $region40
        $region39: #{tpu_custom_call.1} parent=11 // pred_region
          _
        $region40: #{tpu_custom_call.1} parent=11 // pred_fallthru
          _
        // Predicated region
        $region41: #{tpu_custom_call.1} parent=11 // pred_check
          %p431 = pneg %p246
        $region42: #{tpu_custom_call.1} parent=11 // pred_check_branch
          %433 = sbr.rel (%p431) target = $region44
        $region43: #{tpu_custom_call.1} parent=11 // pred_region
          _
        $region44: #{tpu_custom_call.1} parent=11 // pred_fallthru
          _
        // Predicated region
        $region45: #{tpu_custom_call.1} parent=11 // pred_check
          %p434 = pneg %p267
        $region46: #{tpu_custom_call.1} parent=11 // pred_check_branch
          %436 = sbr.rel (%p434) target = $region48
        $region47: #{tpu_custom_call.1} parent=11 // pred_region
          _
        $region48: #{tpu_custom_call.1} parent=11 // pred_fallthru
          _
        // Predicated region
        $region49: #{tpu_custom_call.1} parent=11 // pred_check
          %p437 = pneg %p288
        $region50: #{tpu_custom_call.1} parent=11 // pred_check_branch
          %439 = sbr.rel (%p437) target = $region52
        $region51: #{tpu_custom_call.1} parent=11 // pred_region
          _
        $region52: #{tpu_custom_call.1} parent=11 // pred_fallthru
          _
        // Predicated region
        $region53: #{tpu_custom_call.1} parent=11 // pred_check
          %p440 = pneg %p309
        $region54: #{tpu_custom_call.1} parent=11 // pred_check_branch
          %442 = sbr.rel (%p440) target = $region56
        $region55: #{tpu_custom_call.1} parent=11 // pred_region
          _
        $region56: #{tpu_custom_call.1} parent=11 // pred_fallthru
          _
        // Predicated region
        $region57: #{tpu_custom_call.1} parent=11 // pred_check
          %p443 = pneg %p330
        $region58: #{tpu_custom_call.1} parent=11 // pred_check_branch
          %445 = sbr.rel (%p443) target = $region60
        $region59: #{tpu_custom_call.1} parent=11 // pred_region
          _
        $region60: #{tpu_custom_call.1} parent=11 // pred_fallthru
          _
        // Predicated region
        $region61: #{tpu_custom_call.1} parent=11 // pred_check
          %p446 = pneg %p351
        $region62: #{tpu_custom_call.1} parent=11 // pred_check_branch
          %448 = sbr.rel (%p446) target = $region64
        $region63: #{tpu_custom_call.1} parent=11 // pred_region
          _
        $region64: #{tpu_custom_call.1} parent=11 // pred_fallthru
          _
      $region12: #{tpu_custom_call.1} parent=5 // pred_fallthru
        _
      %p449 = scmp.lt.s32.totalorder %s26, 2
      // Predicated region
      $region65: #{tpu_custom_call.1} parent=5 // pred_check
        %p450 = pneg %p449
      $region66: #{tpu_custom_call.1} parent=5 // pred_check_branch
        %452 = sbr.rel (%p450) target = $region68
      $region67: #{tpu_custom_call.1} parent=5 // pred_region
        // Predicated region
        $region69: #{tpu_custom_call.1} parent=67 // pred_check
          %p453 = pneg %p46
        $region70: #{tpu_custom_call.1} parent=67 // pred_check_branch
          %455 = sbr.rel (%p453) target = $region72
        $region71: #{tpu_custom_call.1} parent=67 // pred_region
          %p456 = scmp.lt.s32.totalorder %s26, 1
          %s457 = scalar_select %p456, %s26, 1
          %s458 = smul.addr %s457, 8
          %s459 = scalar_lea.vmem %s0, %s458
        $region72: #{tpu_custom_call.1} parent=67 // pred_fallthru
          _
        // Predicated region
        $region73: #{tpu_custom_call.1} parent=67 // pred_check
          %p460 = pneg %p93
        $region74: #{tpu_custom_call.1} parent=67 // pred_check_branch
          %462 = sbr.rel (%p460) target = $region76
        $region75: #{tpu_custom_call.1} parent=67 // pred_region
          %p463 = scmp.lt.s32.totalorder %s26, 1
          %s464 = scalar_select %p463, %s26, 1
          %s465 = scalar_lea.vmem %s2, %s464
        $region76: #{tpu_custom_call.1} parent=67 // pred_fallthru
          _
      $region68: #{tpu_custom_call.1} parent=5 // pred_fallthru
        _
      %p466 = scmp.le.s32.totalorder 1, %s26
      %p467 = scmp.lt.s32.totalorder %s26, 3
      %p468 = pnand %p466, %p467
      %p469 = pneg %p468
      // Predicated region
      $region77: #{tpu_custom_call.1} parent=5 // pred_check
        _
      $region78: #{tpu_custom_call.1} parent=5 // pred_check_branch
        %471 = sbr.rel (%p468) target = $region80
      $region79: #{tpu_custom_call.1} parent=5 // pred_region
        %s472 = ssub.s32 %s26, 1
        // Predicated region
        $region81: #{tpu_custom_call.1} parent=79 // pred_check
          %p473 = pneg %p73
        $region82: #{tpu_custom_call.1} parent=79 // pred_check_branch
          %475 = sbr.rel (%p473) target = $region84
        $region83: #{tpu_custom_call.1} parent=79 // pred_region
          %476 = dma.done [#allocation3], 128
        $region84: #{tpu_custom_call.1} parent=79 // pred_fallthru
          _
        // Predicated region
        $region85: #{tpu_custom_call.1} parent=79 // pred_check
          %p477 = pneg %p204
        $region86: #{tpu_custom_call.1} parent=79 // pred_check_branch
          %479 = sbr.rel (%p477) target = $region88
        $region87: #{tpu_custom_call.1} parent=79 // pred_region
          %480 = dma.done [#allocation6], 256
        $region88: #{tpu_custom_call.1} parent=79 // pred_fallthru
          _
        %p481 = scmp.lt.s32.totalorder %s31, 1
        %s482 = scalar_select %p481, %s31, 1
        %s483 = smul.addr %s482, 8
        %s484 = scalar_lea.vmem %s0, %s483
        %p485 = pneg %p52
        %p486 = pneg %p49
        %p487 = pneg %p73
        %p488 = pneg %p70
        %p489 = scmp.lt.s32.totalorder %s31, 1
        %s490 = scalar_select %p489, %s31, 1
        %s491 = scalar_lea.vmem %s2, %s490
        %p492 = pneg %p99
        %p493 = pneg %p96
        %p494 = pneg %p120
        %p495 = pneg %p117
        %p496 = pneg %p141
        %p497 = pneg %p138
        %p498 = pneg %p162
        %p499 = pneg %p159
        %p500 = pneg %p183
        %p501 = pneg %p180
        %p502 = pneg %p204
        %p503 = pneg %p201
        %p504 = pneg %p225
        %p505 = pneg %p222
        %p506 = pneg %p246
        %p507 = pneg %p243
        %p508 = pneg %p267
        %p509 = pneg %p264
        %p510 = pneg %p288
        %p511 = pneg %p285
        %p512 = pneg %p309
        %p513 = pneg %p306
        %p514 = pneg %p330
        %p515 = pneg %p327
        %p516 = pneg %p351
        %p517 = pneg %p348
        %p518 = pneg %p377
        %p519 = pneg %p374
        %s520 = sand.u32 %s364, 1
        %s521 = scalar_lea.sflag [#allocation4], %s520
        %s522 = sand.u32 %s364, 1
        %s523 = smul.addr %s522, 8
        %s524 = scalar_lea.vmem [#allocation7], %s523
        %p525 = scmp.lt.s32.totalorder %s31, 1
        %s526 = scalar_select %p525, %s31, 1
        %s527 = smul.addr %s526, 8
        %s528 = scalar_lea.vmem %s0, %s527
        %p529 = scmp.lt.s32.totalorder %s31, 1
        %s530 = scalar_select %p529, %s31, 1
        %s531 = scalar_lea.vmem %s2, %s530
        %v533 = vld [vmem:[%s528] sm:$0xff]
        %v534 = vmul.f32 %v533, 32.0
        %v535 = vld [vmem:[#allocation2] sm:$0xff]
        %v536 = vadd.f32 %v534, %v535
        %v537 = vld [vmem:[%s531] sm:$0x1]
        %v538 = vmul.f32 %v537, -1e+09
        %v539 = vld [vmem:[%s3] sm:$0xf]
        %v540 = vld [vmem:[%s3 + $0x4] sm:$0xf]
        %v541 = vld [vmem:[%s3 + $0x8] sm:$0xf]
        %v542 = vld [vmem:[%s3 + $0xc] sm:$0xf]
        %v543 = vld [vmem:[%s4] sm:$0x1]
        %v544 = vld [vmem:[%s5] sm:$0xf]
        %v545 = vld [vmem:[%s5 + $0x4] sm:$0xf]
        %v546 = vld [vmem:[%s5 + $0x8] sm:$0xf]
        %v547 = vld [vmem:[%s5 + $0xc] sm:$0xf]
        %v548 = vld [vmem:[%s6] sm:$0x1]
        %v549 = vld [vmem:[#allocation5] sm:$0xf]
        %v550 = vld [vmem:[#allocation5 + $0x4] sm:$0xf]
        %v551 = vld [vmem:[#allocation5 + $0x8] sm:$0xf]
        %v552 = vld [vmem:[#allocation5 + $0xc] sm:$0xf]
        %v553 = vld [vmem:[%s8] sm:$0x1]
        %v554 = vld [vmem:[%s9] sm:$0xf]
        %v555 = vld [vmem:[%s9 + $0x4] sm:$0xf]
        %v556 = vld [vmem:[%s9 + $0x8] sm:$0xf]
        %v557 = vld [vmem:[%s9 + $0xc] sm:$0xf]
        %v558 = vld [vmem:[%s9 + $0x10] sm:$0xf]
        %v559 = vld [vmem:[%s9 + $0x14] sm:$0xf]
        %v560 = vld [vmem:[%s9 + $0x18] sm:$0xf]
        %v561 = vld [vmem:[%s9 + $0x1c] sm:$0xf]
        %v562 = vld [vmem:[%s10] sm:$0x1]
        %v563 = vld [vmem:[%s11] sm:$0x1]
        %v564 = vld [vmem:[%s12] sm:$0x1]
        %v565 = vld [vmem:[%s13] sm:$0x1]
        %v566 = vld [vmem:[%s14] sm:$0x1]
        %v567 = vpack.c.bf16 %v536, %v536
        %v569 = vlaneseq
        %v570 = vshrl.u32 %v569, 7
        %v571 = vsub.s32 0, %v570
        %v572 = vrot.slane %v543, %v571
        %v578 = vunpack.c.l.b16 %v539
        %v579 = vunpack.c.l.b16 %v540
        %v580 = vunpack.c.l.b16 %v541
        %v581 = vunpack.c.l.b16 %v542
        %v582 = vpack.c.b16 %v579, %v578
        %v583 = vpack.c.b16 %v581, %v580
        %vm586 = vcmask 261120
        %v588 = vsel %vm586, %v567, 0
        %590 = vmatprep.subr.bf16.mxu0 0
        %591 = vmatpush1.bf16.msra.mxu0 %v582
        %592 = vmatprep.subr.bf16.mxu0 0
        %593 = vmatpush1.bf16.msra.mxu0 %v583
        %594 = vmatprep.subr.bf16.mxu0 0
        %595 = vmatpush1.bf16.msra.mxu0 0
        %596 = vmatprep.subr.bf16.mxu0 0
        %597 = vmatpush1.bf16.msra.mxu0 0
        %598 = vmatprep.subr.bf16.mxu0 0
        %599 = vmatpush1.bf16.msra.mxu0 0
        %600 = vmatprep.subr.bf16.mxu0 0
        %601 = vmatpush1.bf16.msra.mxu0 0
        %602 = vmatprep.subr.bf16.mxu0 0
        %603 = vmatpush1.bf16.msra.mxu0 0
        %604 = vmatprep.subr.bf16.mxu0 0
        %605 = vmatpush1.bf16.msra.mxu0 0
        %606 = vmatprep.subr.bf16.mxu0 0
        %607 = vmatpush1.bf16.msra.mxu0 0
        %608 = vmatprep.subr.bf16.mxu0 0
        %609 = vmatpush1.bf16.msra.mxu0 0
        %610 = vmatprep.subr.bf16.mxu0 0
        %611 = vmatpush1.bf16.msra.mxu0 0
        %612 = vmatprep.subr.bf16.mxu0 0
        %613 = vmatpush1.bf16.msra.mxu0 0
        %614 = vmatprep.subr.bf16.mxu0 0
        %615 = vmatpush1.bf16.msra.mxu0 0
        %616 = vmatprep.subr.bf16.mxu0 0
        %617 = vmatpush1.bf16.msra.mxu0 0
        %618 = vmatprep.subr.bf16.mxu0 0
        %619 = vmatpush1.bf16.msra.mxu0 0
        %620 = vmatprep.subr.bf16.mxu0 0
        %621 = vmatpush1.bf16.msra.mxu0 0
        %622 = vmatprep.mubr.bf16.mxu0 0
        %623 = vmatmul.mubr.bf16.gmra.mrb[0].mxu0 %v588
        %v624 = vpop.f32.mrb[0].mxu0
        %v625 = vadd.f32 %v572, %v624
        %v626 = vpop.f32.mrb[0].mxu0
        %v627 = vpop.f32.mrb[0].mxu0
        %v628 = vpop.f32.mrb[0].mxu0
        %629 = vdwg.mxu0
        %631 = vrot.lane.b32.xlu0 %v625, 120
        %v632 = vpop.permute.xlu0 %631
        %634 = vrot.lane.b32.xlu0 %v625, 112
        %v635 = vpop.permute.xlu0 %634
        %637 = vrot.lane.b32.xlu0 %v625, 104
        %v638 = vpop.permute.xlu0 %637
        %v640 = vcombine.low %v625, %v635
        %v641 = vcombine.high %v625, %v635
        %v643 = vunpack.c.l.s4 1983009808
        %v644 = vunpack.c.0.s8 %v643
        %v645 = vlaneseq
        %v646 = vshrl.u32 %v645, 7
        %v647 = vsub.s32 %v644, %v646
        %v648 = vrot.slane %v640, %v647
        %v650 = vunpack.c.l.s4 1983009808
        %v651 = vunpack.c.0.s8 %v650
        %v652 = vlaneseq
        %v653 = vshrl.u32 %v652, 7
        %v654 = vsub.s32 %v651, %v653
        %v655 = vrot.slane %v641, %v654
        %v656 = vcombine.low %v632, %v638
        %v657 = vcombine.high %v632, %v638
        %v659 = vunpack.c.l.s4 1983009808
        %v660 = vunpack.c.0.s8 %v659
        %v661 = vlaneseq
        %v662 = vshrl.u32 %v661, 7
        %v663 = vsub.s32 %v660, %v662
        %v664 = vrot.slane %v656, %v663
        %v666 = vunpack.c.l.s4 1983009808
        %v667 = vunpack.c.0.s8 %v666
        %v668 = vlaneseq
        %v669 = vshrl.u32 %v668, 7
        %v670 = vsub.s32 %v667, %v669
        %v671 = vrot.slane %v657, %v670
        %v672 = vcombine.low %v648, %v664
        %v673 = vcombine.high %v648, %v664
        %v675 = vunpack.c.l.s4 1934713408
        %v676 = vunpack.c.0.s8 %v675
        %v677 = vlaneseq
        %v678 = vshrl.u32 %v677, 7
        %v679 = vsub.s32 %v676, %v678
        %v680 = vrot.slane %v672, %v679
        %v682 = vunpack.c.l.s4 1934713408
        %v683 = vunpack.c.0.s8 %v682
        %v684 = vlaneseq
        %v685 = vshrl.u32 %v684, 7
        %v686 = vsub.s32 %v683, %v685
        %v687 = vrot.slane %v673, %v686
        %v688 = vcombine.low %v655, %v671
        %v689 = vcombine.high %v655, %v671
        %v691 = vunpack.c.l.s4 1934713408
        %v692 = vunpack.c.0.s8 %v691
        %v693 = vlaneseq
        %v694 = vshrl.u32 %v693, 7
        %v695 = vsub.s32 %v692, %v694
        %v696 = vrot.slane %v688, %v695
        %v698 = vunpack.c.l.s4 1934713408
        %v699 = vunpack.c.0.s8 %v698
        %v700 = vlaneseq
        %v701 = vshrl.u32 %v700, 7
        %v702 = vsub.s32 %v699, %v701
        %v703 = vrot.slane %v689, %v702
        %v704 = vcombine.high %v680, 0.0
        %v705 = vcombine.high %v687, 0.0
        %v706 = vcombine.high %v696, 0.0
        %v707 = vcombine.high %v703, 0.0
        %v708 = vpack.c.bf16 %v680, %v680
        %v709 = vpack.c.bf16 %v704, %v704
        %v710 = vpack.c.bf16 %v687, %v687
        %v711 = vpack.c.bf16 %v705, %v705
        %v712 = vpack.c.bf16 %v696, %v696
        %v713 = vpack.c.bf16 %v706, %v706
        %v714 = vpack.c.bf16 %v703, %v703
        %v715 = vpack.c.bf16 %v707, %v707
        %716 = vrot.lane.b32.xlu0 %v625, 96
        %v717 = vpop.permute.xlu0 %716
        %718 = vrot.lane.b32.xlu0 %v632, 96
        %v719 = vpop.permute.xlu0 %718
        %720 = vrot.lane.b32.xlu0 %v635, 96
        %v721 = vpop.permute.xlu0 %720
        %722 = vrot.lane.b32.xlu0 %v638, 96
        %v723 = vpop.permute.xlu0 %722
        %v728 = vcombine.low %v717, %v721
        %v729 = vcombine.high %v717, %v721
        %v731 = vunpack.c.l.s4 1983009808
        %v732 = vunpack.c.0.s8 %v731
        %v733 = vlaneseq
        %v734 = vshrl.u32 %v733, 7
        %v735 = vsub.s32 %v732, %v734
        %v736 = vrot.slane %v728, %v735
        %v738 = vunpack.c.l.s4 1983009808
        %v739 = vunpack.c.0.s8 %v738
        %v740 = vlaneseq
        %v741 = vshrl.u32 %v740, 7
        %v742 = vsub.s32 %v739, %v741
        %v743 = vrot.slane %v729, %v742
        %v744 = vcombine.low %v719, %v723
        %v745 = vcombine.high %v719, %v723
        %v747 = vunpack.c.l.s4 1983009808
        %v748 = vunpack.c.0.s8 %v747
        %v749 = vlaneseq
        %v750 = vshrl.u32 %v749, 7
        %v751 = vsub.s32 %v748, %v750
        %v752 = vrot.slane %v744, %v751
        %v754 = vunpack.c.l.s4 1983009808
        %v755 = vunpack.c.0.s8 %v754
        %v756 = vlaneseq
        %v757 = vshrl.u32 %v756, 7
        %v758 = vsub.s32 %v755, %v757
        %v759 = vrot.slane %v745, %v758
        %v760 = vcombine.low %v736, %v752
        %v761 = vcombine.high %v736, %v752
        %v763 = vunpack.c.l.s4 1934713408
        %v764 = vunpack.c.0.s8 %v763
        %v765 = vlaneseq
        %v766 = vshrl.u32 %v765, 7
        %v767 = vsub.s32 %v764, %v766
        %v768 = vrot.slane %v760, %v767
        %v770 = vunpack.c.l.s4 1934713408
        %v771 = vunpack.c.0.s8 %v770
        %v772 = vlaneseq
        %v773 = vshrl.u32 %v772, 7
        %v774 = vsub.s32 %v771, %v773
        %v775 = vrot.slane %v761, %v774
        %v776 = vcombine.low %v743, %v759
        %v777 = vcombine.high %v743, %v759
        %v779 = vunpack.c.l.s4 1934713408
        %v780 = vunpack.c.0.s8 %v779
        %v781 = vlaneseq
        %v782 = vshrl.u32 %v781, 7
        %v783 = vsub.s32 %v780, %v782
        %v784 = vrot.slane %v776, %v783
        %v786 = vunpack.c.l.s4 1934713408
        %v787 = vunpack.c.0.s8 %v786
        %v788 = vlaneseq
        %v789 = vshrl.u32 %v788, 7
        %v790 = vsub.s32 %v787, %v789
        %v791 = vrot.slane %v777, %v790
        %v792 = vcombine.high %v768, 0.0
        %v793 = vcombine.high %v775, 0.0
        %v794 = vcombine.high %v784, 0.0
        %v795 = vcombine.high %v791, 0.0
        %v796 = vpack.c.bf16 %v768, %v768
        %v797 = vpack.c.bf16 %v792, %v792
        %v798 = vpack.c.bf16 %v775, %v775
        %v799 = vpack.c.bf16 %v793, %v793
        %v800 = vpack.c.bf16 %v784, %v784
        %v801 = vpack.c.bf16 %v794, %v794
        %v802 = vpack.c.bf16 %v791, %v791
        %v803 = vpack.c.bf16 %v795, %v795
        %804 = vrot.lane.b32.xlu0 %v625, 64
        %v805 = vpop.permute.xlu0 %804
        %806 = vrot.lane.b32.xlu0 %v632, 64
        %v807 = vpop.permute.xlu0 %806
        %808 = vrot.lane.b32.xlu0 %v635, 64
        %v809 = vpop.permute.xlu0 %808
        %810 = vrot.lane.b32.xlu0 %v638, 64
        %v811 = vpop.permute.xlu0 %810
        %v816 = vcombine.low %v805, %v809
        %v817 = vcombine.high %v805, %v809
        %v819 = vunpack.c.l.s4 1983009808
        %v820 = vunpack.c.0.s8 %v819
        %v821 = vlaneseq
        %v822 = vshrl.u32 %v821, 7
        %v823 = vsub.s32 %v820, %v822
        %v824 = vrot.slane %v816, %v823
        %v826 = vunpack.c.l.s4 1983009808
        %v827 = vunpack.c.0.s8 %v826
        %v828 = vlaneseq
        %v829 = vshrl.u32 %v828, 7
        %v830 = vsub.s32 %v827, %v829
        %v831 = vrot.slane %v817, %v830
        %v832 = vcombine.low %v807, %v811
        %v833 = vcombine.high %v807, %v811
        %v835 = vunpack.c.l.s4 1983009808
        %v836 = vunpack.c.0.s8 %v835
        %v837 = vlaneseq
        %v838 = vshrl.u32 %v837, 7
        %v839 = vsub.s32 %v836, %v838
        %v840 = vrot.slane %v832, %v839
        %v842 = vunpack.c.l.s4 1983009808
        %v843 = vunpack.c.0.s8 %v842
        %v844 = vlaneseq
        %v845 = vshrl.u32 %v844, 7
        %v846 = vsub.s32 %v843, %v845
        %v847 = vrot.slane %v833, %v846
        %v848 = vcombine.low %v824, %v840
        %v849 = vcombine.high %v824, %v840
        %v851 = vunpack.c.l.s4 1934713408
        %v852 = vunpack.c.0.s8 %v851
        %v853 = vlaneseq
        %v854 = vshrl.u32 %v853, 7
        %v855 = vsub.s32 %v852, %v854
        %v856 = vrot.slane %v848, %v855
        %v858 = vunpack.c.l.s4 1934713408
        %v859 = vunpack.c.0.s8 %v858
        %v860 = vlaneseq
        %v861 = vshrl.u32 %v860, 7
        %v862 = vsub.s32 %v859, %v861
        %v863 = vrot.slane %v849, %v862
        %v864 = vcombine.low %v831, %v847
        %v865 = vcombine.high %v831, %v847
        %v867 = vunpack.c.l.s4 1934713408
        %v868 = vunpack.c.0.s8 %v867
        %v869 = vlaneseq
        %v870 = vshrl.u32 %v869, 7
        %v871 = vsub.s32 %v868, %v870
        %v872 = vrot.slane %v864, %v871
        %v874 = vunpack.c.l.s4 1934713408
        %v875 = vunpack.c.0.s8 %v874
        %v876 = vlaneseq
        %v877 = vshrl.u32 %v876, 7
        %v878 = vsub.s32 %v875, %v877
        %v879 = vrot.slane %v865, %v878
        %v880 = vcombine.high %v856, 0.0
        %v881 = vcombine.high %v863, 0.0
        %v882 = vcombine.high %v872, 0.0
        %v883 = vcombine.high %v879, 0.0
        %v884 = vpack.c.bf16 %v856, %v856
        %v885 = vpack.c.bf16 %v880, %v880
        %v886 = vpack.c.bf16 %v863, %v863
        %v887 = vpack.c.bf16 %v881, %v881
        %v888 = vpack.c.bf16 %v872, %v872
        %v889 = vpack.c.bf16 %v882, %v882
        %v890 = vpack.c.bf16 %v879, %v879
        %v891 = vpack.c.bf16 %v883, %v883
        %v892 = vcombine.low %v708, %v712
        %v894 = vunpack.c.l.s4 1983009808
        %v895 = vunpack.c.0.s8 %v894
        %v896 = vlaneseq
        %v897 = vshrl.u32 %v896, 7
        %v898 = vsub.s32 %v895, %v897
        %v899 = vrot.slane %v892, %v898
        %v900 = vcombine.low %v710, %v714
        %v902 = vunpack.c.l.s4 1983009808
        %v903 = vunpack.c.0.s8 %v902
        %v904 = vlaneseq
        %v905 = vshrl.u32 %v904, 7
        %v906 = vsub.s32 %v903, %v905
        %v907 = vrot.slane %v900, %v906
        %v908 = vcombine.low %v899, %v907
        %v910 = vunpack.c.l.s4 1934713408
        %v911 = vunpack.c.0.s8 %v910
        %v912 = vlaneseq
        %v913 = vshrl.u32 %v912, 7
        %v914 = vsub.s32 %v911, %v913
        %v915 = vrot.slane %v908, %v914
        %v916 = vcombine.high %v915, 0
        %v917 = vcombine.low %v709, %v713
        %v919 = vunpack.c.l.s4 1983009808
        %v920 = vunpack.c.0.s8 %v919
        %v921 = vlaneseq
        %v922 = vshrl.u32 %v921, 7
        %v923 = vsub.s32 %v920, %v922
        %v924 = vrot.slane %v917, %v923
        %v925 = vcombine.low %v711, %v715
        %v927 = vunpack.c.l.s4 1983009808
        %v928 = vunpack.c.0.s8 %v927
        %v929 = vlaneseq
        %v930 = vshrl.u32 %v929, 7
        %v931 = vsub.s32 %v928, %v930
        %v932 = vrot.slane %v925, %v931
        %v933 = vcombine.low %v924, %v932
        %v935 = vunpack.c.l.s4 1934713408
        %v936 = vunpack.c.0.s8 %v935
        %v937 = vlaneseq
        %v938 = vshrl.u32 %v937, 7
        %v939 = vsub.s32 %v936, %v938
        %v940 = vrot.slane %v933, %v939
        %v941 = vcombine.high %v940, 0
        %v944 = vpack.i.b16 %v940, %v915
        %v945 = vshrl.u32 %v915, 16
        %v946 = vshrl.u32 %v940, 16
        %v947 = vpack.i.b16 %v946, %v945
        %v950 = vpack.i.b16 %v941, %v916
        %v951 = vshrl.u32 %v916, 16
        %v952 = vshrl.u32 %v941, 16
        %v953 = vpack.i.b16 %v952, %v951
        %954 = vxpose.xlu0.c.b16.start [1/8] %v796, 128
        %955 = vxpose.xlu0.c.b16.cont [2/8] 0, 128
        %956 = vxpose.xlu0.c.b16.cont [3/8] 0, 128
        %957 = vxpose.xlu0.c.b16.cont [4/8] 0, 128
        %958 = vxpose.xlu0.c.b16.cont [5/8] 0, 128
        %959 = vxpose.xlu0.c.b16.cont [6/8] 0, 128
        %960 = vxpose.xlu0.c.b16.cont [7/8] 0, 128
        %961 = vxpose.xlu0.c.b16.end [8/8] 0, 128
        %v962 = vpop.trf.xlu0
        %v963 = vpop.trf.xlu0
        %v964 = vpop.trf.xlu0
        %v965 = vpop.trf.xlu0
        %v966 = vpop.trf.xlu0
        %v967 = vpop.trf.xlu0
        %v968 = vpop.trf.xlu0
        %v969 = vpop.trf.xlu0
        %970 = vxpose.xlu0.c.b16.start [1/8] %v797, 128
        %971 = vxpose.xlu0.c.b16.cont [2/8] 0, 128
        %972 = vxpose.xlu0.c.b16.cont [3/8] 0, 128
        %973 = vxpose.xlu0.c.b16.cont [4/8] 0, 128
        %974 = vxpose.xlu0.c.b16.cont [5/8] 0, 128
        %975 = vxpose.xlu0.c.b16.cont [6/8] 0, 128
        %976 = vxpose.xlu0.c.b16.cont [7/8] 0, 128
        %977 = vxpose.xlu0.c.b16.end [8/8] 0, 128
        %v978 = vpop.trf.xlu0
        %v979 = vpop.trf.xlu0
        %v980 = vpop.trf.xlu0
        %v981 = vpop.trf.xlu0
        %v982 = vpop.trf.xlu0
        %v983 = vpop.trf.xlu0
        %v984 = vpop.trf.xlu0
        %v985 = vpop.trf.xlu0
        %986 = vxpose.xlu0.c.b16.start [1/8] %v798, 128
        %987 = vxpose.xlu0.c.b16.cont [2/8] 0, 128
        %988 = vxpose.xlu0.c.b16.cont [3/8] 0, 128
        %989 = vxpose.xlu0.c.b16.cont [4/8] 0, 128
        %990 = vxpose.xlu0.c.b16.cont [5/8] 0, 128
        %991 = vxpose.xlu0.c.b16.cont [6/8] 0, 128
        %992 = vxpose.xlu0.c.b16.cont [7/8] 0, 128
        %993 = vxpose.xlu0.c.b16.end [8/8] 0, 128
        %v994 = vpop.trf.xlu0
        %v995 = vpop.trf.xlu0
        %v996 = vpop.trf.xlu0
        %v997 = vpop.trf.xlu0
        %v998 = vpop.trf.xlu0
        %v999 = vpop.trf.xlu0
        %v1000 = vpop.trf.xlu0
        %v1001 = vpop.trf.xlu0
        %1002 = vxpose.xlu0.c.b16.start [1/8] %v799, 128
        %1003 = vxpose.xlu0.c.b16.cont [2/8] 0, 128
        %1004 = vxpose.xlu0.c.b16.cont [3/8] 0, 128
        %1005 = vxpose.xlu0.c.b16.cont [4/8] 0, 128
        %1006 = vxpose.xlu0.c.b16.cont [5/8] 0, 128
        %1007 = vxpose.xlu0.c.b16.cont [6/8] 0, 128
        %1008 = vxpose.xlu0.c.b16.cont [7/8] 0, 128
        %1009 = vxpose.xlu0.c.b16.end [8/8] 0, 128
        %v1010 = vpop.trf.xlu0
        %v1011 = vpop.trf.xlu0
        %v1012 = vpop.trf.xlu0
        %v1013 = vpop.trf.xlu0
        %v1014 = vpop.trf.xlu0
        %v1015 = vpop.trf.xlu0
        %v1016 = vpop.trf.xlu0
        %v1017 = vpop.trf.xlu0
        %1018 = vxpose.xlu0.c.b16.start [1/8] %v800, 128
        %1019 = vxpose.xlu0.c.b16.cont [2/8] 0, 128
        %1020 = vxpose.xlu0.c.b16.cont [3/8] 0, 128
        %1021 = vxpose.xlu0.c.b16.cont [4/8] 0, 128
        %1022 = vxpose.xlu0.c.b16.cont [5/8] 0, 128
        %1023 = vxpose.xlu0.c.b16.cont [6/8] 0, 128
        %1024 = vxpose.xlu0.c.b16.cont [7/8] 0, 128
        %1025 = vxpose.xlu0.c.b16.end [8/8] 0, 128
        %v1026 = vpop.trf.xlu0
        %v1027 = vpop.trf.xlu0
        %v1028 = vpop.trf.xlu0
        %v1029 = vpop.trf.xlu0
        %v1030 = vpop.trf.xlu0
        %v1031 = vpop.trf.xlu0
        %v1032 = vpop.trf.xlu0
        %v1033 = vpop.trf.xlu0
        %1034 = vxpose.xlu0.c.b16.start [1/8] %v801, 128
        %1035 = vxpose.xlu0.c.b16.cont [2/8] 0, 128
        %1036 = vxpose.xlu0.c.b16.cont [3/8] 0, 128
        %1037 = vxpose.xlu0.c.b16.cont [4/8] 0, 128
        %1038 = vxpose.xlu0.c.b16.cont [5/8] 0, 128
        %1039 = vxpose.xlu0.c.b16.cont [6/8] 0, 128
        %1040 = vxpose.xlu0.c.b16.cont [7/8] 0, 128
        %1041 = vxpose.xlu0.c.b16.end [8/8] 0, 128
        %v1042 = vpop.trf.xlu0
        %v1043 = vpop.trf.xlu0
        %v1044 = vpop.trf.xlu0
        %v1045 = vpop.trf.xlu0
        %v1046 = vpop.trf.xlu0
        %v1047 = vpop.trf.xlu0
        %v1048 = vpop.trf.xlu0
        %v1049 = vpop.trf.xlu0
        %1050 = vxpose.xlu0.c.b16.start [1/8] %v802, 128
        %1051 = vxpose.xlu0.c.b16.cont [2/8] 0, 128
        %1052 = vxpose.xlu0.c.b16.cont [3/8] 0, 128
        %1053 = vxpose.xlu0.c.b16.cont [4/8] 0, 128
        %1054 = vxpose.xlu0.c.b16.cont [5/8] 0, 128
        %1055 = vxpose.xlu0.c.b16.cont [6/8] 0, 128
        %1056 = vxpose.xlu0.c.b16.cont [7/8] 0, 128
        %1057 = vxpose.xlu0.c.b16.end [8/8] 0, 128
        %v1058 = vpop.trf.xlu0
        %v1059 = vpop.trf.xlu0
        %v1060 = vpop.trf.xlu0
        %v1061 = vpop.trf.xlu0
        %v1062 = vpop.trf.xlu0
        %v1063 = vpop.trf.xlu0
        %v1064 = vpop.trf.xlu0
        %v1065 = vpop.trf.xlu0
        %1066 = vxpose.xlu0.c.b16.start [1/8] %v803, 128
        %1067 = vxpose.xlu0.c.b16.cont [2/8] 0, 128
        %1068 = vxpose.xlu0.c.b16.cont [3/8] 0, 128
        %1069 = vxpose.xlu0.c.b16.cont [4/8] 0, 128
        %1070 = vxpose.xlu0.c.b16.cont [5/8] 0, 128
        %1071 = vxpose.xlu0.c.b16.cont [6/8] 0, 128
        %1072 = vxpose.xlu0.c.b16.cont [7/8] 0, 128
        %1073 = vxpose.xlu0.c.b16.end [8/8] 0, 128
        %v1074 = vpop.trf.xlu0
        %v1075 = vpop.trf.xlu0
        %v1076 = vpop.trf.xlu0
        %v1077 = vpop.trf.xlu0
        %v1078 = vpop.trf.xlu0
        %v1079 = vpop.trf.xlu0
        %v1080 = vpop.trf.xlu0
        %v1081 = vpop.trf.xlu0
        %v1082 = vcombine.low %v962, %v1026
        %v1084 = vunpack.c.l.s4 1983009808
        %v1085 = vunpack.c.0.s8 %v1084
        %v1086 = vlaneseq
        %v1087 = vshrl.u32 %v1086, 7
        %v1088 = vsub.s32 %v1085, %v1087
        %v1089 = vrot.slane %v1082, %v1088
        %v1090 = vcombine.low %v994, %v1058
        %v1092 = vunpack.c.l.s4 1983009808
        %v1093 = vunpack.c.0.s8 %v1092
        %v1094 = vlaneseq
        %v1095 = vshrl.u32 %v1094, 7
        %v1096 = vsub.s32 %v1093, %v1095
        %v1097 = vrot.slane %v1090, %v1096
        %v1098 = vcombine.low %v1089, %v1097
        %v1099 = vcombine.high %v1089, %v1097
        %v1101 = vunpack.c.l.s4 1934713408
        %v1102 = vunpack.c.0.s8 %v1101
        %v1103 = vlaneseq
        %v1104 = vshrl.u32 %v1103, 7
        %v1105 = vsub.s32 %v1102, %v1104
        %v1106 = vrot.slane %v1098, %v1105
        %v1108 = vunpack.c.l.s4 1934713408
        %v1109 = vunpack.c.0.s8 %v1108
        %v1110 = vlaneseq
        %v1111 = vshrl.u32 %v1110, 7
        %v1112 = vsub.s32 %v1109, %v1111
        %v1113 = vrot.slane %v1099, %v1112
        %v1114 = vcombine.high %v1106, 0
        %v1115 = vcombine.high %v1113, 0
        %v1116 = vcombine.low %v978, %v1042
        %v1118 = vunpack.c.l.s4 1983009808
        %v1119 = vunpack.c.0.s8 %v1118
        %v1120 = vlaneseq
        %v1121 = vshrl.u32 %v1120, 7
        %v1122 = vsub.s32 %v1119, %v1121
        %v1123 = vrot.slane %v1116, %v1122
        %v1124 = vcombine.low %v1010, %v1074
        %v1126 = vunpack.c.l.s4 1983009808
        %v1127 = vunpack.c.0.s8 %v1126
        %v1128 = vlaneseq
        %v1129 = vshrl.u32 %v1128, 7
        %v1130 = vsub.s32 %v1127, %v1129
        %v1131 = vrot.slane %v1124, %v1130
        %v1132 = vcombine.low %v1123, %v1131
        %v1133 = vcombine.high %v1123, %v1131
        %v1135 = vunpack.c.l.s4 1934713408
        %v1136 = vunpack.c.0.s8 %v1135
        %v1137 = vlaneseq
        %v1138 = vshrl.u32 %v1137, 7
        %v1139 = vsub.s32 %v1136, %v1138
        %v1140 = vrot.slane %v1132, %v1139
        %v1142 = vunpack.c.l.s4 1934713408
        %v1143 = vunpack.c.0.s8 %v1142
        %v1144 = vlaneseq
        %v1145 = vshrl.u32 %v1144, 7
        %v1146 = vsub.s32 %v1143, %v1145
        %v1147 = vrot.slane %v1133, %v1146
        %v1148 = vcombine.high %v1140, 0
        %v1149 = vcombine.high %v1147, 0
        %v1152 = vpack.i.b16 %v1140, %v1106
        %v1154 = vshrl.u32 %v1106, 16
        %v1155 = vshrl.u32 %v1140, 16
        %v1156 = vpack.i.b16 %v1155, %v1154
        %v1160 = vpack.i.b16 %v1148, %v1114
        %v1162 = vshrl.u32 %v1114, 16
        %v1163 = vshrl.u32 %v1148, 16
        %v1164 = vpack.i.b16 %v1163, %v1162
        %v1168 = vpack.i.b16 %v1147, %v1113
        %v1170 = vshrl.u32 %v1113, 16
        %v1171 = vshrl.u32 %v1147, 16
        %v1172 = vpack.i.b16 %v1171, %v1170
        %v1176 = vpack.i.b16 %v1149, %v1115
        %v1178 = vshrl.u32 %v1115, 16
        %v1179 = vshrl.u32 %v1149, 16
        %v1180 = vpack.i.b16 %v1179, %v1178
        %1182 = vxpose.xlu0.c.b16.start [1/8] %v1152, 128
        %1183 = vxpose.xlu0.c.b16.cont [2/8] 0, 128
        %1184 = vxpose.xlu0.c.b16.cont [3/8] 0, 128
        %1185 = vxpose.xlu0.c.b16.cont [4/8] 0, 128
        %1186 = vxpose.xlu0.c.b16.cont [5/8] 0, 128
        %1187 = vxpose.xlu0.c.b16.cont [6/8] 0, 128
        %1188 = vxpose.xlu0.c.b16.cont [7/8] 0, 128
        %1189 = vxpose.xlu0.c.b16.end [8/8] 0, 128
        %v1190 = vpop.trf.xlu0
        %v1191 = vpop.trf.xlu0
        %v1192 = vpop.trf.xlu0
        %v1193 = vpop.trf.xlu0
        %v1194 = vpop.trf.xlu0
        %v1195 = vpop.trf.xlu0
        %v1196 = vpop.trf.xlu0
        %v1197 = vpop.trf.xlu0
        %1198 = vxpose.xlu0.c.b16.start [1/8] %v1156, 128
        %1199 = vxpose.xlu0.c.b16.cont [2/8] 0, 128
        %1200 = vxpose.xlu0.c.b16.cont [3/8] 0, 128
        %1201 = vxpose.xlu0.c.b16.cont [4/8] 0, 128
        %1202 = vxpose.xlu0.c.b16.cont [5/8] 0, 128
        %1203 = vxpose.xlu0.c.b16.cont [6/8] 0, 128
        %1204 = vxpose.xlu0.c.b16.cont [7/8] 0, 128
        %1205 = vxpose.xlu0.c.b16.end [8/8] 0, 128
        %v1206 = vpop.trf.xlu0
        %v1207 = vpop.trf.xlu0
        %v1208 = vpop.trf.xlu0
        %v1209 = vpop.trf.xlu0
        %v1210 = vpop.trf.xlu0
        %v1211 = vpop.trf.xlu0
        %v1212 = vpop.trf.xlu0
        %v1213 = vpop.trf.xlu0
        %1214 = vxpose.xlu0.c.b16.start [1/8] %v1160, 128
        %1215 = vxpose.xlu0.c.b16.cont [2/8] 0, 128
        %1216 = vxpose.xlu0.c.b16.cont [3/8] 0, 128
        %1217 = vxpose.xlu0.c.b16.cont [4/8] 0, 128
        %1218 = vxpose.xlu0.c.b16.cont [5/8] 0, 128
        %1219 = vxpose.xlu0.c.b16.cont [6/8] 0, 128
        %1220 = vxpose.xlu0.c.b16.cont [7/8] 0, 128
        %1221 = vxpose.xlu0.c.b16.end [8/8] 0, 128
        %v1222 = vpop.trf.xlu0
        %v1223 = vpop.trf.xlu0
        %v1224 = vpop.trf.xlu0
        %v1225 = vpop.trf.xlu0
        %v1226 = vpop.trf.xlu0
        %v1227 = vpop.trf.xlu0
        %v1228 = vpop.trf.xlu0
        %v1229 = vpop.trf.xlu0
        %1230 = vxpose.xlu0.c.b16.start [1/8] %v1164, 128
        %1231 = vxpose.xlu0.c.b16.cont [2/8] 0, 128
        %1232 = vxpose.xlu0.c.b16.cont [3/8] 0, 128
        %1233 = vxpose.xlu0.c.b16.cont [4/8] 0, 128
        %1234 = vxpose.xlu0.c.b16.cont [5/8] 0, 128
        %1235 = vxpose.xlu0.c.b16.cont [6/8] 0, 128
        %1236 = vxpose.xlu0.c.b16.cont [7/8] 0, 128
        %1237 = vxpose.xlu0.c.b16.end [8/8] 0, 128
        %v1238 = vpop.trf.xlu0
        %v1239 = vpop.trf.xlu0
        %v1240 = vpop.trf.xlu0
        %v1241 = vpop.trf.xlu0
        %v1242 = vpop.trf.xlu0
        %v1243 = vpop.trf.xlu0
        %v1244 = vpop.trf.xlu0
        %v1245 = vpop.trf.xlu0
        %1246 = vxpose.xlu0.c.b16.start [1/8] %v1168, 128
        %1247 = vxpose.xlu0.c.b16.cont [2/8] 0, 128
        %1248 = vxpose.xlu0.c.b16.cont [3/8] 0, 128
        %1249 = vxpose.xlu0.c.b16.cont [4/8] 0, 128
        %1250 = vxpose.xlu0.c.b16.cont [5/8] 0, 128
        %1251 = vxpose.xlu0.c.b16.cont [6/8] 0, 128
        %1252 = vxpose.xlu0.c.b16.cont [7/8] 0, 128
        %1253 = vxpose.xlu0.c.b16.end [8/8] 0, 128
        %v1254 = vpop.trf.xlu0
        %v1255 = vpop.trf.xlu0
        %v1256 = vpop.trf.xlu0
        %v1257 = vpop.trf.xlu0
        %v1258 = vpop.trf.xlu0
        %v1259 = vpop.trf.xlu0
        %v1260 = vpop.trf.xlu0
        %v1261 = vpop.trf.xlu0
        %1262 = vxpose.xlu0.c.b16.start [1/8] %v1172, 128
        %1263 = vxpose.xlu0.c.b16.cont [2/8] 0, 128
        %1264 = vxpose.xlu0.c.b16.cont [3/8] 0, 128
        %1265 = vxpose.xlu0.c.b16.cont [4/8] 0, 128
        %1266 = vxpose.xlu0.c.b16.cont [5/8] 0, 128
        %1267 = vxpose.xlu0.c.b16.cont [6/8] 0, 128
        %1268 = vxpose.xlu0.c.b16.cont [7/8] 0, 128
        %1269 = vxpose.xlu0.c.b16.end [8/8] 0, 128
        %v1270 = vpop.trf.xlu0
        %v1271 = vpop.trf.xlu0
        %v1272 = vpop.trf.xlu0
        %v1273 = vpop.trf.xlu0
        %v1274 = vpop.trf.xlu0
        %v1275 = vpop.trf.xlu0
        %v1276 = vpop.trf.xlu0
        %v1277 = vpop.trf.xlu0
        %1278 = vxpose.xlu0.c.b16.start [1/8] %v1176, 128
        %1279 = vxpose.xlu0.c.b16.cont [2/8] 0, 128
        %1280 = vxpose.xlu0.c.b16.cont [3/8] 0, 128
        %1281 = vxpose.xlu0.c.b16.cont [4/8] 0, 128
        %1282 = vxpose.xlu0.c.b16.cont [5/8] 0, 128
        %1283 = vxpose.xlu0.c.b16.cont [6/8] 0, 128
        %1284 = vxpose.xlu0.c.b16.cont [7/8] 0, 128
        %1285 = vxpose.xlu0.c.b16.end [8/8] 0, 128
        %v1286 = vpop.trf.xlu0
        %v1287 = vpop.trf.xlu0
        %v1288 = vpop.trf.xlu0
        %v1289 = vpop.trf.xlu0
        %v1290 = vpop.trf.xlu0
        %v1291 = vpop.trf.xlu0
        %v1292 = vpop.trf.xlu0
        %v1293 = vpop.trf.xlu0
        %1294 = vxpose.xlu0.c.b16.start [1/8] %v1180, 128
        %1295 = vxpose.xlu0.c.b16.cont [2/8] 0, 128
        %1296 = vxpose.xlu0.c.b16.cont [3/8] 0, 128
        %1297 = vxpose.xlu0.c.b16.cont [4/8] 0, 128
        %1298 = vxpose.xlu0.c.b16.cont [5/8] 0, 128
        %1299 = vxpose.xlu0.c.b16.cont [6/8] 0, 128
        %1300 = vxpose.xlu0.c.b16.cont [7/8] 0, 128
        %1301 = vxpose.xlu0.c.b16.end [8/8] 0, 128
        %v1302 = vpop.trf.xlu0
        %v1303 = vpop.trf.xlu0
        %v1304 = vpop.trf.xlu0
        %v1305 = vpop.trf.xlu0
        %v1306 = vpop.trf.xlu0
        %v1307 = vpop.trf.xlu0
        %v1308 = vpop.trf.xlu0
        %v1309 = vpop.trf.xlu0
        %v1310 = vcombine.low %v1190, %v1254
        %v1312 = vunpack.c.l.s4 1983009808
        %v1313 = vunpack.c.0.s8 %v1312
        %v1314 = vlaneseq
        %v1315 = vshrl.u32 %v1314, 7
        %v1316 = vsub.s32 %v1313, %v1315
        %v1317 = vrot.slane %v1310, %v1316
        %v1318 = vcombine.low %v1222, %v1286
        %v1320 = vunpack.c.l.s4 1983009808
        %v1321 = vunpack.c.0.s8 %v1320
        %v1322 = vlaneseq
        %v1323 = vshrl.u32 %v1322, 7
        %v1324 = vsub.s32 %v1321, %v1323
        %v1325 = vrot.slane %v1318, %v1324
        %v1326 = vcombine.low %v1317, %v1325
        %v1328 = vunpack.c.l.s4 1934713408
        %v1329 = vunpack.c.0.s8 %v1328
        %v1330 = vlaneseq
        %v1331 = vshrl.u32 %v1330, 7
        %v1332 = vsub.s32 %v1329, %v1331
        %v1333 = vrot.slane %v1326, %v1332
        %v1334 = vcombine.high %v1333, 0
        %v1335 = vcombine.low %v1206, %v1270
        %v1337 = vunpack.c.l.s4 1983009808
        %v1338 = vunpack.c.0.s8 %v1337
        %v1339 = vlaneseq
        %v1340 = vshrl.u32 %v1339, 7
        %v1341 = vsub.s32 %v1338, %v1340
        %v1342 = vrot.slane %v1335, %v1341
        %v1343 = vcombine.low %v1238, %v1302
        %v1345 = vunpack.c.l.s4 1983009808
        %v1346 = vunpack.c.0.s8 %v1345
        %v1347 = vlaneseq
        %v1348 = vshrl.u32 %v1347, 7
        %v1349 = vsub.s32 %v1346, %v1348
        %v1350 = vrot.slane %v1343, %v1349
        %v1351 = vcombine.low %v1342, %v1350
        %v1353 = vunpack.c.l.s4 1934713408
        %v1354 = vunpack.c.0.s8 %v1353
        %v1355 = vlaneseq
        %v1356 = vshrl.u32 %v1355, 7
        %v1357 = vsub.s32 %v1354, %v1356
        %v1358 = vrot.slane %v1351, %v1357
        %v1359 = vcombine.high %v1358, 0
        %v1362 = vpack.i.b16 %v1358, %v1333
        %v1363 = vshrl.u32 %v1333, 16
        %v1364 = vshrl.u32 %v1358, 16
        %v1365 = vpack.i.b16 %v1364, %v1363
        %v1368 = vpack.i.b16 %v1359, %v1334
        %v1369 = vshrl.u32 %v1334, 16
        %v1370 = vshrl.u32 %v1359, 16
        %v1371 = vpack.i.b16 %v1370, %v1369
        %vm1372 = vcmask 64512
        %v1374 = vsel %vm1372, %v944, 0
        %vm1376 = vcmask 1043456
        %v1378 = vsel %vm1376, %v1362, 0
        %1380 = vmatprep.subr.bf16.mxu0 0
        %1381 = vmatpush1.bf16.msra.mxu0 %v1378
        %1382 = vmatprep.subr.bf16.mxu0 0
        %1383 = vmatpush1.bf16.msra.mxu0 0
        %1384 = vmatprep.subr.bf16.mxu0 0
        %1385 = vmatpush1.bf16.msra.mxu0 0
        %1386 = vmatprep.subr.bf16.mxu0 0
        %1387 = vmatpush1.bf16.msra.mxu0 0
        %1388 = vmatprep.subr.bf16.mxu0 0
        %1389 = vmatpush1.bf16.msra.mxu0 0
        %1390 = vmatprep.subr.bf16.mxu0 0
        %1391 = vmatpush1.bf16.msra.mxu0 0
        %1392 = vmatprep.subr.bf16.mxu0 0
        %1393 = vmatpush1.bf16.msra.mxu0 0
        %1394 = vmatprep.subr.bf16.mxu0 0
        %1395 = vmatpush1.bf16.msra.mxu0 0
        %1396 = vmatprep.subr.bf16.mxu0 0
        %1397 = vmatpush1.bf16.msra.mxu0 0
        %1398 = vmatprep.subr.bf16.mxu0 0
        %1399 = vmatpush1.bf16.msra.mxu0 0
        %1400 = vmatprep.subr.bf16.mxu0 0
        %1401 = vmatpush1.bf16.msra.mxu0 0
        %1402 = vmatprep.subr.bf16.mxu0 0
        %1403 = vmatpush1.bf16.msra.mxu0 0
        %1404 = vmatprep.subr.bf16.mxu0 0
        %1405 = vmatpush1.bf16.msra.mxu0 0
        %1406 = vmatprep.subr.bf16.mxu0 0
        %1407 = vmatpush1.bf16.msra.mxu0 0
        %1408 = vmatprep.subr.bf16.mxu0 0
        %1409 = vmatpush1.bf16.msra.mxu0 0
        %1410 = vmatprep.subr.bf16.mxu0 0
        %1411 = vmatpush1.bf16.msra.mxu0 0
        %1412 = vmatprep.mubr.bf16.mxu0 0
        %1413 = vmatmul.mubr.bf16.gmra.mrb[0].mxu0 %v1374
        %v1414 = vpop.f32.mrb[0].mxu0
        %v1415 = vadd.f32 0.0, %v1414
        %v1416 = vpop.f32.mrb[0].mxu0
        %v1417 = vpop.f32.mrb[0].mxu0
        %v1418 = vpop.f32.mrb[0].mxu0
        %1419 = vdwg.mxu0
        %v1421 = vsel %vm1372, %v947, 0
        %v1424 = vsel %vm1376, %v1365, 0
        %1426 = vmatprep.subr.bf16.mxu0 0
        %1427 = vmatpush1.bf16.msra.mxu0 %v1424
        %1428 = vmatprep.subr.bf16.mxu0 0
        %1429 = vmatpush1.bf16.msra.mxu0 0
        %1430 = vmatprep.subr.bf16.mxu0 0
        %1431 = vmatpush1.bf16.msra.mxu0 0
        %1432 = vmatprep.subr.bf16.mxu0 0
        %1433 = vmatpush1.bf16.msra.mxu0 0
        %1434 = vmatprep.subr.bf16.mxu0 0
        %1435 = vmatpush1.bf16.msra.mxu0 0
        %1436 = vmatprep.subr.bf16.mxu0 0
        %1437 = vmatpush1.bf16.msra.mxu0 0
        %1438 = vmatprep.subr.bf16.mxu0 0
        %1439 = vmatpush1.bf16.msra.mxu0 0
        %1440 = vmatprep.subr.bf16.mxu0 0
        %1441 = vmatpush1.bf16.msra.mxu0 0
        %1442 = vmatprep.subr.bf16.mxu0 0
        %1443 = vmatpush1.bf16.msra.mxu0 0
        %1444 = vmatprep.subr.bf16.mxu0 0
        %1445 = vmatpush1.bf16.msra.mxu0 0
        %1446 = vmatprep.subr.bf16.mxu0 0
        %1447 = vmatpush1.bf16.msra.mxu0 0
        %1448 = vmatprep.subr.bf16.mxu0 0
        %1449 = vmatpush1.bf16.msra.mxu0 0
        %1450 = vmatprep.subr.bf16.mxu0 0
        %1451 = vmatpush1.bf16.msra.mxu0 0
        %1452 = vmatprep.subr.bf16.mxu0 0
        %1453 = vmatpush1.bf16.msra.mxu0 0
        %1454 = vmatprep.subr.bf16.mxu0 0
        %1455 = vmatpush1.bf16.msra.mxu0 0
        %1456 = vmatprep.subr.bf16.mxu0 0
        %1457 = vmatpush1.bf16.msra.mxu0 0
        %1458 = vmatprep.mubr.bf16.mxu0 0
        %1459 = vmatmul.mubr.bf16.gmra.mrb[0].mxu0 %v1421
        %v1460 = vpop.f32.mrb[0].mxu0
        %v1461 = vadd.f32 0.0, %v1460
        %v1462 = vpop.f32.mrb[0].mxu0
        %v1463 = vpop.f32.mrb[0].mxu0
        %v1464 = vpop.f32.mrb[0].mxu0
        %1465 = vdwg.mxu0
        %v1467 = vsel %vm1372, %v950, 0
        %v1470 = vsel %vm1376, %v1368, 0
        %1472 = vmatprep.subr.bf16.mxu0 0
        %1473 = vmatpush1.bf16.msra.mxu0 %v1470
        %1474 = vmatprep.subr.bf16.mxu0 0
        %1475 = vmatpush1.bf16.msra.mxu0 0
        %1476 = vmatprep.subr.bf16.mxu0 0
        %1477 = vmatpush1.bf16.msra.mxu0 0
        %1478 = vmatprep.subr.bf16.mxu0 0
        %1479 = vmatpush1.bf16.msra.mxu0 0
        %1480 = vmatprep.subr.bf16.mxu0 0
        %1481 = vmatpush1.bf16.msra.mxu0 0
        %1482 = vmatprep.subr.bf16.mxu0 0
        %1483 = vmatpush1.bf16.msra.mxu0 0
        %1484 = vmatprep.subr.bf16.mxu0 0
        %1485 = vmatpush1.bf16.msra.mxu0 0
        %1486 = vmatprep.subr.bf16.mxu0 0
        %1487 = vmatpush1.bf16.msra.mxu0 0
        %1488 = vmatprep.subr.bf16.mxu0 0
        %1489 = vmatpush1.bf16.msra.mxu0 0
        %1490 = vmatprep.subr.bf16.mxu0 0
        %1491 = vmatpush1.bf16.msra.mxu0 0
        %1492 = vmatprep.subr.bf16.mxu0 0
        %1493 = vmatpush1.bf16.msra.mxu0 0
        %1494 = vmatprep.subr.bf16.mxu0 0
        %1495 = vmatpush1.bf16.msra.mxu0 0
        %1496 = vmatprep.subr.bf16.mxu0 0
        %1497 = vmatpush1.bf16.msra.mxu0 0
        %1498 = vmatprep.subr.bf16.mxu0 0
        %1499 = vmatpush1.bf16.msra.mxu0 0
        %1500 = vmatprep.subr.bf16.mxu0 0
        %1501 = vmatpush1.bf16.msra.mxu0 0
        %1502 = vmatprep.subr.bf16.mxu0 0
        %1503 = vmatpush1.bf16.msra.mxu0 0
        %1504 = vmatprep.mubr.bf16.mxu0 0
        %1505 = vmatmul.mubr.bf16.gmra.mrb[0].mxu0 %v1467
        %v1506 = vpop.f32.mrb[0].mxu0
        %v1507 = vadd.f32 0.0, %v1506
        %v1508 = vpop.f32.mrb[0].mxu0
        %v1509 = vpop.f32.mrb[0].mxu0
        %v1510 = vpop.f32.mrb[0].mxu0
        %1511 = vdwg.mxu0
        %v1513 = vsel %vm1372, %v953, 0
        %v1516 = vsel %vm1376, %v1371, 0
        %1518 = vmatprep.subr.bf16.mxu0 0
        %1519 = vmatpush1.bf16.msra.mxu0 %v1516
        %1520 = vmatprep.subr.bf16.mxu0 0
        %1521 = vmatpush1.bf16.msra.mxu0 0
        %1522 = vmatprep.subr.bf16.mxu0 0
        %1523 = vmatpush1.bf16.msra.mxu0 0
        %1524 = vmatprep.subr.bf16.mxu0 0
        %1525 = vmatpush1.bf16.msra.mxu0 0
        %1526 = vmatprep.subr.bf16.mxu0 0
        %1527 = vmatpush1.bf16.msra.mxu0 0
        %1528 = vmatprep.subr.bf16.mxu0 0
        %1529 = vmatpush1.bf16.msra.mxu0 0
        %1530 = vmatprep.subr.bf16.mxu0 0
        %1531 = vmatpush1.bf16.msra.mxu0 0
        %1532 = vmatprep.subr.bf16.mxu0 0
        %1533 = vmatpush1.bf16.msra.mxu0 0
        %1534 = vmatprep.subr.bf16.mxu0 0
        %1535 = vmatpush1.bf16.msra.mxu0 0
        %1536 = vmatprep.subr.bf16.mxu0 0
        %1537 = vmatpush1.bf16.msra.mxu0 0
        %1538 = vmatprep.subr.bf16.mxu0 0
        %1539 = vmatpush1.bf16.msra.mxu0 0
        %1540 = vmatprep.subr.bf16.mxu0 0
        %1541 = vmatpush1.bf16.msra.mxu0 0
        %1542 = vmatprep.subr.bf16.mxu0 0
        %1543 = vmatpush1.bf16.msra.mxu0 0
        %1544 = vmatprep.subr.bf16.mxu0 0
        %1545 = vmatpush1.bf16.msra.mxu0 0
        %1546 = vmatprep.subr.bf16.mxu0 0
        %1547 = vmatpush1.bf16.msra.mxu0 0
        %1548 = vmatprep.subr.bf16.mxu0 0
        %1549 = vmatpush1.bf16.msra.mxu0 0
        %1550 = vmatprep.mubr.bf16.mxu0 0
        %1551 = vmatmul.mubr.bf16.gmra.mrb[0].mxu0 %v1513
        %v1552 = vpop.f32.mrb[0].mxu0
        %v1553 = vadd.f32 0.0, %v1552
        %v1554 = vpop.f32.mrb[0].mxu0
        %v1555 = vpop.f32.mrb[0].mxu0
        %v1556 = vpop.f32.mrb[0].mxu0
        %1557 = vdwg.mxu0
        %v1558 = vmul.f32 %v1415, 0.35355338
        %v1559 = vmul.f32 %v1461, 0.35355338
        %v1560 = vmul.f32 %v1507, 0.35355338
        %v1561 = vmul.f32 %v1553, 0.35355338
        %v1563 = vlaneseq
        %v1564 = vshrl.u32 %v1563, 7
        %v1565 = vsub.s32 0, %v1564
        %v1566 = vrot.slane %v538, %v1565
        %v1568 = vadd.f32 %v1558, %v1566
        %v1569 = vadd.f32 %v1559, %v1566
        %v1570 = vadd.f32 %v1560, %v1566
        %v1571 = vadd.f32 %v1561, %v1566
        %v1572 = vsel %vm1372, %v1568, -inf
        %1573 = vmax.xlane.f32.xlu0 %v1572
        %v1574 = vpop.xlane.xlu0 %1573
        %v1575 = vsel %vm1372, %v1569, -inf
        %1576 = vmax.xlane.f32.xlu0 %v1575
        %v1577 = vpop.xlane.xlu0 %1576
        %v1578 = vsel %vm1372, %v1570, -inf
        %1579 = vmax.xlane.f32.xlu0 %v1578
        %v1580 = vpop.xlane.xlu0 %1579
        %v1581 = vsel %vm1372, %v1571, -inf
        %1582 = vmax.xlane.f32.xlu0 %v1581
        %v1583 = vpop.xlane.xlu0 %1582
        %v1584 = vsub.f32 %v1568, %v1574
        %v1585 = vsub.f32 %v1569, %v1577
        %v1586 = vsub.f32 %v1570, %v1580
        %v1587 = vsub.f32 %v1571, %v1583
        %v1588 = vmul.f32 %v1584, 1.442695
        %v1589 = vpow.pop %v1588
        %v1590 = vmul.f32 %v1585, 1.442695
        %v1591 = vpow.pop %v1590
        %v1592 = vmul.f32 %v1586, 1.442695
        %v1593 = vpow.pop %v1592
        %v1594 = vmul.f32 %v1587, 1.442695
        %v1595 = vpow.pop %v1594
        %v1596 = vsel %vm1372, %v1589, 0.0
        %1597 = vadd.xlane.f32.xlu0 %v1596
        %v1598 = vpop.xlane.xlu0 %1597
        %v1599 = vsel %vm1372, %v1591, 0.0
        %1600 = vadd.xlane.f32.xlu0 %v1599
        %v1601 = vpop.xlane.xlu0 %1600
        %v1602 = vsel %vm1372, %v1593, 0.0
        %1603 = vadd.xlane.f32.xlu0 %v1602
        %v1604 = vpop.xlane.xlu0 %1603
        %v1605 = vsel %vm1372, %v1595, 0.0
        %1606 = vadd.xlane.f32.xlu0 %v1605
        %v1607 = vpop.xlane.xlu0 %1606
        %v1608 = vrcp.pop %v1598
        %v1609 = vrcp.pop %v1601
        %v1610 = vrcp.pop %v1604
        %v1611 = vrcp.pop %v1607
        %v1612 = vmul.f32 %v1589, %v1608
        %v1613 = vmul.f32 %v1591, %v1609
        %v1614 = vmul.f32 %v1593, %v1610
        %v1615 = vmul.f32 %v1595, %v1611
        %v1616 = vpack.c.bf16 %v1612, %v1612
        %v1617 = vpack.c.bf16 %v1613, %v1613
        %v1618 = vpack.c.bf16 %v1614, %v1614
        %v1619 = vpack.c.bf16 %v1615, %v1615
        %1620 = vxpose.xlu0.c.b16.start [1/8] %v884, 128
        %1621 = vxpose.xlu0.c.b16.cont [2/8] 0, 128
        %1622 = vxpose.xlu0.c.b16.cont [3/8] 0, 128
        %1623 = vxpose.xlu0.c.b16.cont [4/8] 0, 128
        %1624 = vxpose.xlu0.c.b16.cont [5/8] 0, 128
        %1625 = vxpose.xlu0.c.b16.cont [6/8] 0, 128
        %1626 = vxpose.xlu0.c.b16.cont [7/8] 0, 128
        %1627 = vxpose.xlu0.c.b16.end [8/8] 0, 128
        %v1628 = vpop.trf.xlu0
        %v1629 = vpop.trf.xlu0
        %v1630 = vpop.trf.xlu0
        %v1631 = vpop.trf.xlu0
        %v1632 = vpop.trf.xlu0
        %v1633 = vpop.trf.xlu0
        %v1634 = vpop.trf.xlu0
        %v1635 = vpop.trf.xlu0
        %1636 = vxpose.xlu0.c.b16.start [1/8] %v885, 128
        %1637 = vxpose.xlu0.c.b16.cont [2/8] 0, 128
        %1638 = vxpose.xlu0.c.b16.cont [3/8] 0, 128
        %1639 = vxpose.xlu0.c.b16.cont [4/8] 0, 128
        %1640 = vxpose.xlu0.c.b16.cont [5/8] 0, 128
        %1641 = vxpose.xlu0.c.b16.cont [6/8] 0, 128
        %1642 = vxpose.xlu0.c.b16.cont [7/8] 0, 128
        %1643 = vxpose.xlu0.c.b16.end [8/8] 0, 128
        %v1644 = vpop.trf.xlu0
        %v1645 = vpop.trf.xlu0
        %v1646 = vpop.trf.xlu0
        %v1647 = vpop.trf.xlu0
        %v1648 = vpop.trf.xlu0
        %v1649 = vpop.trf.xlu0
        %v1650 = vpop.trf.xlu0
        %v1651 = vpop.trf.xlu0
        %1652 = vxpose.xlu0.c.b16.start [1/8] %v886, 128
        %1653 = vxpose.xlu0.c.b16.cont [2/8] 0, 128
        %1654 = vxpose.xlu0.c.b16.cont [3/8] 0, 128
        %1655 = vxpose.xlu0.c.b16.cont [4/8] 0, 128
        %1656 = vxpose.xlu0.c.b16.cont [5/8] 0, 128
        %1657 = vxpose.xlu0.c.b16.cont [6/8] 0, 128
        %1658 = vxpose.xlu0.c.b16.cont [7/8] 0, 128
        %1659 = vxpose.xlu0.c.b16.end [8/8] 0, 128
        %v1660 = vpop.trf.xlu0
        %v1661 = vpop.trf.xlu0
        %v1662 = vpop.trf.xlu0
        %v1663 = vpop.trf.xlu0
        %v1664 = vpop.trf.xlu0
        %v1665 = vpop.trf.xlu0
        %v1666 = vpop.trf.xlu0
        %v1667 = vpop.trf.xlu0
        %1668 = vxpose.xlu0.c.b16.start [1/8] %v887, 128
        %1669 = vxpose.xlu0.c.b16.cont [2/8] 0, 128
        %1670 = vxpose.xlu0.c.b16.cont [3/8] 0, 128
        %1671 = vxpose.xlu0.c.b16.cont [4/8] 0, 128
        %1672 = vxpose.xlu0.c.b16.cont [5/8] 0, 128
        %1673 = vxpose.xlu0.c.b16.cont [6/8] 0, 128
        %1674 = vxpose.xlu0.c.b16.cont [7/8] 0, 128
        %1675 = vxpose.xlu0.c.b16.end [8/8] 0, 128
        %v1676 = vpop.trf.xlu0
        %v1677 = vpop.trf.xlu0
        %v1678 = vpop.trf.xlu0
        %v1679 = vpop.trf.xlu0
        %v1680 = vpop.trf.xlu0
        %v1681 = vpop.trf.xlu0
        %v1682 = vpop.trf.xlu0
        %v1683 = vpop.trf.xlu0
        %1684 = vxpose.xlu0.c.b16.start [1/8] %v888, 128
        %1685 = vxpose.xlu0.c.b16.cont [2/8] 0, 128
        %1686 = vxpose.xlu0.c.b16.cont [3/8] 0, 128
        %1687 = vxpose.xlu0.c.b16.cont [4/8] 0, 128
        %1688 = vxpose.xlu0.c.b16.cont [5/8] 0, 128
        %1689 = vxpose.xlu0.c.b16.cont [6/8] 0, 128
        %1690 = vxpose.xlu0.c.b16.cont [7/8] 0, 128
        %1691 = vxpose.xlu0.c.b16.end [8/8] 0, 128
        %v1692 = vpop.trf.xlu0
        %v1693 = vpop.trf.xlu0
        %v1694 = vpop.trf.xlu0
        %v1695 = vpop.trf.xlu0
        %v1696 = vpop.trf.xlu0
        %v1697 = vpop.trf.xlu0
        %v1698 = vpop.trf.xlu0
        %v1699 = vpop.trf.xlu0
        %1700 = vxpose.xlu0.c.b16.start [1/8] %v889, 128
        %1701 = vxpose.xlu0.c.b16.cont [2/8] 0, 128
        %1702 = vxpose.xlu0.c.b16.cont [3/8] 0, 128
        %1703 = vxpose.xlu0.c.b16.cont [4/8] 0, 128
        %1704 = vxpose.xlu0.c.b16.cont [5/8] 0, 128
        %1705 = vxpose.xlu0.c.b16.cont [6/8] 0, 128
        %1706 = vxpose.xlu0.c.b16.cont [7/8] 0, 128
        %1707 = vxpose.xlu0.c.b16.end [8/8] 0, 128
        %v1708 = vpop.trf.xlu0
        %v1709 = vpop.trf.xlu0
        %v1710 = vpop.trf.xlu0
        %v1711 = vpop.trf.xlu0
        %v1712 = vpop.trf.xlu0
        %v1713 = vpop.trf.xlu0
        %v1714 = vpop.trf.xlu0
        %v1715 = vpop.trf.xlu0
        %1716 = vxpose.xlu0.c.b16.start [1/8] %v890, 128
        %1717 = vxpose.xlu0.c.b16.cont [2/8] 0, 128
        %1718 = vxpose.xlu0.c.b16.cont [3/8] 0, 128
        %1719 = vxpose.xlu0.c.b16.cont [4/8] 0, 128
        %1720 = vxpose.xlu0.c.b16.cont [5/8] 0, 128
        %1721 = vxpose.xlu0.c.b16.cont [6/8] 0, 128
        %1722 = vxpose.xlu0.c.b16.cont [7/8] 0, 128
        %1723 = vxpose.xlu0.c.b16.end [8/8] 0, 128
        %v1724 = vpop.trf.xlu0
        %v1725 = vpop.trf.xlu0
        %v1726 = vpop.trf.xlu0
        %v1727 = vpop.trf.xlu0
        %v1728 = vpop.trf.xlu0
        %v1729 = vpop.trf.xlu0
        %v1730 = vpop.trf.xlu0
        %v1731 = vpop.trf.xlu0
        %1732 = vxpose.xlu0.c.b16.start [1/8] %v891, 128
        %1733 = vxpose.xlu0.c.b16.cont [2/8] 0, 128
        %1734 = vxpose.xlu0.c.b16.cont [3/8] 0, 128
        %1735 = vxpose.xlu0.c.b16.cont [4/8] 0, 128
        %1736 = vxpose.xlu0.c.b16.cont [5/8] 0, 128
        %1737 = vxpose.xlu0.c.b16.cont [6/8] 0, 128
        %1738 = vxpose.xlu0.c.b16.cont [7/8] 0, 128
        %1739 = vxpose.xlu0.c.b16.end [8/8] 0, 128
        %v1740 = vpop.trf.xlu0
        %v1741 = vpop.trf.xlu0
        %v1742 = vpop.trf.xlu0
        %v1743 = vpop.trf.xlu0
        %v1744 = vpop.trf.xlu0
        %v1745 = vpop.trf.xlu0
        %v1746 = vpop.trf.xlu0
        %v1747 = vpop.trf.xlu0
        %v1748 = vcombine.low %v1628, %v1692
        %v1750 = vunpack.c.l.s4 1983009808
        %v1751 = vunpack.c.0.s8 %v1750
        %v1752 = vlaneseq
        %v1753 = vshrl.u32 %v1752, 7
        %v1754 = vsub.s32 %v1751, %v1753
        %v1755 = vrot.slane %v1748, %v1754
        %v1756 = vcombine.low %v1660, %v1724
        %v1758 = vunpack.c.l.s4 1983009808
        %v1759 = vunpack.c.0.s8 %v1758
        %v1760 = vlaneseq
        %v1761 = vshrl.u32 %v1760, 7
        %v1762 = vsub.s32 %v1759, %v1761
        %v1763 = vrot.slane %v1756, %v1762
        %v1764 = vcombine.low %v1755, %v1763
        %v1765 = vcombine.high %v1755, %v1763
        %v1767 = vunpack.c.l.s4 1934713408
        %v1768 = vunpack.c.0.s8 %v1767
        %v1769 = vlaneseq
        %v1770 = vshrl.u32 %v1769, 7
        %v1771 = vsub.s32 %v1768, %v1770
        %v1772 = vrot.slane %v1764, %v1771
        %v1774 = vunpack.c.l.s4 1934713408
        %v1775 = vunpack.c.0.s8 %v1774
        %v1776 = vlaneseq
        %v1777 = vshrl.u32 %v1776, 7
        %v1778 = vsub.s32 %v1775, %v1777
        %v1779 = vrot.slane %v1765, %v1778
        %v1780 = vcombine.high %v1772, 0
        %v1781 = vcombine.high %v1779, 0
        %v1782 = vcombine.low %v1644, %v1708
        %v1784 = vunpack.c.l.s4 1983009808
        %v1785 = vunpack.c.0.s8 %v1784
        %v1786 = vlaneseq
        %v1787 = vshrl.u32 %v1786, 7
        %v1788 = vsub.s32 %v1785, %v1787
        %v1789 = vrot.slane %v1782, %v1788
        %v1790 = vcombine.low %v1676, %v1740
        %v1792 = vunpack.c.l.s4 1983009808
        %v1793 = vunpack.c.0.s8 %v1792
        %v1794 = vlaneseq
        %v1795 = vshrl.u32 %v1794, 7
        %v1796 = vsub.s32 %v1793, %v1795
        %v1797 = vrot.slane %v1790, %v1796
        %v1798 = vcombine.low %v1789, %v1797
        %v1799 = vcombine.high %v1789, %v1797
        %v1801 = vunpack.c.l.s4 1934713408
        %v1802 = vunpack.c.0.s8 %v1801
        %v1803 = vlaneseq
        %v1804 = vshrl.u32 %v1803, 7
        %v1805 = vsub.s32 %v1802, %v1804
        %v1806 = vrot.slane %v1798, %v1805
        %v1808 = vunpack.c.l.s4 1934713408
        %v1809 = vunpack.c.0.s8 %v1808
        %v1810 = vlaneseq
        %v1811 = vshrl.u32 %v1810, 7
        %v1812 = vsub.s32 %v1809, %v1811
        %v1813 = vrot.slane %v1799, %v1812
        %v1814 = vcombine.high %v1806, 0
        %v1815 = vcombine.high %v1813, 0
        %v1818 = vpack.i.b16 %v1806, %v1772
        %v1820 = vshrl.u32 %v1772, 16
        %v1821 = vshrl.u32 %v1806, 16
        %v1822 = vpack.i.b16 %v1821, %v1820
        %v1826 = vpack.i.b16 %v1814, %v1780
        %v1828 = vshrl.u32 %v1780, 16
        %v1829 = vshrl.u32 %v1814, 16
        %v1830 = vpack.i.b16 %v1829, %v1828
        %v1834 = vpack.i.b16 %v1813, %v1779
        %v1836 = vshrl.u32 %v1779, 16
        %v1837 = vshrl.u32 %v1813, 16
        %v1838 = vpack.i.b16 %v1837, %v1836
        %v1842 = vpack.i.b16 %v1815, %v1781
        %v1844 = vshrl.u32 %v1781, 16
        %v1845 = vshrl.u32 %v1815, 16
        %v1846 = vpack.i.b16 %v1845, %v1844
        %1848 = vxpose.xlu0.c.b16.start [1/8] %v1818, 128
        %1849 = vxpose.xlu0.c.b16.cont [2/8] 0, 128
        %1850 = vxpose.xlu0.c.b16.cont [3/8] 0, 128
        %1851 = vxpose.xlu0.c.b16.cont [4/8] 0, 128
        %1852 = vxpose.xlu0.c.b16.cont [5/8] 0, 128
        %1853 = vxpose.xlu0.c.b16.cont [6/8] 0, 128
        %1854 = vxpose.xlu0.c.b16.cont [7/8] 0, 128
        %1855 = vxpose.xlu0.c.b16.end [8/8] 0, 128
        %v1856 = vpop.trf.xlu0
        %v1857 = vpop.trf.xlu0
        %v1858 = vpop.trf.xlu0
        %v1859 = vpop.trf.xlu0
        %v1860 = vpop.trf.xlu0
        %v1861 = vpop.trf.xlu0
        %v1862 = vpop.trf.xlu0
        %v1863 = vpop.trf.xlu0
        %1864 = vxpose.xlu0.c.b16.start [1/8] %v1822, 128
        %1865 = vxpose.xlu0.c.b16.cont [2/8] 0, 128
        %1866 = vxpose.xlu0.c.b16.cont [3/8] 0, 128
        %1867 = vxpose.xlu0.c.b16.cont [4/8] 0, 128
        %1868 = vxpose.xlu0.c.b16.cont [5/8] 0, 128
        %1869 = vxpose.xlu0.c.b16.cont [6/8] 0, 128
        %1870 = vxpose.xlu0.c.b16.cont [7/8] 0, 128
        %1871 = vxpose.xlu0.c.b16.end [8/8] 0, 128
        %v1872 = vpop.trf.xlu0
        %v1873 = vpop.trf.xlu0
        %v1874 = vpop.trf.xlu0
        %v1875 = vpop.trf.xlu0
        %v1876 = vpop.trf.xlu0
        %v1877 = vpop.trf.xlu0
        %v1878 = vpop.trf.xlu0
        %v1879 = vpop.trf.xlu0
        %1880 = vxpose.xlu0.c.b16.start [1/8] %v1826, 128
        %1881 = vxpose.xlu0.c.b16.cont [2/8] 0, 128
        %1882 = vxpose.xlu0.c.b16.cont [3/8] 0, 128
        %1883 = vxpose.xlu0.c.b16.cont [4/8] 0, 128
        %1884 = vxpose.xlu0.c.b16.cont [5/8] 0, 128
        %1885 = vxpose.xlu0.c.b16.cont [6/8] 0, 128
        %1886 = vxpose.xlu0.c.b16.cont [7/8] 0, 128
        %1887 = vxpose.xlu0.c.b16.end [8/8] 0, 128
        %v1888 = vpop.trf.xlu0
        %v1889 = vpop.trf.xlu0
        %v1890 = vpop.trf.xlu0
        %v1891 = vpop.trf.xlu0
        %v1892 = vpop.trf.xlu0
        %v1893 = vpop.trf.xlu0
        %v1894 = vpop.trf.xlu0
        %v1895 = vpop.trf.xlu0
        %1896 = vxpose.xlu0.c.b16.start [1/8] %v1830, 128
        %1897 = vxpose.xlu0.c.b16.cont [2/8] 0, 128
        %1898 = vxpose.xlu0.c.b16.cont [3/8] 0, 128
        %1899 = vxpose.xlu0.c.b16.cont [4/8] 0, 128
        %1900 = vxpose.xlu0.c.b16.cont [5/8] 0, 128
        %1901 = vxpose.xlu0.c.b16.cont [6/8] 0, 128
        %1902 = vxpose.xlu0.c.b16.cont [7/8] 0, 128
        %1903 = vxpose.xlu0.c.b16.end [8/8] 0, 128
        %v1904 = vpop.trf.xlu0
        %v1905 = vpop.trf.xlu0
        %v1906 = vpop.trf.xlu0
        %v1907 = vpop.trf.xlu0
        %v1908 = vpop.trf.xlu0
        %v1909 = vpop.trf.xlu0
        %v1910 = vpop.trf.xlu0
        %v1911 = vpop.trf.xlu0
        %1912 = vxpose.xlu0.c.b16.start [1/8] %v1834, 128
        %1913 = vxpose.xlu0.c.b16.cont [2/8] 0, 128
        %1914 = vxpose.xlu0.c.b16.cont [3/8] 0, 128
        %1915 = vxpose.xlu0.c.b16.cont [4/8] 0, 128
        %1916 = vxpose.xlu0.c.b16.cont [5/8] 0, 128
        %1917 = vxpose.xlu0.c.b16.cont [6/8] 0, 128
        %1918 = vxpose.xlu0.c.b16.cont [7/8] 0, 128
        %1919 = vxpose.xlu0.c.b16.end [8/8] 0, 128
        %v1920 = vpop.trf.xlu0
        %v1921 = vpop.trf.xlu0
        %v1922 = vpop.trf.xlu0
        %v1923 = vpop.trf.xlu0
        %v1924 = vpop.trf.xlu0
        %v1925 = vpop.trf.xlu0
        %v1926 = vpop.trf.xlu0
        %v1927 = vpop.trf.xlu0
        %1928 = vxpose.xlu0.c.b16.start [1/8] %v1838, 128
        %1929 = vxpose.xlu0.c.b16.cont [2/8] 0, 128
        %1930 = vxpose.xlu0.c.b16.cont [3/8] 0, 128
        %1931 = vxpose.xlu0.c.b16.cont [4/8] 0, 128
        %1932 = vxpose.xlu0.c.b16.cont [5/8] 0, 128
        %1933 = vxpose.xlu0.c.b16.cont [6/8] 0, 128
        %1934 = vxpose.xlu0.c.b16.cont [7/8] 0, 128
        %1935 = vxpose.xlu0.c.b16.end [8/8] 0, 128
        %v1936 = vpop.trf.xlu0
        %v1937 = vpop.trf.xlu0
        %v1938 = vpop.trf.xlu0
        %v1939 = vpop.trf.xlu0
        %v1940 = vpop.trf.xlu0
        %v1941 = vpop.trf.xlu0
        %v1942 = vpop.trf.xlu0
        %v1943 = vpop.trf.xlu0
        %1944 = vxpose.xlu0.c.b16.start [1/8] %v1842, 128
        %1945 = vxpose.xlu0.c.b16.cont [2/8] 0, 128
        %1946 = vxpose.xlu0.c.b16.cont [3/8] 0, 128
        %1947 = vxpose.xlu0.c.b16.cont [4/8] 0, 128
        %1948 = vxpose.xlu0.c.b16.cont [5/8] 0, 128
        %1949 = vxpose.xlu0.c.b16.cont [6/8] 0, 128
        %1950 = vxpose.xlu0.c.b16.cont [7/8] 0, 128
        %1951 = vxpose.xlu0.c.b16.end [8/8] 0, 128
        %v1952 = vpop.trf.xlu0
        %v1953 = vpop.trf.xlu0
        %v1954 = vpop.trf.xlu0
        %v1955 = vpop.trf.xlu0
        %v1956 = vpop.trf.xlu0
        %v1957 = vpop.trf.xlu0
        %v1958 = vpop.trf.xlu0
        %v1959 = vpop.trf.xlu0
        %1960 = vxpose.xlu0.c.b16.start [1/8] %v1846, 128
        %1961 = vxpose.xlu0.c.b16.cont [2/8] 0, 128
        %1962 = vxpose.xlu0.c.b16.cont [3/8] 0, 128
        %1963 = vxpose.xlu0.c.b16.cont [4/8] 0, 128
        %1964 = vxpose.xlu0.c.b16.cont [5/8] 0, 128
        %1965 = vxpose.xlu0.c.b16.cont [6/8] 0, 128
        %1966 = vxpose.xlu0.c.b16.cont [7/8] 0, 128
        %1967 = vxpose.xlu0.c.b16.end [8/8] 0, 128
        %v1968 = vpop.trf.xlu0
        %v1969 = vpop.trf.xlu0
        %v1970 = vpop.trf.xlu0
        %v1971 = vpop.trf.xlu0
        %v1972 = vpop.trf.xlu0
        %v1973 = vpop.trf.xlu0
        %v1974 = vpop.trf.xlu0
        %v1975 = vpop.trf.xlu0
        %v1976 = vcombine.low %v1856, %v1920
        %v1978 = vunpack.c.l.s4 1983009808
        %v1979 = vunpack.c.0.s8 %v1978
        %v1980 = vlaneseq
        %v1981 = vshrl.u32 %v1980, 7
        %v1982 = vsub.s32 %v1979, %v1981
        %v1983 = vrot.slane %v1976, %v1982
        %v1984 = vcombine.low %v1888, %v1952
        %v1986 = vunpack.c.l.s4 1983009808
        %v1987 = vunpack.c.0.s8 %v1986
        %v1988 = vlaneseq
        %v1989 = vshrl.u32 %v1988, 7
        %v1990 = vsub.s32 %v1987, %v1989
        %v1991 = vrot.slane %v1984, %v1990
        %v1992 = vcombine.low %v1983, %v1991
        %v1994 = vunpack.c.l.s4 1934713408
        %v1995 = vunpack.c.0.s8 %v1994
        %v1996 = vlaneseq
        %v1997 = vshrl.u32 %v1996, 7
        %v1998 = vsub.s32 %v1995, %v1997
        %v1999 = vrot.slane %v1992, %v1998
        %v2000 = vcombine.high %v1999, 0
        %v2001 = vcombine.low %v1872, %v1936
        %v2003 = vunpack.c.l.s4 1983009808
        %v2004 = vunpack.c.0.s8 %v2003
        %v2005 = vlaneseq
        %v2006 = vshrl.u32 %v2005, 7
        %v2007 = vsub.s32 %v2004, %v2006
        %v2008 = vrot.slane %v2001, %v2007
        %v2009 = vcombine.low %v1904, %v1968
        %v2011 = vunpack.c.l.s4 1983009808
        %v2012 = vunpack.c.0.s8 %v2011
        %v2013 = vlaneseq
        %v2014 = vshrl.u32 %v2013, 7
        %v2015 = vsub.s32 %v2012, %v2014
        %v2016 = vrot.slane %v2009, %v2015
        %v2017 = vcombine.low %v2008, %v2016
        %v2019 = vunpack.c.l.s4 1934713408
        %v2020 = vunpack.c.0.s8 %v2019
        %v2021 = vlaneseq
        %v2022 = vshrl.u32 %v2021, 7
        %v2023 = vsub.s32 %v2020, %v2022
        %v2024 = vrot.slane %v2017, %v2023
        %v2025 = vcombine.high %v2024, 0
        %v2028 = vpack.i.b16 %v2024, %v1999
        %v2029 = vshrl.u32 %v1999, 16
        %v2030 = vshrl.u32 %v2024, 16
        %v2031 = vpack.i.b16 %v2030, %v2029
        %v2034 = vpack.i.b16 %v2025, %v2000
        %v2035 = vshrl.u32 %v2000, 16
        %v2036 = vshrl.u32 %v2025, 16
        %v2037 = vpack.i.b16 %v2036, %v2035
        %v2039 = vsel %vm1372, %v2028, 0
        %v2042 = vsel %vm1372, %v1616, 0
        %2044 = vmatprep.subr.bf16.mxu0 0
        %2045 = vmatpush1.bf16.xpose.msra.mxu0 %v2042
        %2046 = vmatprep.subr.bf16.mxu0 0
        %2047 = vmatpush1.bf16.xpose.msra.mxu0 0
        %2048 = vmatprep.subr.bf16.mxu0 0
        %2049 = vmatpush1.bf16.xpose.msra.mxu0 0
        %2050 = vmatprep.subr.bf16.mxu0 0
        %2051 = vmatpush1.bf16.xpose.msra.mxu0 0
        %2052 = vmatprep.subr.bf16.mxu0 0
        %2053 = vmatpush1.bf16.xpose.msra.mxu0 0
        %2054 = vmatprep.subr.bf16.mxu0 0
        %2055 = vmatpush1.bf16.xpose.msra.mxu0 0
        %2056 = vmatprep.subr.bf16.mxu0 0
        %2057 = vmatpush1.bf16.xpose.msra.mxu0 0
        %2058 = vmatprep.subr.bf16.mxu0 0
        %2059 = vmatpush1.bf16.xpose.msra.mxu0 0
        %2060 = vmatprep.subr.bf16.mxu0 0
        %2061 = vmatpush1.bf16.xpose.msra.mxu0 0
        %2062 = vmatprep.subr.bf16.mxu0 0
        %2063 = vmatpush1.bf16.xpose.msra.mxu0 0
        %2064 = vmatprep.subr.bf16.mxu0 0
        %2065 = vmatpush1.bf16.xpose.msra.mxu0 0
        %2066 = vmatprep.subr.bf16.mxu0 0
        %2067 = vmatpush1.bf16.xpose.msra.mxu0 0
        %2068 = vmatprep.subr.bf16.mxu0 0
        %2069 = vmatpush1.bf16.xpose.msra.mxu0 0
        %2070 = vmatprep.subr.bf16.mxu0 0
        %2071 = vmatpush1.bf16.xpose.msra.mxu0 0
        %2072 = vmatprep.subr.bf16.mxu0 0
        %2073 = vmatpush1.bf16.xpose.msra.mxu0 0
        %2074 = vmatprep.subr.bf16.mxu0 0
        %2075 = vmatpush1.bf16.xpose.msra.mxu0 0
        %2076 = vmatprep.mubr.bf16.mxu0 0
        %2077 = vmatmul.mubr.bf16.gmra.mrb[0].mxu0 %v2039
        %v2078 = vpop.f32.mrb[0].mxu0
        %v2079 = vadd.f32 0.0, %v2078
        %v2080 = vpop.f32.mrb[0].mxu0
        %v2081 = vpop.f32.mrb[0].mxu0
        %v2082 = vpop.f32.mrb[0].mxu0
        %2083 = vdwg.mxu0
        %v2085 = vsel %vm1372, %v2031, 0
        %v2088 = vsel %vm1372, %v1617, 0
        %2090 = vmatprep.subr.bf16.mxu0 0
        %2091 = vmatpush1.bf16.xpose.msra.mxu0 %v2088
        %2092 = vmatprep.subr.bf16.mxu0 0
        %2093 = vmatpush1.bf16.xpose.msra.mxu0 0
        %2094 = vmatprep.subr.bf16.mxu0 0
        %2095 = vmatpush1.bf16.xpose.msra.mxu0 0
        %2096 = vmatprep.subr.bf16.mxu0 0
        %2097 = vmatpush1.bf16.xpose.msra.mxu0 0
        %2098 = vmatprep.subr.bf16.mxu0 0
        %2099 = vmatpush1.bf16.xpose.msra.mxu0 0
        %2100 = vmatprep.subr.bf16.mxu0 0
        %2101 = vmatpush1.bf16.xpose.msra.mxu0 0
        %2102 = vmatprep.subr.bf16.mxu0 0
        %2103 = vmatpush1.bf16.xpose.msra.mxu0 0
        %2104 = vmatprep.subr.bf16.mxu0 0
        %2105 = vmatpush1.bf16.xpose.msra.mxu0 0
        %2106 = vmatprep.subr.bf16.mxu0 0
        %2107 = vmatpush1.bf16.xpose.msra.mxu0 0
        %2108 = vmatprep.subr.bf16.mxu0 0
        %2109 = vmatpush1.bf16.xpose.msra.mxu0 0
        %2110 = vmatprep.subr.bf16.mxu0 0
        %2111 = vmatpush1.bf16.xpose.msra.mxu0 0
        %2112 = vmatprep.subr.bf16.mxu0 0
        %2113 = vmatpush1.bf16.xpose.msra.mxu0 0
        %2114 = vmatprep.subr.bf16.mxu0 0
        %2115 = vmatpush1.bf16.xpose.msra.mxu0 0
        %2116 = vmatprep.subr.bf16.mxu0 0
        %2117 = vmatpush1.bf16.xpose.msra.mxu0 0
        %2118 = vmatprep.subr.bf16.mxu0 0
        %2119 = vmatpush1.bf16.xpose.msra.mxu0 0
        %2120 = vmatprep.subr.bf16.mxu0 0
        %2121 = vmatpush1.bf16.xpose.msra.mxu0 0
        %2122 = vmatprep.mubr.bf16.mxu0 0
        %2123 = vmatmul.mubr.bf16.gmra.mrb[0].mxu0 %v2085
        %v2124 = vpop.f32.mrb[0].mxu0
        %v2125 = vadd.f32 0.0, %v2124
        %v2126 = vpop.f32.mrb[0].mxu0
        %v2127 = vpop.f32.mrb[0].mxu0
        %v2128 = vpop.f32.mrb[0].mxu0
        %2129 = vdwg.mxu0
        %v2131 = vsel %vm1372, %v2034, 0
        %v2134 = vsel %vm1372, %v1618, 0
        %2136 = vmatprep.subr.bf16.mxu0 0
        %2137 = vmatpush1.bf16.xpose.msra.mxu0 %v2134
        %2138 = vmatprep.subr.bf16.mxu0 0
        %2139 = vmatpush1.bf16.xpose.msra.mxu0 0
        %2140 = vmatprep.subr.bf16.mxu0 0
        %2141 = vmatpush1.bf16.xpose.msra.mxu0 0
        %2142 = vmatprep.subr.bf16.mxu0 0
        %2143 = vmatpush1.bf16.xpose.msra.mxu0 0
        %2144 = vmatprep.subr.bf16.mxu0 0
        %2145 = vmatpush1.bf16.xpose.msra.mxu0 0
        %2146 = vmatprep.subr.bf16.mxu0 0
        %2147 = vmatpush1.bf16.xpose.msra.mxu0 0
        %2148 = vmatprep.subr.bf16.mxu0 0
        %2149 = vmatpush1.bf16.xpose.msra.mxu0 0
        %2150 = vmatprep.subr.bf16.mxu0 0
        %2151 = vmatpush1.bf16.xpose.msra.mxu0 0
        %2152 = vmatprep.subr.bf16.mxu0 0
        %2153 = vmatpush1.bf16.xpose.msra.mxu0 0
        %2154 = vmatprep.subr.bf16.mxu0 0
        %2155 = vmatpush1.bf16.xpose.msra.mxu0 0
        %2156 = vmatprep.subr.bf16.mxu0 0
        %2157 = vmatpush1.bf16.xpose.msra.mxu0 0
        %2158 = vmatprep.subr.bf16.mxu0 0
        %2159 = vmatpush1.bf16.xpose.msra.mxu0 0
        %2160 = vmatprep.subr.bf16.mxu0 0
        %2161 = vmatpush1.bf16.xpose.msra.mxu0 0
        %2162 = vmatprep.subr.bf16.mxu0 0
        %2163 = vmatpush1.bf16.xpose.msra.mxu0 0
        %2164 = vmatprep.subr.bf16.mxu0 0
        %2165 = vmatpush1.bf16.xpose.msra.mxu0 0
        %2166 = vmatprep.subr.bf16.mxu0 0
        %2167 = vmatpush1.bf16.xpose.msra.mxu0 0
        %2168 = vmatprep.mubr.bf16.mxu0 0
        %2169 = vmatmul.mubr.bf16.gmra.mrb[0].mxu0 %v2131
        %v2170 = vpop.f32.mrb[0].mxu0
        %v2171 = vadd.f32 0.0, %v2170
        %v2172 = vpop.f32.mrb[0].mxu0
        %v2173 = vpop.f32.mrb[0].mxu0
        %v2174 = vpop.f32.mrb[0].mxu0
        %2175 = vdwg.mxu0
        %v2177 = vsel %vm1372, %v2037, 0
        %v2180 = vsel %vm1372, %v1619, 0
        %2182 = vmatprep.subr.bf16.mxu0 0
        %2183 = vmatpush1.bf16.xpose.msra.mxu0 %v2180
        %2184 = vmatprep.subr.bf16.mxu0 0
        %2185 = vmatpush1.bf16.xpose.msra.mxu0 0
        %2186 = vmatprep.subr.bf16.mxu0 0
        %2187 = vmatpush1.bf16.xpose.msra.mxu0 0
        %2188 = vmatprep.subr.bf16.mxu0 0
        %2189 = vmatpush1.bf16.xpose.msra.mxu0 0
        %2190 = vmatprep.subr.bf16.mxu0 0
        %2191 = vmatpush1.bf16.xpose.msra.mxu0 0
        %2192 = vmatprep.subr.bf16.mxu0 0
        %2193 = vmatpush1.bf16.xpose.msra.mxu0 0
        %2194 = vmatprep.subr.bf16.mxu0 0
        %2195 = vmatpush1.bf16.xpose.msra.mxu0 0
        %2196 = vmatprep.subr.bf16.mxu0 0
        %2197 = vmatpush1.bf16.xpose.msra.mxu0 0
        %2198 = vmatprep.subr.bf16.mxu0 0
        %2199 = vmatpush1.bf16.xpose.msra.mxu0 0
        %2200 = vmatprep.subr.bf16.mxu0 0
        %2201 = vmatpush1.bf16.xpose.msra.mxu0 0
        %2202 = vmatprep.subr.bf16.mxu0 0
        %2203 = vmatpush1.bf16.xpose.msra.mxu0 0
        %2204 = vmatprep.subr.bf16.mxu0 0
        %2205 = vmatpush1.bf16.xpose.msra.mxu0 0
        %2206 = vmatprep.subr.bf16.mxu0 0
        %2207 = vmatpush1.bf16.xpose.msra.mxu0 0
        %2208 = vmatprep.subr.bf16.mxu0 0
        %2209 = vmatpush1.bf16.xpose.msra.mxu0 0
        %2210 = vmatprep.subr.bf16.mxu0 0
        %2211 = vmatpush1.bf16.xpose.msra.mxu0 0
        %2212 = vmatprep.subr.bf16.mxu0 0
        %2213 = vmatpush1.bf16.xpose.msra.mxu0 0
        %2214 = vmatprep.mubr.bf16.mxu0 0
        %2215 = vmatmul.mubr.bf16.gmra.mrb[0].mxu0 %v2177
        %v2216 = vpop.f32.mrb[0].mxu0
        %v2217 = vadd.f32 0.0, %v2216
        %v2218 = vpop.f32.mrb[0].mxu0
        %v2219 = vpop.f32.mrb[0].mxu0
        %v2220 = vpop.f32.mrb[0].mxu0
        %2221 = vdwg.mxu0
        %2222 = vxpose.xlu0.b32.start [1/16] %v2079, 128
        %2223 = vxpose.xlu0.b32.cont [2/16] 0.0, 128
        %2224 = vxpose.xlu0.b32.cont [3/16] 0.0, 128
        %2225 = vxpose.xlu0.b32.cont [4/16] 0.0, 128
        %2226 = vxpose.xlu0.b32.cont [5/16] 0.0, 128
        %2227 = vxpose.xlu0.b32.cont [6/16] 0.0, 128
        %2228 = vxpose.xlu0.b32.cont [7/16] 0.0, 128
        %2229 = vxpose.xlu0.b32.cont [8/16] 0.0, 128
        %2230 = vxpose.xlu0.b32.cont [9/16] 0.0, 128
        %2231 = vxpose.xlu0.b32.cont [10/16] 0.0, 128
        %2232 = vxpose.xlu0.b32.cont [11/16] 0.0, 128
        %2233 = vxpose.xlu0.b32.cont [12/16] 0.0, 128
        %2234 = vxpose.xlu0.b32.cont [13/16] 0.0, 128
        %2235 = vxpose.xlu0.b32.cont [14/16] 0.0, 128
        %2236 = vxpose.xlu0.b32.cont [15/16] 0.0, 128
        %2237 = vxpose.xlu0.b32.end [16/16] 0.0, 128
        %v2238 = vpop.trf.xlu0
        %v2239 = vpop.trf.xlu0
        %v2240 = vpop.trf.xlu0
        %v2241 = vpop.trf.xlu0
        %v2242 = vpop.trf.xlu0
        %v2243 = vpop.trf.xlu0
        %v2244 = vpop.trf.xlu0
        %v2245 = vpop.trf.xlu0
        %v2246 = vpop.trf.xlu0
        %v2247 = vpop.trf.xlu0
        %v2248 = vpop.trf.xlu0
        %v2249 = vpop.trf.xlu0
        %v2250 = vpop.trf.xlu0
        %v2251 = vpop.trf.xlu0
        %v2252 = vpop.trf.xlu0
        %v2253 = vpop.trf.xlu0
        %2254 = vxpose.xlu0.b32.start [1/16] %v2125, 128
        %2255 = vxpose.xlu0.b32.cont [2/16] 0.0, 128
        %2256 = vxpose.xlu0.b32.cont [3/16] 0.0, 128
        %2257 = vxpose.xlu0.b32.cont [4/16] 0.0, 128
        %2258 = vxpose.xlu0.b32.cont [5/16] 0.0, 128
        %2259 = vxpose.xlu0.b32.cont [6/16] 0.0, 128
        %2260 = vxpose.xlu0.b32.cont [7/16] 0.0, 128
        %2261 = vxpose.xlu0.b32.cont [8/16] 0.0, 128
        %2262 = vxpose.xlu0.b32.cont [9/16] 0.0, 128
        %2263 = vxpose.xlu0.b32.cont [10/16] 0.0, 128
        %2264 = vxpose.xlu0.b32.cont [11/16] 0.0, 128
        %2265 = vxpose.xlu0.b32.cont [12/16] 0.0, 128
        %2266 = vxpose.xlu0.b32.cont [13/16] 0.0, 128
        %2267 = vxpose.xlu0.b32.cont [14/16] 0.0, 128
        %2268 = vxpose.xlu0.b32.cont [15/16] 0.0, 128
        %2269 = vxpose.xlu0.b32.end [16/16] 0.0, 128
        %v2270 = vpop.trf.xlu0
        %v2271 = vpop.trf.xlu0
        %v2272 = vpop.trf.xlu0
        %v2273 = vpop.trf.xlu0
        %v2274 = vpop.trf.xlu0
        %v2275 = vpop.trf.xlu0
        %v2276 = vpop.trf.xlu0
        %v2277 = vpop.trf.xlu0
        %v2278 = vpop.trf.xlu0
        %v2279 = vpop.trf.xlu0
        %v2280 = vpop.trf.xlu0
        %v2281 = vpop.trf.xlu0
        %v2282 = vpop.trf.xlu0
        %v2283 = vpop.trf.xlu0
        %v2284 = vpop.trf.xlu0
        %v2285 = vpop.trf.xlu0
        %2286 = vxpose.xlu0.b32.start [1/16] %v2171, 128
        %2287 = vxpose.xlu0.b32.cont [2/16] 0.0, 128
        %2288 = vxpose.xlu0.b32.cont [3/16] 0.0, 128
        %2289 = vxpose.xlu0.b32.cont [4/16] 0.0, 128
        %2290 = vxpose.xlu0.b32.cont [5/16] 0.0, 128
        %2291 = vxpose.xlu0.b32.cont [6/16] 0.0, 128
        %2292 = vxpose.xlu0.b32.cont [7/16] 0.0, 128
        %2293 = vxpose.xlu0.b32.cont [8/16] 0.0, 128
        %2294 = vxpose.xlu0.b32.cont [9/16] 0.0, 128
        %2295 = vxpose.xlu0.b32.cont [10/16] 0.0, 128
        %2296 = vxpose.xlu0.b32.cont [11/16] 0.0, 128
        %2297 = vxpose.xlu0.b32.cont [12/16] 0.0, 128
        %2298 = vxpose.xlu0.b32.cont [13/16] 0.0, 128
        %2299 = vxpose.xlu0.b32.cont [14/16] 0.0, 128
        %2300 = vxpose.xlu0.b32.cont [15/16] 0.0, 128
        %2301 = vxpose.xlu0.b32.end [16/16] 0.0, 128
        %v2302 = vpop.trf.xlu0
        %v2303 = vpop.trf.xlu0
        %v2304 = vpop.trf.xlu0
        %v2305 = vpop.trf.xlu0
        %v2306 = vpop.trf.xlu0
        %v2307 = vpop.trf.xlu0
        %v2308 = vpop.trf.xlu0
        %v2309 = vpop.trf.xlu0
        %v2310 = vpop.trf.xlu0
        %v2311 = vpop.trf.xlu0
        %v2312 = vpop.trf.xlu0
        %v2313 = vpop.trf.xlu0
        %v2314 = vpop.trf.xlu0
        %v2315 = vpop.trf.xlu0
        %v2316 = vpop.trf.xlu0
        %v2317 = vpop.trf.xlu0
        %2318 = vxpose.xlu0.b32.start [1/16] %v2217, 128
        %2319 = vxpose.xlu0.b32.cont [2/16] 0.0, 128
        %2320 = vxpose.xlu0.b32.cont [3/16] 0.0, 128
        %2321 = vxpose.xlu0.b32.cont [4/16] 0.0, 128
        %2322 = vxpose.xlu0.b32.cont [5/16] 0.0, 128
        %2323 = vxpose.xlu0.b32.cont [6/16] 0.0, 128
        %2324 = vxpose.xlu0.b32.cont [7/16] 0.0, 128
        %2325 = vxpose.xlu0.b32.cont [8/16] 0.0, 128
        %2326 = vxpose.xlu0.b32.cont [9/16] 0.0, 128
        %2327 = vxpose.xlu0.b32.cont [10/16] 0.0, 128
        %2328 = vxpose.xlu0.b32.cont [11/16] 0.0, 128
        %2329 = vxpose.xlu0.b32.cont [12/16] 0.0, 128
        %2330 = vxpose.xlu0.b32.cont [13/16] 0.0, 128
        %2331 = vxpose.xlu0.b32.cont [14/16] 0.0, 128
        %2332 = vxpose.xlu0.b32.cont [15/16] 0.0, 128
        %2333 = vxpose.xlu0.b32.end [16/16] 0.0, 128
        %v2334 = vpop.trf.xlu0
        %v2335 = vpop.trf.xlu0
        %v2336 = vpop.trf.xlu0
        %v2337 = vpop.trf.xlu0
        %v2338 = vpop.trf.xlu0
        %v2339 = vpop.trf.xlu0
        %v2340 = vpop.trf.xlu0
        %v2341 = vpop.trf.xlu0
        %v2342 = vpop.trf.xlu0
        %v2343 = vpop.trf.xlu0
        %v2344 = vpop.trf.xlu0
        %v2345 = vpop.trf.xlu0
        %v2346 = vpop.trf.xlu0
        %v2347 = vpop.trf.xlu0
        %v2348 = vpop.trf.xlu0
        %v2349 = vpop.trf.xlu0
        %v2350 = vcombine.low %v2238, %v2302
        %v2351 = vcombine.high %v2238, %v2302
        %v2353 = vunpack.c.l.s4 1983009808
        %v2354 = vunpack.c.0.s8 %v2353
        %v2355 = vlaneseq
        %v2356 = vshrl.u32 %v2355, 7
        %v2357 = vsub.s32 %v2354, %v2356
        %v2358 = vrot.slane %v2350, %v2357
        %v2360 = vunpack.c.l.s4 1983009808
        %v2361 = vunpack.c.0.s8 %v2360
        %v2362 = vlaneseq
        %v2363 = vshrl.u32 %v2362, 7
        %v2364 = vsub.s32 %v2361, %v2363
        %v2365 = vrot.slane %v2351, %v2364
        %v2366 = vcombine.low %v2270, %v2334
        %v2367 = vcombine.high %v2270, %v2334
        %v2369 = vunpack.c.l.s4 1983009808
        %v2370 = vunpack.c.0.s8 %v2369
        %v2371 = vlaneseq
        %v2372 = vshrl.u32 %v2371, 7
        %v2373 = vsub.s32 %v2370, %v2372
        %v2374 = vrot.slane %v2366, %v2373
        %v2376 = vunpack.c.l.s4 1983009808
        %v2377 = vunpack.c.0.s8 %v2376
        %v2378 = vlaneseq
        %v2379 = vshrl.u32 %v2378, 7
        %v2380 = vsub.s32 %v2377, %v2379
        %v2381 = vrot.slane %v2367, %v2380
        %v2382 = vcombine.low %v2358, %v2374
        %v2383 = vcombine.high %v2358, %v2374
        %v2385 = vunpack.c.l.s4 1934713408
        %v2386 = vunpack.c.0.s8 %v2385
        %v2387 = vlaneseq
        %v2388 = vshrl.u32 %v2387, 7
        %v2389 = vsub.s32 %v2386, %v2388
        %v2390 = vrot.slane %v2382, %v2389
        %v2392 = vunpack.c.l.s4 1934713408
        %v2393 = vunpack.c.0.s8 %v2392
        %v2394 = vlaneseq
        %v2395 = vshrl.u32 %v2394, 7
        %v2396 = vsub.s32 %v2393, %v2395
        %v2397 = vrot.slane %v2383, %v2396
        %v2398 = vcombine.low %v2365, %v2381
        %v2399 = vcombine.high %v2365, %v2381
        %v2401 = vunpack.c.l.s4 1934713408
        %v2402 = vunpack.c.0.s8 %v2401
        %v2403 = vlaneseq
        %v2404 = vshrl.u32 %v2403, 7
        %v2405 = vsub.s32 %v2402, %v2404
        %v2406 = vrot.slane %v2398, %v2405
        %v2408 = vunpack.c.l.s4 1934713408
        %v2409 = vunpack.c.0.s8 %v2408
        %v2410 = vlaneseq
        %v2411 = vshrl.u32 %v2410, 7
        %v2412 = vsub.s32 %v2409, %v2411
        %v2413 = vrot.slane %v2399, %v2412
        %v2414 = vcombine.high %v2390, 0.0
        %v2415 = vcombine.high %v2397, 0.0
        %v2416 = vcombine.high %v2406, 0.0
        %v2417 = vcombine.high %v2413, 0.0
        %v2418 = vcombine.low %v2390, %v2397
        %v2420 = vunpack.c.l.s4 1983009808
        %v2421 = vunpack.c.0.s8 %v2420
        %v2422 = vlaneseq
        %v2423 = vshrl.u32 %v2422, 7
        %v2424 = vsub.s32 %v2421, %v2423
        %v2425 = vrot.slane %v2418, %v2424
        %v2426 = vcombine.low %v2414, %v2415
        %v2428 = vunpack.c.l.s4 1983009808
        %v2429 = vunpack.c.0.s8 %v2428
        %v2430 = vlaneseq
        %v2431 = vshrl.u32 %v2430, 7
        %v2432 = vsub.s32 %v2429, %v2431
        %v2433 = vrot.slane %v2426, %v2432
        %v2434 = vcombine.low %v2406, %v2413
        %v2436 = vunpack.c.l.s4 1983009808
        %v2437 = vunpack.c.0.s8 %v2436
        %v2438 = vlaneseq
        %v2439 = vshrl.u32 %v2438, 7
        %v2440 = vsub.s32 %v2437, %v2439
        %v2441 = vrot.slane %v2434, %v2440
        %v2442 = vcombine.low %v2416, %v2417
        %v2444 = vunpack.c.l.s4 1983009808
        %v2445 = vunpack.c.0.s8 %v2444
        %v2446 = vlaneseq
        %v2447 = vshrl.u32 %v2446, 7
        %v2448 = vsub.s32 %v2445, %v2447
        %v2449 = vrot.slane %v2442, %v2448
        %v2450 = vcombine.low %v2425, %v2433
        %v2451 = vcombine.high %v2425, %v2433
        %v2453 = vunpack.c.l.s4 1934713408
        %v2454 = vunpack.c.0.s8 %v2453
        %v2455 = vlaneseq
        %v2456 = vshrl.u32 %v2455, 7
        %v2457 = vsub.s32 %v2454, %v2456
        %v2458 = vrot.slane %v2450, %v2457
        %v2460 = vunpack.c.l.s4 1934713408
        %v2461 = vunpack.c.0.s8 %v2460
        %v2462 = vlaneseq
        %v2463 = vshrl.u32 %v2462, 7
        %v2464 = vsub.s32 %v2461, %v2463
        %v2465 = vrot.slane %v2451, %v2464
        %v2466 = vcombine.low %v2441, %v2449
        %v2467 = vcombine.high %v2441, %v2449
        %v2469 = vunpack.c.l.s4 1934713408
        %v2470 = vunpack.c.0.s8 %v2469
        %v2471 = vlaneseq
        %v2472 = vshrl.u32 %v2471, 7
        %v2473 = vsub.s32 %v2470, %v2472
        %v2474 = vrot.slane %v2466, %v2473
        %v2476 = vunpack.c.l.s4 1934713408
        %v2477 = vunpack.c.0.s8 %v2476
        %v2478 = vlaneseq
        %v2479 = vshrl.u32 %v2478, 7
        %v2480 = vsub.s32 %v2477, %v2479
        %v2481 = vrot.slane %v2467, %v2480
        %v2482 = vcombine.low %v2458, %v2474
        %v2483 = vcombine.high %v2458, %v2474
        %v2484 = vcombine.low %v2465, %v2481
        %v2485 = vcombine.high %v2465, %v2481
        %2487 = vrot.lane.b32.xlu0 %v2483, 8
        %v2488 = vpop.permute.xlu0 %2487
        %2491 = vrot.lane.b32.xlu0 %v2484, 16
        %v2492 = vpop.permute.xlu0 %2491
        %2495 = vrot.lane.b32.xlu0 %v2485, 24
        %v2496 = vpop.permute.xlu0 %2495
        %v2498 = vsel %vm1372, %v2482, %v2488
        %vm2499 = vcmask 130048
        %v2500 = vsel %vm2499, %v2498, %v2492
        %vm2501 = vcmask 195584
        %v2502 = vsel %vm2501, %v2500, %v2496
        %v2503 = vpack.c.bf16 %v2502, %v2502
        %v2505 = vlaneseq
        %v2506 = vshrl.u32 %v2505, 7
        %v2507 = vsub.s32 0, %v2506
        %v2508 = vrot.slane %v548, %v2507
        %v2514 = vunpack.c.l.b16 %v544
        %v2515 = vunpack.c.l.b16 %v545
        %v2516 = vunpack.c.l.b16 %v546
        %v2517 = vunpack.c.l.b16 %v547
        %v2518 = vpack.c.b16 %v2515, %v2514
        %v2519 = vpack.c.b16 %v2517, %v2516
        %v2523 = vsel %vm586, %v2503, 0
        %2525 = vmatprep.subr.bf16.mxu0 0
        %2526 = vmatpush1.bf16.msra.mxu0 %v2518
        %2527 = vmatprep.subr.bf16.mxu0 0
        %2528 = vmatpush1.bf16.msra.mxu0 %v2519
        %2529 = vmatprep.subr.bf16.mxu0 0
        %2530 = vmatpush1.bf16.msra.mxu0 0
        %2531 = vmatprep.subr.bf16.mxu0 0
        %2532 = vmatpush1.bf16.msra.mxu0 0
        %2533 = vmatprep.subr.bf16.mxu0 0
        %2534 = vmatpush1.bf16.msra.mxu0 0
        %2535 = vmatprep.subr.bf16.mxu0 0
        %2536 = vmatpush1.bf16.msra.mxu0 0
        %2537 = vmatprep.subr.bf16.mxu0 0
        %2538 = vmatpush1.bf16.msra.mxu0 0
        %2539 = vmatprep.subr.bf16.mxu0 0
        %2540 = vmatpush1.bf16.msra.mxu0 0
        %2541 = vmatprep.subr.bf16.mxu0 0
        %2542 = vmatpush1.bf16.msra.mxu0 0
        %2543 = vmatprep.subr.bf16.mxu0 0
        %2544 = vmatpush1.bf16.msra.mxu0 0
        %2545 = vmatprep.subr.bf16.mxu0 0
        %2546 = vmatpush1.bf16.msra.mxu0 0
        %2547 = vmatprep.subr.bf16.mxu0 0
        %2548 = vmatpush1.bf16.msra.mxu0 0
        %2549 = vmatprep.subr.bf16.mxu0 0
        %2550 = vmatpush1.bf16.msra.mxu0 0
        %2551 = vmatprep.subr.bf16.mxu0 0
        %2552 = vmatpush1.bf16.msra.mxu0 0
        %2553 = vmatprep.subr.bf16.mxu0 0
        %2554 = vmatpush1.bf16.msra.mxu0 0
        %2555 = vmatprep.subr.bf16.mxu0 0
        %2556 = vmatpush1.bf16.msra.mxu0 0
        %2557 = vmatprep.mubr.bf16.mxu0 0
        %2558 = vmatmul.mubr.bf16.gmra.mrb[0].mxu0 %v2523
        %v2559 = vpop.f32.mrb[0].mxu0
        %v2560 = vadd.f32 %v2508, %v2559
        %v2561 = vpop.f32.mrb[0].mxu0
        %v2562 = vpop.f32.mrb[0].mxu0
        %v2563 = vpop.f32.mrb[0].mxu0
        %2564 = vdwg.mxu0
        %v2565 = vadd.f32 %v536, %v2560
        %v2566 = vsel %vm586, %v2565, 0.0
        %2567 = vadd.xlane.f32.xlu0 %v2566
        %v2568 = vpop.xlane.xlu0 %2567
        %v2569 = vrcp.pop 32.0
        %v2570 = vmul.f32 %v2568, %v2569
        %v2571 = vsub.f32 %v2565, %v2570
        %v2572 = vmul.f32 %v2571, %v2571
        %v2573 = vsel %vm586, %v2572, 0.0
        %2574 = vadd.xlane.f32.xlu0 %v2573
        %v2575 = vpop.xlane.xlu0 %2574
        %v2576 = vmul.f32 %v2575, %v2569
        %v2577 = vadd.f32 %v2576, 1e-05
        %v2578 = vrsqrt.pop %v2577
        %v2579 = vmul.f32 %v2571, %v2578
        %v2581 = vlaneseq
        %v2582 = vshrl.u32 %v2581, 7
        %v2583 = vsub.s32 0, %v2582
        %v2584 = vrot.slane %v563, %v2583
        %v2586 = vmul.f32 %v2579, %v2584
        %v2588 = vlaneseq
        %v2589 = vshrl.u32 %v2588, 7
        %v2590 = vsub.s32 0, %v2589
        %v2591 = vrot.slane %v564, %v2590
        %v2593 = vadd.f32 %v2586, %v2591
        %v2594 = vpack.c.bf16 %v2593, %v2593
        %v2596 = vlaneseq
        %v2597 = vshrl.u32 %v2596, 7
        %v2598 = vsub.s32 0, %v2597
        %v2599 = vrot.slane %v553, %v2598
        %v2605 = vunpack.c.l.b16 %v549
        %v2606 = vunpack.c.l.b16 %v550
        %v2607 = vunpack.c.l.b16 %v551
        %v2608 = vunpack.c.l.b16 %v552
        %v2609 = vpack.c.b16 %v2606, %v2605
        %v2610 = vpack.c.b16 %v2608, %v2607
        %v2614 = vsel %vm586, %v2594, 0
        %2616 = vmatprep.subr.bf16.mxu0 0
        %2617 = vmatpush1.bf16.msra.mxu0 %v2609
        %2618 = vmatprep.subr.bf16.mxu0 0
        %2619 = vmatpush1.bf16.msra.mxu0 %v2610
        %2620 = vmatprep.subr.bf16.mxu0 0
        %2621 = vmatpush1.bf16.msra.mxu0 0
        %2622 = vmatprep.subr.bf16.mxu0 0
        %2623 = vmatpush1.bf16.msra.mxu0 0
        %2624 = vmatprep.subr.bf16.mxu0 0
        %2625 = vmatpush1.bf16.msra.mxu0 0
        %2626 = vmatprep.subr.bf16.mxu0 0
        %2627 = vmatpush1.bf16.msra.mxu0 0
        %2628 = vmatprep.subr.bf16.mxu0 0
        %2629 = vmatpush1.bf16.msra.mxu0 0
        %2630 = vmatprep.subr.bf16.mxu0 0
        %2631 = vmatpush1.bf16.msra.mxu0 0
        %2632 = vmatprep.subr.bf16.mxu0 0
        %2633 = vmatpush1.bf16.msra.mxu0 0
        %2634 = vmatprep.subr.bf16.mxu0 0
        %2635 = vmatpush1.bf16.msra.mxu0 0
        %2636 = vmatprep.subr.bf16.mxu0 0
        %2637 = vmatpush1.bf16.msra.mxu0 0
        %2638 = vmatprep.subr.bf16.mxu0 0
        %2639 = vmatpush1.bf16.msra.mxu0 0
        %2640 = vmatprep.subr.bf16.mxu0 0
        %2641 = vmatpush1.bf16.msra.mxu0 0
        %2642 = vmatprep.subr.bf16.mxu0 0
        %2643 = vmatpush1.bf16.msra.mxu0 0
        %2644 = vmatprep.subr.bf16.mxu0 0
        %2645 = vmatpush1.bf16.msra.mxu0 0
        %2646 = vmatprep.subr.bf16.mxu0 0
        %2647 = vmatpush1.bf16.msra.mxu0 0
        %2648 = vmatprep.mubr.bf16.mxu0 0
        %2649 = vmatmul.mubr.bf16.gmra.mrb[0].mxu0 %v2614
        %v2650 = vpop.f32.mrb[0].mxu0
        %v2651 = vadd.f32 %v2599, %v2650
        %v2652 = vpop.f32.mrb[0].mxu0
        %v2653 = vpop.f32.mrb[0].mxu0
        %v2654 = vpop.f32.mrb[0].mxu0
        %2655 = vdwg.mxu0
        %v2656 = vmax.f32 %v2651, 0.0
        %v2657 = vpack.c.bf16 %v2656, %v2656
        %v2659 = vlaneseq
        %v2660 = vshrl.u32 %v2659, 7
        %v2661 = vsub.s32 0, %v2660
        %v2662 = vrot.slane %v562, %v2661
        %v2672 = vunpack.c.l.b16 %v554
        %v2673 = vunpack.c.l.b16 %v555
        %v2674 = vunpack.c.l.b16 %v556
        %v2675 = vunpack.c.l.b16 %v557
        %v2676 = vunpack.c.l.b16 %v558
        %v2677 = vunpack.c.l.b16 %v559
        %v2678 = vunpack.c.l.b16 %v560
        %v2679 = vunpack.c.l.b16 %v561
        %v2680 = vpack.c.b16 %v2673, %v2672
        %v2681 = vpack.c.b16 %v2675, %v2674
        %v2682 = vpack.c.b16 %v2677, %v2676
        %v2683 = vpack.c.b16 %v2679, %v2678
        %vm2688 = vcmask 523264
        %v2690 = vsel %vm2688, %v2657, 0
        %2692 = vmatprep.subr.bf16.mxu0 0
        %2693 = vmatpush1.bf16.msra.mxu0 %v2680
        %2694 = vmatprep.subr.bf16.mxu0 0
        %2695 = vmatpush1.bf16.msra.mxu0 %v2681
        %2696 = vmatprep.subr.bf16.mxu0 0
        %2697 = vmatpush1.bf16.msra.mxu0 %v2682
        %2698 = vmatprep.subr.bf16.mxu0 0
        %2699 = vmatpush1.bf16.msra.mxu0 %v2683
        %2700 = vmatprep.subr.bf16.mxu0 0
        %2701 = vmatpush1.bf16.msra.mxu0 0
        %2702 = vmatprep.subr.bf16.mxu0 0
        %2703 = vmatpush1.bf16.msra.mxu0 0
        %2704 = vmatprep.subr.bf16.mxu0 0
        %2705 = vmatpush1.bf16.msra.mxu0 0
        %2706 = vmatprep.subr.bf16.mxu0 0
        %2707 = vmatpush1.bf16.msra.mxu0 0
        %2708 = vmatprep.subr.bf16.mxu0 0
        %2709 = vmatpush1.bf16.msra.mxu0 0
        %2710 = vmatprep.subr.bf16.mxu0 0
        %2711 = vmatpush1.bf16.msra.mxu0 0
        %2712 = vmatprep.subr.bf16.mxu0 0
        %2713 = vmatpush1.bf16.msra.mxu0 0
        %2714 = vmatprep.subr.bf16.mxu0 0
        %2715 = vmatpush1.bf16.msra.mxu0 0
        %2716 = vmatprep.subr.bf16.mxu0 0
        %2717 = vmatpush1.bf16.msra.mxu0 0
        %2718 = vmatprep.subr.bf16.mxu0 0
        %2719 = vmatpush1.bf16.msra.mxu0 0
        %2720 = vmatprep.subr.bf16.mxu0 0
        %2721 = vmatpush1.bf16.msra.mxu0 0
        %2722 = vmatprep.subr.bf16.mxu0 0
        %2723 = vmatpush1.bf16.msra.mxu0 0
        %2724 = vmatprep.mubr.bf16.mxu0 0
        %2725 = vmatmul.mubr.bf16.gmra.mrb[0].mxu0 %v2690
        %v2726 = vpop.f32.mrb[0].mxu0
        %v2727 = vadd.f32 %v2662, %v2726
        %v2728 = vpop.f32.mrb[0].mxu0
        %v2729 = vpop.f32.mrb[0].mxu0
        %v2730 = vpop.f32.mrb[0].mxu0
        %2731 = vdwg.mxu0
        %v2732 = vadd.f32 %v2593, %v2727
        %v2733 = vsel %vm586, %v2732, 0.0
        %2734 = vadd.xlane.f32.xlu0 %v2733
        %v2735 = vpop.xlane.xlu0 %2734
        %v2736 = vmul.f32 %v2735, %v2569
        %v2737 = vsub.f32 %v2732, %v2736
        %v2738 = vmul.f32 %v2737, %v2737
        %v2739 = vsel %vm586, %v2738, 0.0
        %2740 = vadd.xlane.f32.xlu0 %v2739
        %v2741 = vpop.xlane.xlu0 %2740
        %v2742 = vmul.f32 %v2741, %v2569
        %v2743 = vadd.f32 %v2742, 1e-05
        %v2744 = vrsqrt.pop %v2743
        %v2745 = vmul.f32 %v2737, %v2744
        %v2747 = vlaneseq
        %v2748 = vshrl.u32 %v2747, 7
        %v2749 = vsub.s32 0, %v2748
        %v2750 = vrot.slane %v565, %v2749
        %v2752 = vmul.f32 %v2745, %v2750
        %v2754 = vlaneseq
        %v2755 = vshrl.u32 %v2754, 7
        %v2756 = vsub.s32 0, %v2755
        %v2757 = vrot.slane %v566, %v2756
        %v2759 = vadd.f32 %v2752, %v2757
        %v2760 = vpack.c.bf16 %v2759, %v2759
        %v2762 = vsel %vm586, %v2760, 0
        %2764 = vmatprep.subr.bf16.mxu0 0
        %2765 = vmatpush1.bf16.msra.mxu0 %v582
        %2766 = vmatprep.subr.bf16.mxu0 0
        %2767 = vmatpush1.bf16.msra.mxu0 %v583
        %2768 = vmatprep.subr.bf16.mxu0 0
        %2769 = vmatpush1.bf16.msra.mxu0 0
        %2770 = vmatprep.subr.bf16.mxu0 0
        %2771 = vmatpush1.bf16.msra.mxu0 0
        %2772 = vmatprep.subr.bf16.mxu0 0
        %2773 = vmatpush1.bf16.msra.mxu0 0
        %2774 = vmatprep.subr.bf16.mxu0 0
        %2775 = vmatpush1.bf16.msra.mxu0 0
        %2776 = vmatprep.subr.bf16.mxu0 0
        %2777 = vmatpush1.bf16.msra.mxu0 0
        %2778 = vmatprep.subr.bf16.mxu0 0
        %2779 = vmatpush1.bf16.msra.mxu0 0
        %2780 = vmatprep.subr.bf16.mxu0 0
        %2781 = vmatpush1.bf16.msra.mxu0 0
        %2782 = vmatprep.subr.bf16.mxu0 0
        %2783 = vmatpush1.bf16.msra.mxu0 0
        %2784 = vmatprep.subr.bf16.mxu0 0
        %2785 = vmatpush1.bf16.msra.mxu0 0
        %2786 = vmatprep.subr.bf16.mxu0 0
        %2787 = vmatpush1.bf16.msra.mxu0 0
        %2788 = vmatprep.subr.bf16.mxu0 0
        %2789 = vmatpush1.bf16.msra.mxu0 0
        %2790 = vmatprep.subr.bf16.mxu0 0
        %2791 = vmatpush1.bf16.msra.mxu0 0
        %2792 = vmatprep.subr.bf16.mxu0 0
        %2793 = vmatpush1.bf16.msra.mxu0 0
        %2794 = vmatprep.subr.bf16.mxu0 0
        %2795 = vmatpush1.bf16.msra.mxu0 0
        %2796 = vmatprep.mubr.bf16.mxu0 0
        %2797 = vmatmul.mubr.bf16.gmra.mrb[0].mxu0 %v2762
        %v2798 = vpop.f32.mrb[0].mxu0
        %v2799 = vadd.f32 %v572, %v2798
        %v2800 = vpop.f32.mrb[0].mxu0
        %v2801 = vpop.f32.mrb[0].mxu0
        %v2802 = vpop.f32.mrb[0].mxu0
        %2803 = vdwg.mxu0
        %2805 = vrot.lane.b32.xlu0 %v2799, 120
        %v2806 = vpop.permute.xlu0 %2805
        %2808 = vrot.lane.b32.xlu0 %v2799, 112
        %v2809 = vpop.permute.xlu0 %2808
        %2811 = vrot.lane.b32.xlu0 %v2799, 104
        %v2812 = vpop.permute.xlu0 %2811
        %v2814 = vcombine.low %v2799, %v2809
        %v2815 = vcombine.high %v2799, %v2809
        %v2817 = vunpack.c.l.s4 1983009808
        %v2818 = vunpack.c.0.s8 %v2817
        %v2819 = vlaneseq
        %v2820 = vshrl.u32 %v2819, 7
        %v2821 = vsub.s32 %v2818, %v2820
        %v2822 = vrot.slane %v2814, %v2821
        %v2824 = vunpack.c.l.s4 1983009808
        %v2825 = vunpack.c.0.s8 %v2824
        %v2826 = vlaneseq
        %v2827 = vshrl.u32 %v2826, 7
        %v2828 = vsub.s32 %v2825, %v2827
        %v2829 = vrot.slane %v2815, %v2828
        %v2830 = vcombine.low %v2806, %v2812
        %v2831 = vcombine.high %v2806, %v2812
        %v2833 = vunpack.c.l.s4 1983009808
        %v2834 = vunpack.c.0.s8 %v2833
        %v2835 = vlaneseq
        %v2836 = vshrl.u32 %v2835, 7
        %v2837 = vsub.s32 %v2834, %v2836
        %v2838 = vrot.slane %v2830, %v2837
        %v2840 = vunpack.c.l.s4 1983009808
        %v2841 = vunpack.c.0.s8 %v2840
        %v2842 = vlaneseq
        %v2843 = vshrl.u32 %v2842, 7
        %v2844 = vsub.s32 %v2841, %v2843
        %v2845 = vrot.slane %v2831, %v2844
        %v2846 = vcombine.low %v2822, %v2838
        %v2847 = vcombine.high %v2822, %v2838
        %v2849 = vunpack.c.l.s4 1934713408
        %v2850 = vunpack.c.0.s8 %v2849
        %v2851 = vlaneseq
        %v2852 = vshrl.u32 %v2851, 7
        %v2853 = vsub.s32 %v2850, %v2852
        %v2854 = vrot.slane %v2846, %v2853
        %v2856 = vunpack.c.l.s4 1934713408
        %v2857 = vunpack.c.0.s8 %v2856
        %v2858 = vlaneseq
        %v2859 = vshrl.u32 %v2858, 7
        %v2860 = vsub.s32 %v2857, %v2859
        %v2861 = vrot.slane %v2847, %v2860
        %v2862 = vcombine.low %v2829, %v2845
        %v2863 = vcombine.high %v2829, %v2845
        %v2865 = vunpack.c.l.s4 1934713408
        %v2866 = vunpack.c.0.s8 %v2865
        %v2867 = vlaneseq
        %v2868 = vshrl.u32 %v2867, 7
        %v2869 = vsub.s32 %v2866, %v2868
        %v2870 = vrot.slane %v2862, %v2869
        %v2872 = vunpack.c.l.s4 1934713408
        %v2873 = vunpack.c.0.s8 %v2872
        %v2874 = vlaneseq
        %v2875 = vshrl.u32 %v2874, 7
        %v2876 = vsub.s32 %v2873, %v2875
        %v2877 = vrot.slane %v2863, %v2876
        %v2878 = vcombine.high %v2854, 0.0
        %v2879 = vcombine.high %v2861, 0.0
        %v2880 = vcombine.high %v2870, 0.0
        %v2881 = vcombine.high %v2877, 0.0
        %v2882 = vpack.c.bf16 %v2854, %v2854
        %v2883 = vpack.c.bf16 %v2878, %v2878
        %v2884 = vpack.c.bf16 %v2861, %v2861
        %v2885 = vpack.c.bf16 %v2879, %v2879
        %v2886 = vpack.c.bf16 %v2870, %v2870
        %v2887 = vpack.c.bf16 %v2880, %v2880
        %v2888 = vpack.c.bf16 %v2877, %v2877
        %v2889 = vpack.c.bf16 %v2881, %v2881
        %2890 = vrot.lane.b32.xlu0 %v2799, 96
        %v2891 = vpop.permute.xlu0 %2890
        %2892 = vrot.lane.b32.xlu0 %v2806, 96
        %v2893 = vpop.permute.xlu0 %2892
        %2894 = vrot.lane.b32.xlu0 %v2809, 96
        %v2895 = vpop.permute.xlu0 %2894
        %2896 = vrot.lane.b32.xlu0 %v2812, 96
        %v2897 = vpop.permute.xlu0 %2896
        %v2902 = vcombine.low %v2891, %v2895
        %v2903 = vcombine.high %v2891, %v2895
        %v2905 = vunpack.c.l.s4 1983009808
        %v2906 = vunpack.c.0.s8 %v2905
        %v2907 = vlaneseq
        %v2908 = vshrl.u32 %v2907, 7
        %v2909 = vsub.s32 %v2906, %v2908
        %v2910 = vrot.slane %v2902, %v2909
        %v2912 = vunpack.c.l.s4 1983009808
        %v2913 = vunpack.c.0.s8 %v2912
        %v2914 = vlaneseq
        %v2915 = vshrl.u32 %v2914, 7
        %v2916 = vsub.s32 %v2913, %v2915
        %v2917 = vrot.slane %v2903, %v2916
        %v2918 = vcombine.low %v2893, %v2897
        %v2919 = vcombine.high %v2893, %v2897
        %v2921 = vunpack.c.l.s4 1983009808
        %v2922 = vunpack.c.0.s8 %v2921
        %v2923 = vlaneseq
        %v2924 = vshrl.u32 %v2923, 7
        %v2925 = vsub.s32 %v2922, %v2924
        %v2926 = vrot.slane %v2918, %v2925
        %v2928 = vunpack.c.l.s4 1983009808
        %v2929 = vunpack.c.0.s8 %v2928
        %v2930 = vlaneseq
        %v2931 = vshrl.u32 %v2930, 7
        %v2932 = vsub.s32 %v2929, %v2931
        %v2933 = vrot.slane %v2919, %v2932
        %v2934 = vcombine.low %v2910, %v2926
        %v2935 = vcombine.high %v2910, %v2926
        %v2937 = vunpack.c.l.s4 1934713408
        %v2938 = vunpack.c.0.s8 %v2937
        %v2939 = vlaneseq
        %v2940 = vshrl.u32 %v2939, 7
        %v2941 = vsub.s32 %v2938, %v2940
        %v2942 = vrot.slane %v2934, %v2941
        %v2944 = vunpack.c.l.s4 1934713408
        %v2945 = vunpack.c.0.s8 %v2944
        %v2946 = vlaneseq
        %v2947 = vshrl.u32 %v2946, 7
        %v2948 = vsub.s32 %v2945, %v2947
        %v2949 = vrot.slane %v2935, %v2948
        %v2950 = vcombine.low %v2917, %v2933
        %v2951 = vcombine.high %v2917, %v2933
        %v2953 = vunpack.c.l.s4 1934713408
        %v2954 = vunpack.c.0.s8 %v2953
        %v2955 = vlaneseq
        %v2956 = vshrl.u32 %v2955, 7
        %v2957 = vsub.s32 %v2954, %v2956
        %v2958 = vrot.slane %v2950, %v2957
        %v2960 = vunpack.c.l.s4 1934713408
        %v2961 = vunpack.c.0.s8 %v2960
        %v2962 = vlaneseq
        %v2963 = vshrl.u32 %v2962, 7
        %v2964 = vsub.s32 %v2961, %v2963
        %v2965 = vrot.slane %v2951, %v2964
        %v2966 = vcombine.high %v2942, 0.0
        %v2967 = vcombine.high %v2949, 0.0
        %v2968 = vcombine.high %v2958, 0.0
        %v2969 = vcombine.high %v2965, 0.0
        %v2970 = vpack.c.bf16 %v2942, %v2942
        %v2971 = vpack.c.bf16 %v2966, %v2966
        %v2972 = vpack.c.bf16 %v2949, %v2949
        %v2973 = vpack.c.bf16 %v2967, %v2967
        %v2974 = vpack.c.bf16 %v2958, %v2958
        %v2975 = vpack.c.bf16 %v2968, %v2968
        %v2976 = vpack.c.bf16 %v2965, %v2965
        %v2977 = vpack.c.bf16 %v2969, %v2969
        %2978 = vrot.lane.b32.xlu0 %v2799, 64
        %v2979 = vpop.permute.xlu0 %2978
        %2980 = vrot.lane.b32.xlu0 %v2806, 64
        %v2981 = vpop.permute.xlu0 %2980
        %2982 = vrot.lane.b32.xlu0 %v2809, 64
        %v2983 = vpop.permute.xlu0 %2982
        %2984 = vrot.lane.b32.xlu0 %v2812, 64
        %v2985 = vpop.permute.xlu0 %2984
        %v2990 = vcombine.low %v2979, %v2983
        %v2991 = vcombine.high %v2979, %v2983
        %v2993 = vunpack.c.l.s4 1983009808
        %v2994 = vunpack.c.0.s8 %v2993
        %v2995 = vlaneseq
        %v2996 = vshrl.u32 %v2995, 7
        %v2997 = vsub.s32 %v2994, %v2996
        %v2998 = vrot.slane %v2990, %v2997
        %v3000 = vunpack.c.l.s4 1983009808
        %v3001 = vunpack.c.0.s8 %v3000
        %v3002 = vlaneseq
        %v3003 = vshrl.u32 %v3002, 7
        %v3004 = vsub.s32 %v3001, %v3003
        %v3005 = vrot.slane %v2991, %v3004
        %v3006 = vcombine.low %v2981, %v2985
        %v3007 = vcombine.high %v2981, %v2985
        %v3009 = vunpack.c.l.s4 1983009808
        %v3010 = vunpack.c.0.s8 %v3009
        %v3011 = vlaneseq
        %v3012 = vshrl.u32 %v3011, 7
        %v3013 = vsub.s32 %v3010, %v3012
        %v3014 = vrot.slane %v3006, %v3013
        %v3016 = vunpack.c.l.s4 1983009808
        %v3017 = vunpack.c.0.s8 %v3016
        %v3018 = vlaneseq
        %v3019 = vshrl.u32 %v3018, 7
        %v3020 = vsub.s32 %v3017, %v3019
        %v3021 = vrot.slane %v3007, %v3020
        %v3022 = vcombine.low %v2998, %v3014
        %v3023 = vcombine.high %v2998, %v3014
        %v3025 = vunpack.c.l.s4 1934713408
        %v3026 = vunpack.c.0.s8 %v3025
        %v3027 = vlaneseq
        %v3028 = vshrl.u32 %v3027, 7
        %v3029 = vsub.s32 %v3026, %v3028
        %v3030 = vrot.slane %v3022, %v3029
        %v3032 = vunpack.c.l.s4 1934713408
        %v3033 = vunpack.c.0.s8 %v3032
        %v3034 = vlaneseq
        %v3035 = vshrl.u32 %v3034, 7
        %v3036 = vsub.s32 %v3033, %v3035
        %v3037 = vrot.slane %v3023, %v3036
        %v3038 = vcombine.low %v3005, %v3021
        %v3039 = vcombine.high %v3005, %v3021
        %v3041 = vunpack.c.l.s4 1934713408
        %v3042 = vunpack.c.0.s8 %v3041
        %v3043 = vlaneseq
        %v3044 = vshrl.u32 %v3043, 7
        %v3045 = vsub.s32 %v3042, %v3044
        %v3046 = vrot.slane %v3038, %v3045
        %v3048 = vunpack.c.l.s4 1934713408
        %v3049 = vunpack.c.0.s8 %v3048
        %v3050 = vlaneseq
        %v3051 = vshrl.u32 %v3050, 7
        %v3052 = vsub.s32 %v3049, %v3051
        %v3053 = vrot.slane %v3039, %v3052
        %v3054 = vcombine.high %v3030, 0.0
        %v3055 = vcombine.high %v3037, 0.0
        %v3056 = vcombine.high %v3046, 0.0
        %v3057 = vcombine.high %v3053, 0.0
        %v3058 = vpack.c.bf16 %v3030, %v3030
        %v3059 = vpack.c.bf16 %v3054, %v3054
        %v3060 = vpack.c.bf16 %v3037, %v3037
        %v3061 = vpack.c.bf16 %v3055, %v3055
        %v3062 = vpack.c.bf16 %v3046, %v3046
        %v3063 = vpack.c.bf16 %v3056, %v3056
        %v3064 = vpack.c.bf16 %v3053, %v3053
        %v3065 = vpack.c.bf16 %v3057, %v3057
        %v3066 = vcombine.low %v2882, %v2886
        %v3068 = vunpack.c.l.s4 1983009808
        %v3069 = vunpack.c.0.s8 %v3068
        %v3070 = vlaneseq
        %v3071 = vshrl.u32 %v3070, 7
        %v3072 = vsub.s32 %v3069, %v3071
        %v3073 = vrot.slane %v3066, %v3072
        %v3074 = vcombine.low %v2884, %v2888
        %v3076 = vunpack.c.l.s4 1983009808
        %v3077 = vunpack.c.0.s8 %v3076
        %v3078 = vlaneseq
        %v3079 = vshrl.u32 %v3078, 7
        %v3080 = vsub.s32 %v3077, %v3079
        %v3081 = vrot.slane %v3074, %v3080
        %v3082 = vcombine.low %v3073, %v3081
        %v3084 = vunpack.c.l.s4 1934713408
        %v3085 = vunpack.c.0.s8 %v3084
        %v3086 = vlaneseq
        %v3087 = vshrl.u32 %v3086, 7
        %v3088 = vsub.s32 %v3085, %v3087
        %v3089 = vrot.slane %v3082, %v3088
        %v3090 = vcombine.high %v3089, 0
        %v3091 = vcombine.low %v2883, %v2887
        %v3093 = vunpack.c.l.s4 1983009808
        %v3094 = vunpack.c.0.s8 %v3093
        %v3095 = vlaneseq
        %v3096 = vshrl.u32 %v3095, 7
        %v3097 = vsub.s32 %v3094, %v3096
        %v3098 = vrot.slane %v3091, %v3097
        %v3099 = vcombine.low %v2885, %v2889
        %v3101 = vunpack.c.l.s4 1983009808
        %v3102 = vunpack.c.0.s8 %v3101
        %v3103 = vlaneseq
        %v3104 = vshrl.u32 %v3103, 7
        %v3105 = vsub.s32 %v3102, %v3104
        %v3106 = vrot.slane %v3099, %v3105
        %v3107 = vcombine.low %v3098, %v3106
        %v3109 = vunpack.c.l.s4 1934713408
        %v3110 = vunpack.c.0.s8 %v3109
        %v3111 = vlaneseq
        %v3112 = vshrl.u32 %v3111, 7
        %v3113 = vsub.s32 %v3110, %v3112
        %v3114 = vrot.slane %v3107, %v3113
        %v3115 = vcombine.high %v3114, 0
        %v3118 = vpack.i.b16 %v3114, %v3089
        %v3119 = vshrl.u32 %v3089, 16
        %v3120 = vshrl.u32 %v3114, 16
        %v3121 = vpack.i.b16 %v3120, %v3119
        %v3124 = vpack.i.b16 %v3115, %v3090
        %v3125 = vshrl.u32 %v3090, 16
        %v3126 = vshrl.u32 %v3115, 16
        %v3127 = vpack.i.b16 %v3126, %v3125
        %3128 = vxpose.xlu0.c.b16.start [1/8] %v2970, 128
        %3129 = vxpose.xlu0.c.b16.cont [2/8] 0, 128
        %3130 = vxpose.xlu0.c.b16.cont [3/8] 0, 128
        %3131 = vxpose.xlu0.c.b16.cont [4/8] 0, 128
        %3132 = vxpose.xlu0.c.b16.cont [5/8] 0, 128
        %3133 = vxpose.xlu0.c.b16.cont [6/8] 0, 128
        %3134 = vxpose.xlu0.c.b16.cont [7/8] 0, 128
        %3135 = vxpose.xlu0.c.b16.end [8/8] 0, 128
        %v3136 = vpop.trf.xlu0
        %v3137 = vpop.trf.xlu0
        %v3138 = vpop.trf.xlu0
        %v3139 = vpop.trf.xlu0
        %v3140 = vpop.trf.xlu0
        %v3141 = vpop.trf.xlu0
        %v3142 = vpop.trf.xlu0
        %v3143 = vpop.trf.xlu0
        %3144 = vxpose.xlu0.c.b16.start [1/8] %v2971, 128
        %3145 = vxpose.xlu0.c.b16.cont [2/8] 0, 128
        %3146 = vxpose.xlu0.c.b16.cont [3/8] 0, 128
        %3147 = vxpose.xlu0.c.b16.cont [4/8] 0, 128
        %3148 = vxpose.xlu0.c.b16.cont [5/8] 0, 128
        %3149 = vxpose.xlu0.c.b16.cont [6/8] 0, 128
        %3150 = vxpose.xlu0.c.b16.cont [7/8] 0, 128
        %3151 = vxpose.xlu0.c.b16.end [8/8] 0, 128
        %v3152 = vpop.trf.xlu0
        %v3153 = vpop.trf.xlu0
        %v3154 = vpop.trf.xlu0
        %v3155 = vpop.trf.xlu0
        %v3156 = vpop.trf.xlu0
        %v3157 = vpop.trf.xlu0
        %v3158 = vpop.trf.xlu0
        %v3159 = vpop.trf.xlu0
        %3160 = vxpose.xlu0.c.b16.start [1/8] %v2972, 128
        %3161 = vxpose.xlu0.c.b16.cont [2/8] 0, 128
        %3162 = vxpose.xlu0.c.b16.cont [3/8] 0, 128
        %3163 = vxpose.xlu0.c.b16.cont [4/8] 0, 128
        %3164 = vxpose.xlu0.c.b16.cont [5/8] 0, 128
        %3165 = vxpose.xlu0.c.b16.cont [6/8] 0, 128
        %3166 = vxpose.xlu0.c.b16.cont [7/8] 0, 128
        %3167 = vxpose.xlu0.c.b16.end [8/8] 0, 128
        %v3168 = vpop.trf.xlu0
        %v3169 = vpop.trf.xlu0
        %v3170 = vpop.trf.xlu0
        %v3171 = vpop.trf.xlu0
        %v3172 = vpop.trf.xlu0
        %v3173 = vpop.trf.xlu0
        %v3174 = vpop.trf.xlu0
        %v3175 = vpop.trf.xlu0
        %3176 = vxpose.xlu0.c.b16.start [1/8] %v2973, 128
        %3177 = vxpose.xlu0.c.b16.cont [2/8] 0, 128
        %3178 = vxpose.xlu0.c.b16.cont [3/8] 0, 128
        %3179 = vxpose.xlu0.c.b16.cont [4/8] 0, 128
        %3180 = vxpose.xlu0.c.b16.cont [5/8] 0, 128
        %3181 = vxpose.xlu0.c.b16.cont [6/8] 0, 128
        %3182 = vxpose.xlu0.c.b16.cont [7/8] 0, 128
        %3183 = vxpose.xlu0.c.b16.end [8/8] 0, 128
        %v3184 = vpop.trf.xlu0
        %v3185 = vpop.trf.xlu0
        %v3186 = vpop.trf.xlu0
        %v3187 = vpop.trf.xlu0
        %v3188 = vpop.trf.xlu0
        %v3189 = vpop.trf.xlu0
        %v3190 = vpop.trf.xlu0
        %v3191 = vpop.trf.xlu0
        %3192 = vxpose.xlu0.c.b16.start [1/8] %v2974, 128
        %3193 = vxpose.xlu0.c.b16.cont [2/8] 0, 128
        %3194 = vxpose.xlu0.c.b16.cont [3/8] 0, 128
        %3195 = vxpose.xlu0.c.b16.cont [4/8] 0, 128
        %3196 = vxpose.xlu0.c.b16.cont [5/8] 0, 128
        %3197 = vxpose.xlu0.c.b16.cont [6/8] 0, 128
        %3198 = vxpose.xlu0.c.b16.cont [7/8] 0, 128
        %3199 = vxpose.xlu0.c.b16.end [8/8] 0, 128
        %v3200 = vpop.trf.xlu0
        %v3201 = vpop.trf.xlu0
        %v3202 = vpop.trf.xlu0
        %v3203 = vpop.trf.xlu0
        %v3204 = vpop.trf.xlu0
        %v3205 = vpop.trf.xlu0
        %v3206 = vpop.trf.xlu0
        %v3207 = vpop.trf.xlu0
        %3208 = vxpose.xlu0.c.b16.start [1/8] %v2975, 128
        %3209 = vxpose.xlu0.c.b16.cont [2/8] 0, 128
        %3210 = vxpose.xlu0.c.b16.cont [3/8] 0, 128
        %3211 = vxpose.xlu0.c.b16.cont [4/8] 0, 128
        %3212 = vxpose.xlu0.c.b16.cont [5/8] 0, 128
        %3213 = vxpose.xlu0.c.b16.cont [6/8] 0, 128
        %3214 = vxpose.xlu0.c.b16.cont [7/8] 0, 128
        %3215 = vxpose.xlu0.c.b16.end [8/8] 0, 128
        %v3216 = vpop.trf.xlu0
        %v3217 = vpop.trf.xlu0
        %v3218 = vpop.trf.xlu0
        %v3219 = vpop.trf.xlu0
        %v3220 = vpop.trf.xlu0
        %v3221 = vpop.trf.xlu0
        %v3222 = vpop.trf.xlu0
        %v3223 = vpop.trf.xlu0
        %3224 = vxpose.xlu0.c.b16.start [1/8] %v2976, 128
        %3225 = vxpose.xlu0.c.b16.cont [2/8] 0, 128
        %3226 = vxpose.xlu0.c.b16.cont [3/8] 0, 128
        %3227 = vxpose.xlu0.c.b16.cont [4/8] 0, 128
        %3228 = vxpose.xlu0.c.b16.cont [5/8] 0, 128
        %3229 = vxpose.xlu0.c.b16.cont [6/8] 0, 128
        %3230 = vxpose.xlu0.c.b16.cont [7/8] 0, 128
        %3231 = vxpose.xlu0.c.b16.end [8/8] 0, 128
        %v3232 = vpop.trf.xlu0
        %v3233 = vpop.trf.xlu0
        %v3234 = vpop.trf.xlu0
        %v3235 = vpop.trf.xlu0
        %v3236 = vpop.trf.xlu0
        %v3237 = vpop.trf.xlu0
        %v3238 = vpop.trf.xlu0
        %v3239 = vpop.trf.xlu0
        %3240 = vxpose.xlu0.c.b16.start [1/8] %v2977, 128
        %3241 = vxpose.xlu0.c.b16.cont [2/8] 0, 128
        %3242 = vxpose.xlu0.c.b16.cont [3/8] 0, 128
        %3243 = vxpose.xlu0.c.b16.cont [4/8] 0, 128
        %3244 = vxpose.xlu0.c.b16.cont [5/8] 0, 128
        %3245 = vxpose.xlu0.c.b16.cont [6/8] 0, 128
        %3246 = vxpose.xlu0.c.b16.cont [7/8] 0, 128
        %3247 = vxpose.xlu0.c.b16.end [8/8] 0, 128
        %v3248 = vpop.trf.xlu0
        %v3249 = vpop.trf.xlu0
        %v3250 = vpop.trf.xlu0
        %v3251 = vpop.trf.xlu0
        %v3252 = vpop.trf.xlu0
        %v3253 = vpop.trf.xlu0
        %v3254 = vpop.trf.xlu0
        %v3255 = vpop.trf.xlu0
        %v3256 = vcombine.low %v3136, %v3200
        %v3258 = vunpack.c.l.s4 1983009808
        %v3259 = vunpack.c.0.s8 %v3258
        %v3260 = vlaneseq
        %v3261 = vshrl.u32 %v3260, 7
        %v3262 = vsub.s32 %v3259, %v3261
        %v3263 = vrot.slane %v3256, %v3262
        %v3264 = vcombine.low %v3168, %v3232
        %v3266 = vunpack.c.l.s4 1983009808
        %v3267 = vunpack.c.0.s8 %v3266
        %v3268 = vlaneseq
        %v3269 = vshrl.u32 %v3268, 7
        %v3270 = vsub.s32 %v3267, %v3269
        %v3271 = vrot.slane %v3264, %v3270
        %v3272 = vcombine.low %v3263, %v3271
        %v3273 = vcombine.high %v3263, %v3271
        %v3275 = vunpack.c.l.s4 1934713408
        %v3276 = vunpack.c.0.s8 %v3275
        %v3277 = vlaneseq
        %v3278 = vshrl.u32 %v3277, 7
        %v3279 = vsub.s32 %v3276, %v3278
        %v3280 = vrot.slane %v3272, %v3279
        %v3282 = vunpack.c.l.s4 1934713408
        %v3283 = vunpack.c.0.s8 %v3282
        %v3284 = vlaneseq
        %v3285 = vshrl.u32 %v3284, 7
        %v3286 = vsub.s32 %v3283, %v3285
        %v3287 = vrot.slane %v3273, %v3286
        %v3288 = vcombine.high %v3280, 0
        %v3289 = vcombine.high %v3287, 0
        %v3290 = vcombine.low %v3152, %v3216
        %v3292 = vunpack.c.l.s4 1983009808
        %v3293 = vunpack.c.0.s8 %v3292
        %v3294 = vlaneseq
        %v3295 = vshrl.u32 %v3294, 7
        %v3296 = vsub.s32 %v3293, %v3295
        %v3297 = vrot.slane %v3290, %v3296
        %v3298 = vcombine.low %v3184, %v3248
        %v3300 = vunpack.c.l.s4 1983009808
        %v3301 = vunpack.c.0.s8 %v3300
        %v3302 = vlaneseq
        %v3303 = vshrl.u32 %v3302, 7
        %v3304 = vsub.s32 %v3301, %v3303
        %v3305 = vrot.slane %v3298, %v3304
        %v3306 = vcombine.low %v3297, %v3305
        %v3307 = vcombine.high %v3297, %v3305
        %v3309 = vunpack.c.l.s4 1934713408
        %v3310 = vunpack.c.0.s8 %v3309
        %v3311 = vlaneseq
        %v3312 = vshrl.u32 %v3311, 7
        %v3313 = vsub.s32 %v3310, %v3312
        %v3314 = vrot.slane %v3306, %v3313
        %v3316 = vunpack.c.l.s4 1934713408
        %v3317 = vunpack.c.0.s8 %v3316
        %v3318 = vlaneseq
        %v3319 = vshrl.u32 %v3318, 7
        %v3320 = vsub.s32 %v3317, %v3319
        %v3321 = vrot.slane %v3307, %v3320
        %v3322 = vcombine.high %v3314, 0
        %v3323 = vcombine.high %v3321, 0
        %v3326 = vpack.i.b16 %v3314, %v3280
        %v3328 = vshrl.u32 %v3280, 16
        %v3329 = vshrl.u32 %v3314, 16
        %v3330 = vpack.i.b16 %v3329, %v3328
        %v3334 = vpack.i.b16 %v3322, %v3288
        %v3336 = vshrl.u32 %v3288, 16
        %v3337 = vshrl.u32 %v3322, 16
        %v3338 = vpack.i.b16 %v3337, %v3336
        %v3342 = vpack.i.b16 %v3321, %v3287
        %v3344 = vshrl.u32 %v3287, 16
        %v3345 = vshrl.u32 %v3321, 16
        %v3346 = vpack.i.b16 %v3345, %v3344
        %v3350 = vpack.i.b16 %v3323, %v3289
        %v3352 = vshrl.u32 %v3289, 16
        %v3353 = vshrl.u32 %v3323, 16
        %v3354 = vpack.i.b16 %v3353, %v3352
        %3356 = vxpose.xlu0.c.b16.start [1/8] %v3326, 128
        %3357 = vxpose.xlu0.c.b16.cont [2/8] 0, 128
        %3358 = vxpose.xlu0.c.b16.cont [3/8] 0, 128
        %3359 = vxpose.xlu0.c.b16.cont [4/8] 0, 128
        %3360 = vxpose.xlu0.c.b16.cont [5/8] 0, 128
        %3361 = vxpose.xlu0.c.b16.cont [6/8] 0, 128
        %3362 = vxpose.xlu0.c.b16.cont [7/8] 0, 128
        %3363 = vxpose.xlu0.c.b16.end [8/8] 0, 128
        %v3364 = vpop.trf.xlu0
        %v3365 = vpop.trf.xlu0
        %v3366 = vpop.trf.xlu0
        %v3367 = vpop.trf.xlu0
        %v3368 = vpop.trf.xlu0
        %v3369 = vpop.trf.xlu0
        %v3370 = vpop.trf.xlu0
        %v3371 = vpop.trf.xlu0
        %3372 = vxpose.xlu0.c.b16.start [1/8] %v3330, 128
        %3373 = vxpose.xlu0.c.b16.cont [2/8] 0, 128
        %3374 = vxpose.xlu0.c.b16.cont [3/8] 0, 128
        %3375 = vxpose.xlu0.c.b16.cont [4/8] 0, 128
        %3376 = vxpose.xlu0.c.b16.cont [5/8] 0, 128
        %3377 = vxpose.xlu0.c.b16.cont [6/8] 0, 128
        %3378 = vxpose.xlu0.c.b16.cont [7/8] 0, 128
        %3379 = vxpose.xlu0.c.b16.end [8/8] 0, 128
        %v3380 = vpop.trf.xlu0
        %v3381 = vpop.trf.xlu0
        %v3382 = vpop.trf.xlu0
        %v3383 = vpop.trf.xlu0
        %v3384 = vpop.trf.xlu0
        %v3385 = vpop.trf.xlu0
        %v3386 = vpop.trf.xlu0
        %v3387 = vpop.trf.xlu0
        %3388 = vxpose.xlu0.c.b16.start [1/8] %v3334, 128
        %3389 = vxpose.xlu0.c.b16.cont [2/8] 0, 128
        %3390 = vxpose.xlu0.c.b16.cont [3/8] 0, 128
        %3391 = vxpose.xlu0.c.b16.cont [4/8] 0, 128
        %3392 = vxpose.xlu0.c.b16.cont [5/8] 0, 128
        %3393 = vxpose.xlu0.c.b16.cont [6/8] 0, 128
        %3394 = vxpose.xlu0.c.b16.cont [7/8] 0, 128
        %3395 = vxpose.xlu0.c.b16.end [8/8] 0, 128
        %v3396 = vpop.trf.xlu0
        %v3397 = vpop.trf.xlu0
        %v3398 = vpop.trf.xlu0
        %v3399 = vpop.trf.xlu0
        %v3400 = vpop.trf.xlu0
        %v3401 = vpop.trf.xlu0
        %v3402 = vpop.trf.xlu0
        %v3403 = vpop.trf.xlu0
        %3404 = vxpose.xlu0.c.b16.start [1/8] %v3338, 128
        %3405 = vxpose.xlu0.c.b16.cont [2/8] 0, 128
        %3406 = vxpose.xlu0.c.b16.cont [3/8] 0, 128
        %3407 = vxpose.xlu0.c.b16.cont [4/8] 0, 128
        %3408 = vxpose.xlu0.c.b16.cont [5/8] 0, 128
        %3409 = vxpose.xlu0.c.b16.cont [6/8] 0, 128
        %3410 = vxpose.xlu0.c.b16.cont [7/8] 0, 128
        %3411 = vxpose.xlu0.c.b16.end [8/8] 0, 128
        %v3412 = vpop.trf.xlu0
        %v3413 = vpop.trf.xlu0
        %v3414 = vpop.trf.xlu0
        %v3415 = vpop.trf.xlu0
        %v3416 = vpop.trf.xlu0
        %v3417 = vpop.trf.xlu0
        %v3418 = vpop.trf.xlu0
        %v3419 = vpop.trf.xlu0
        %3420 = vxpose.xlu0.c.b16.start [1/8] %v3342, 128
        %3421 = vxpose.xlu0.c.b16.cont [2/8] 0, 128
        %3422 = vxpose.xlu0.c.b16.cont [3/8] 0, 128
        %3423 = vxpose.xlu0.c.b16.cont [4/8] 0, 128
        %3424 = vxpose.xlu0.c.b16.cont [5/8] 0, 128
        %3425 = vxpose.xlu0.c.b16.cont [6/8] 0, 128
        %3426 = vxpose.xlu0.c.b16.cont [7/8] 0, 128
        %3427 = vxpose.xlu0.c.b16.end [8/8] 0, 128
        %v3428 = vpop.trf.xlu0
        %v3429 = vpop.trf.xlu0
        %v3430 = vpop.trf.xlu0
        %v3431 = vpop.trf.xlu0
        %v3432 = vpop.trf.xlu0
        %v3433 = vpop.trf.xlu0
        %v3434 = vpop.trf.xlu0
        %v3435 = vpop.trf.xlu0
        %3436 = vxpose.xlu0.c.b16.start [1/8] %v3346, 128
        %3437 = vxpose.xlu0.c.b16.cont [2/8] 0, 128
        %3438 = vxpose.xlu0.c.b16.cont [3/8] 0, 128
        %3439 = vxpose.xlu0.c.b16.cont [4/8] 0, 128
        %3440 = vxpose.xlu0.c.b16.cont [5/8] 0, 128
        %3441 = vxpose.xlu0.c.b16.cont [6/8] 0, 128
        %3442 = vxpose.xlu0.c.b16.cont [7/8] 0, 128
        %3443 = vxpose.xlu0.c.b16.end [8/8] 0, 128
        %v3444 = vpop.trf.xlu0
        %v3445 = vpop.trf.xlu0
        %v3446 = vpop.trf.xlu0
        %v3447 = vpop.trf.xlu0
        %v3448 = vpop.trf.xlu0
        %v3449 = vpop.trf.xlu0
        %v3450 = vpop.trf.xlu0
        %v3451 = vpop.trf.xlu0
        %3452 = vxpose.xlu0.c.b16.start [1/8] %v3350, 128
        %3453 = vxpose.xlu0.c.b16.cont [2/8] 0, 128
        %3454 = vxpose.xlu0.c.b16.cont [3/8] 0, 128
        %3455 = vxpose.xlu0.c.b16.cont [4/8] 0, 128
        %3456 = vxpose.xlu0.c.b16.cont [5/8] 0, 128
        %3457 = vxpose.xlu0.c.b16.cont [6/8] 0, 128
        %3458 = vxpose.xlu0.c.b16.cont [7/8] 0, 128
        %3459 = vxpose.xlu0.c.b16.end [8/8] 0, 128
        %v3460 = vpop.trf.xlu0
        %v3461 = vpop.trf.xlu0
        %v3462 = vpop.trf.xlu0
        %v3463 = vpop.trf.xlu0
        %v3464 = vpop.trf.xlu0
        %v3465 = vpop.trf.xlu0
        %v3466 = vpop.trf.xlu0
        %v3467 = vpop.trf.xlu0
        %3468 = vxpose.xlu0.c.b16.start [1/8] %v3354, 128
        %3469 = vxpose.xlu0.c.b16.cont [2/8] 0, 128
        %3470 = vxpose.xlu0.c.b16.cont [3/8] 0, 128
        %3471 = vxpose.xlu0.c.b16.cont [4/8] 0, 128
        %3472 = vxpose.xlu0.c.b16.cont [5/8] 0, 128
        %3473 = vxpose.xlu0.c.b16.cont [6/8] 0, 128
        %3474 = vxpose.xlu0.c.b16.cont [7/8] 0, 128
        %3475 = vxpose.xlu0.c.b16.end [8/8] 0, 128
        %v3476 = vpop.trf.xlu0
        %v3477 = vpop.trf.xlu0
        %v3478 = vpop.trf.xlu0
        %v3479 = vpop.trf.xlu0
        %v3480 = vpop.trf.xlu0
        %v3481 = vpop.trf.xlu0
        %v3482 = vpop.trf.xlu0
        %v3483 = vpop.trf.xlu0
        %v3484 = vcombine.low %v3364, %v3428
        %v3486 = vunpack.c.l.s4 1983009808
        %v3487 = vunpack.c.0.s8 %v3486
        %v3488 = vlaneseq
        %v3489 = vshrl.u32 %v3488, 7
        %v3490 = vsub.s32 %v3487, %v3489
        %v3491 = vrot.slane %v3484, %v3490
        %v3492 = vcombine.low %v3396, %v3460
        %v3494 = vunpack.c.l.s4 1983009808
        %v3495 = vunpack.c.0.s8 %v3494
        %v3496 = vlaneseq
        %v3497 = vshrl.u32 %v3496, 7
        %v3498 = vsub.s32 %v3495, %v3497
        %v3499 = vrot.slane %v3492, %v3498
        %v3500 = vcombine.low %v3491, %v3499
        %v3502 = vunpack.c.l.s4 1934713408
        %v3503 = vunpack.c.0.s8 %v3502
        %v3504 = vlaneseq
        %v3505 = vshrl.u32 %v3504, 7
        %v3506 = vsub.s32 %v3503, %v3505
        %v3507 = vrot.slane %v3500, %v3506
        %v3508 = vcombine.high %v3507, 0
        %v3509 = vcombine.low %v3380, %v3444
        %v3511 = vunpack.c.l.s4 1983009808
        %v3512 = vunpack.c.0.s8 %v3511
        %v3513 = vlaneseq
        %v3514 = vshrl.u32 %v3513, 7
        %v3515 = vsub.s32 %v3512, %v3514
        %v3516 = vrot.slane %v3509, %v3515
        %v3517 = vcombine.low %v3412, %v3476
        %v3519 = vunpack.c.l.s4 1983009808
        %v3520 = vunpack.c.0.s8 %v3519
        %v3521 = vlaneseq
        %v3522 = vshrl.u32 %v3521, 7
        %v3523 = vsub.s32 %v3520, %v3522
        %v3524 = vrot.slane %v3517, %v3523
        %v3525 = vcombine.low %v3516, %v3524
        %v3527 = vunpack.c.l.s4 1934713408
        %v3528 = vunpack.c.0.s8 %v3527
        %v3529 = vlaneseq
        %v3530 = vshrl.u32 %v3529, 7
        %v3531 = vsub.s32 %v3528, %v3530
        %v3532 = vrot.slane %v3525, %v3531
        %v3533 = vcombine.high %v3532, 0
        %v3536 = vpack.i.b16 %v3532, %v3507
        %v3537 = vshrl.u32 %v3507, 16
        %v3538 = vshrl.u32 %v3532, 16
        %v3539 = vpack.i.b16 %v3538, %v3537
        %v3542 = vpack.i.b16 %v3533, %v3508
        %v3543 = vshrl.u32 %v3508, 16
        %v3544 = vshrl.u32 %v3533, 16
        %v3545 = vpack.i.b16 %v3544, %v3543
        %v3547 = vsel %vm1372, %v3118, 0
        %v3550 = vsel %vm1376, %v3536, 0
        %3552 = vmatprep.subr.bf16.mxu0 0
        %3553 = vmatpush1.bf16.msra.mxu0 %v3550
        %3554 = vmatprep.subr.bf16.mxu0 0
        %3555 = vmatpush1.bf16.msra.mxu0 0
        %3556 = vmatprep.subr.bf16.mxu0 0
        %3557 = vmatpush1.bf16.msra.mxu0 0
        %3558 = vmatprep.subr.bf16.mxu0 0
        %3559 = vmatpush1.bf16.msra.mxu0 0
        %3560 = vmatprep.subr.bf16.mxu0 0
        %3561 = vmatpush1.bf16.msra.mxu0 0
        %3562 = vmatprep.subr.bf16.mxu0 0
        %3563 = vmatpush1.bf16.msra.mxu0 0
        %3564 = vmatprep.subr.bf16.mxu0 0
        %3565 = vmatpush1.bf16.msra.mxu0 0
        %3566 = vmatprep.subr.bf16.mxu0 0
        %3567 = vmatpush1.bf16.msra.mxu0 0
        %3568 = vmatprep.subr.bf16.mxu0 0
        %3569 = vmatpush1.bf16.msra.mxu0 0
        %3570 = vmatprep.subr.bf16.mxu0 0
        %3571 = vmatpush1.bf16.msra.mxu0 0
        %3572 = vmatprep.subr.bf16.mxu0 0
        %3573 = vmatpush1.bf16.msra.mxu0 0
        %3574 = vmatprep.subr.bf16.mxu0 0
        %3575 = vmatpush1.bf16.msra.mxu0 0
        %3576 = vmatprep.subr.bf16.mxu0 0
        %3577 = vmatpush1.bf16.msra.mxu0 0
        %3578 = vmatprep.subr.bf16.mxu0 0
        %3579 = vmatpush1.bf16.msra.mxu0 0
        %3580 = vmatprep.subr.bf16.mxu0 0
        %3581 = vmatpush1.bf16.msra.mxu0 0
        %3582 = vmatprep.subr.bf16.mxu0 0
        %3583 = vmatpush1.bf16.msra.mxu0 0
        %3584 = vmatprep.mubr.bf16.mxu0 0
        %3585 = vmatmul.mubr.bf16.gmra.mrb[0].mxu0 %v3547
        %v3586 = vpop.f32.mrb[0].mxu0
        %v3587 = vadd.f32 0.0, %v3586
        %v3588 = vpop.f32.mrb[0].mxu0
        %v3589 = vpop.f32.mrb[0].mxu0
        %v3590 = vpop.f32.mrb[0].mxu0
        %3591 = vdwg.mxu0
        %v3593 = vsel %vm1372, %v3121, 0
        %v3596 = vsel %vm1376, %v3539, 0
        %3598 = vmatprep.subr.bf16.mxu0 0
        %3599 = vmatpush1.bf16.msra.mxu0 %v3596
        %3600 = vmatprep.subr.bf16.mxu0 0
        %3601 = vmatpush1.bf16.msra.mxu0 0
        %3602 = vmatprep.subr.bf16.mxu0 0
        %3603 = vmatpush1.bf16.msra.mxu0 0
        %3604 = vmatprep.subr.bf16.mxu0 0
        %3605 = vmatpush1.bf16.msra.mxu0 0
        %3606 = vmatprep.subr.bf16.mxu0 0
        %3607 = vmatpush1.bf16.msra.mxu0 0
        %3608 = vmatprep.subr.bf16.mxu0 0
        %3609 = vmatpush1.bf16.msra.mxu0 0
        %3610 = vmatprep.subr.bf16.mxu0 0
        %3611 = vmatpush1.bf16.msra.mxu0 0
        %3612 = vmatprep.subr.bf16.mxu0 0
        %3613 = vmatpush1.bf16.msra.mxu0 0
        %3614 = vmatprep.subr.bf16.mxu0 0
        %3615 = vmatpush1.bf16.msra.mxu0 0
        %3616 = vmatprep.subr.bf16.mxu0 0
        %3617 = vmatpush1.bf16.msra.mxu0 0
        %3618 = vmatprep.subr.bf16.mxu0 0
        %3619 = vmatpush1.bf16.msra.mxu0 0
        %3620 = vmatprep.subr.bf16.mxu0 0
        %3621 = vmatpush1.bf16.msra.mxu0 0
        %3622 = vmatprep.subr.bf16.mxu0 0
        %3623 = vmatpush1.bf16.msra.mxu0 0
        %3624 = vmatprep.subr.bf16.mxu0 0
        %3625 = vmatpush1.bf16.msra.mxu0 0
        %3626 = vmatprep.subr.bf16.mxu0 0
        %3627 = vmatpush1.bf16.msra.mxu0 0
        %3628 = vmatprep.subr.bf16.mxu0 0
        %3629 = vmatpush1.bf16.msra.mxu0 0
        %3630 = vmatprep.mubr.bf16.mxu0 0
        %3631 = vmatmul.mubr.bf16.gmra.mrb[0].mxu0 %v3593
        %v3632 = vpop.f32.mrb[0].mxu0
        %v3633 = vadd.f32 0.0, %v3632
        %v3634 = vpop.f32.mrb[0].mxu0
        %v3635 = vpop.f32.mrb[0].mxu0
        %v3636 = vpop.f32.mrb[0].mxu0
        %3637 = vdwg.mxu0
        %v3639 = vsel %vm1372, %v3124, 0
        %v3642 = vsel %vm1376, %v3542, 0
        %3644 = vmatprep.subr.bf16.mxu0 0
        %3645 = vmatpush1.bf16.msra.mxu0 %v3642
        %3646 = vmatprep.subr.bf16.mxu0 0
        %3647 = vmatpush1.bf16.msra.mxu0 0
        %3648 = vmatprep.subr.bf16.mxu0 0
        %3649 = vmatpush1.bf16.msra.mxu0 0
        %3650 = vmatprep.subr.bf16.mxu0 0
        %3651 = vmatpush1.bf16.msra.mxu0 0
        %3652 = vmatprep.subr.bf16.mxu0 0
        %3653 = vmatpush1.bf16.msra.mxu0 0
        %3654 = vmatprep.subr.bf16.mxu0 0
        %3655 = vmatpush1.bf16.msra.mxu0 0
        %3656 = vmatprep.subr.bf16.mxu0 0
        %3657 = vmatpush1.bf16.msra.mxu0 0
        %3658 = vmatprep.subr.bf16.mxu0 0
        %3659 = vmatpush1.bf16.msra.mxu0 0
        %3660 = vmatprep.subr.bf16.mxu0 0
        %3661 = vmatpush1.bf16.msra.mxu0 0
        %3662 = vmatprep.subr.bf16.mxu0 0
        %3663 = vmatpush1.bf16.msra.mxu0 0
        %3664 = vmatprep.subr.bf16.mxu0 0
        %3665 = vmatpush1.bf16.msra.mxu0 0
        %3666 = vmatprep.subr.bf16.mxu0 0
        %3667 = vmatpush1.bf16.msra.mxu0 0
        %3668 = vmatprep.subr.bf16.mxu0 0
        %3669 = vmatpush1.bf16.msra.mxu0 0
        %3670 = vmatprep.subr.bf16.mxu0 0
        %3671 = vmatpush1.bf16.msra.mxu0 0
        %3672 = vmatprep.subr.bf16.mxu0 0
        %3673 = vmatpush1.bf16.msra.mxu0 0
        %3674 = vmatprep.subr.bf16.mxu0 0
        %3675 = vmatpush1.bf16.msra.mxu0 0
        %3676 = vmatprep.mubr.bf16.mxu0 0
        %3677 = vmatmul.mubr.bf16.gmra.mrb[0].mxu0 %v3639
        %v3678 = vpop.f32.mrb[0].mxu0
        %v3679 = vadd.f32 0.0, %v3678
        %v3680 = vpop.f32.mrb[0].mxu0
        %v3681 = vpop.f32.mrb[0].mxu0
        %v3682 = vpop.f32.mrb[0].mxu0
        %3683 = vdwg.mxu0
        %v3685 = vsel %vm1372, %v3127, 0
        %v3688 = vsel %vm1376, %v3545, 0
        %3690 = vmatprep.subr.bf16.mxu0 0
        %3691 = vmatpush1.bf16.msra.mxu0 %v3688
        %3692 = vmatprep.subr.bf16.mxu0 0
        %3693 = vmatpush1.bf16.msra.mxu0 0
        %3694 = vmatprep.subr.bf16.mxu0 0
        %3695 = vmatpush1.bf16.msra.mxu0 0
        %3696 = vmatprep.subr.bf16.mxu0 0
        %3697 = vmatpush1.bf16.msra.mxu0 0
        %3698 = vmatprep.subr.bf16.mxu0 0
        %3699 = vmatpush1.bf16.msra.mxu0 0
        %3700 = vmatprep.subr.bf16.mxu0 0
        %3701 = vmatpush1.bf16.msra.mxu0 0
        %3702 = vmatprep.subr.bf16.mxu0 0
        %3703 = vmatpush1.bf16.msra.mxu0 0
        %3704 = vmatprep.subr.bf16.mxu0 0
        %3705 = vmatpush1.bf16.msra.mxu0 0
        %3706 = vmatprep.subr.bf16.mxu0 0
        %3707 = vmatpush1.bf16.msra.mxu0 0
        %3708 = vmatprep.subr.bf16.mxu0 0
        %3709 = vmatpush1.bf16.msra.mxu0 0
        %3710 = vmatprep.subr.bf16.mxu0 0
        %3711 = vmatpush1.bf16.msra.mxu0 0
        %3712 = vmatprep.subr.bf16.mxu0 0
        %3713 = vmatpush1.bf16.msra.mxu0 0
        %3714 = vmatprep.subr.bf16.mxu0 0
        %3715 = vmatpush1.bf16.msra.mxu0 0
        %3716 = vmatprep.subr.bf16.mxu0 0
        %3717 = vmatpush1.bf16.msra.mxu0 0
        %3718 = vmatprep.subr.bf16.mxu0 0
        %3719 = vmatpush1.bf16.msra.mxu0 0
        %3720 = vmatprep.subr.bf16.mxu0 0
        %3721 = vmatpush1.bf16.msra.mxu0 0
        %3722 = vmatprep.mubr.bf16.mxu0 0
        %3723 = vmatmul.mubr.bf16.gmra.mrb[0].mxu0 %v3685
        %v3724 = vpop.f32.mrb[0].mxu0
        %v3725 = vadd.f32 0.0, %v3724
        %v3726 = vpop.f32.mrb[0].mxu0
        %v3727 = vpop.f32.mrb[0].mxu0
        %v3728 = vpop.f32.mrb[0].mxu0
        %3729 = vdwg.mxu0
        %v3730 = vmul.f32 %v3587, 0.35355338
        %v3731 = vmul.f32 %v3633, 0.35355338
        %v3732 = vmul.f32 %v3679, 0.35355338
        %v3733 = vmul.f32 %v3725, 0.35355338
        %v3734 = vadd.f32 %v3730, %v1566
        %v3735 = vadd.f32 %v3731, %v1566
        %v3736 = vadd.f32 %v3732, %v1566
        %v3737 = vadd.f32 %v3733, %v1566
        %v3738 = vsel %vm1372, %v3734, -inf
        %3739 = vmax.xlane.f32.xlu0 %v3738
        %v3740 = vpop.xlane.xlu0 %3739
        %v3741 = vsel %vm1372, %v3735, -inf
        %3742 = vmax.xlane.f32.xlu0 %v3741
        %v3743 = vpop.xlane.xlu0 %3742
        %v3744 = vsel %vm1372, %v3736, -inf
        %3745 = vmax.xlane.f32.xlu0 %v3744
        %v3746 = vpop.xlane.xlu0 %3745
        %v3747 = vsel %vm1372, %v3737, -inf
        %3748 = vmax.xlane.f32.xlu0 %v3747
        %v3749 = vpop.xlane.xlu0 %3748
        %v3750 = vsub.f32 %v3734, %v3740
        %v3751 = vsub.f32 %v3735, %v3743
        %v3752 = vsub.f32 %v3736, %v3746
        %v3753 = vsub.f32 %v3737, %v3749
        %v3754 = vmul.f32 %v3750, 1.442695
        %v3755 = vpow.pop %v3754
        %v3756 = vmul.f32 %v3751, 1.442695
        %v3757 = vpow.pop %v3756
        %v3758 = vmul.f32 %v3752, 1.442695
        %v3759 = vpow.pop %v3758
        %v3760 = vmul.f32 %v3753, 1.442695
        %v3761 = vpow.pop %v3760
        %v3762 = vsel %vm1372, %v3755, 0.0
        %3763 = vadd.xlane.f32.xlu0 %v3762
        %v3764 = vpop.xlane.xlu0 %3763
        %v3765 = vsel %vm1372, %v3757, 0.0
        %3766 = vadd.xlane.f32.xlu0 %v3765
        %v3767 = vpop.xlane.xlu0 %3766
        %v3768 = vsel %vm1372, %v3759, 0.0
        %3769 = vadd.xlane.f32.xlu0 %v3768
        %v3770 = vpop.xlane.xlu0 %3769
        %v3771 = vsel %vm1372, %v3761, 0.0
        %3772 = vadd.xlane.f32.xlu0 %v3771
        %v3773 = vpop.xlane.xlu0 %3772
        %v3774 = vrcp.pop %v3764
        %v3775 = vrcp.pop %v3767
        %v3776 = vrcp.pop %v3770
        %v3777 = vrcp.pop %v3773
        %v3778 = vmul.f32 %v3755, %v3774
        %v3779 = vmul.f32 %v3757, %v3775
        %v3780 = vmul.f32 %v3759, %v3776
        %v3781 = vmul.f32 %v3761, %v3777
        %v3782 = vpack.c.bf16 %v3778, %v3778
        %v3783 = vpack.c.bf16 %v3779, %v3779
        %v3784 = vpack.c.bf16 %v3780, %v3780
        %v3785 = vpack.c.bf16 %v3781, %v3781
        %3786 = vxpose.xlu0.c.b16.start [1/8] %v3058, 128
        %3787 = vxpose.xlu0.c.b16.cont [2/8] 0, 128
        %3788 = vxpose.xlu0.c.b16.cont [3/8] 0, 128
        %3789 = vxpose.xlu0.c.b16.cont [4/8] 0, 128
        %3790 = vxpose.xlu0.c.b16.cont [5/8] 0, 128
        %3791 = vxpose.xlu0.c.b16.cont [6/8] 0, 128
        %3792 = vxpose.xlu0.c.b16.cont [7/8] 0, 128
        %3793 = vxpose.xlu0.c.b16.end [8/8] 0, 128
        %v3794 = vpop.trf.xlu0
        %v3795 = vpop.trf.xlu0
        %v3796 = vpop.trf.xlu0
        %v3797 = vpop.trf.xlu0
        %v3798 = vpop.trf.xlu0
        %v3799 = vpop.trf.xlu0
        %v3800 = vpop.trf.xlu0
        %v3801 = vpop.trf.xlu0
        %3802 = vxpose.xlu0.c.b16.start [1/8] %v3059, 128
        %3803 = vxpose.xlu0.c.b16.cont [2/8] 0, 128
        %3804 = vxpose.xlu0.c.b16.cont [3/8] 0, 128
        %3805 = vxpose.xlu0.c.b16.cont [4/8] 0, 128
        %3806 = vxpose.xlu0.c.b16.cont [5/8] 0, 128
        %3807 = vxpose.xlu0.c.b16.cont [6/8] 0, 128
        %3808 = vxpose.xlu0.c.b16.cont [7/8] 0, 128
        %3809 = vxpose.xlu0.c.b16.end [8/8] 0, 128
        %v3810 = vpop.trf.xlu0
        %v3811 = vpop.trf.xlu0
        %v3812 = vpop.trf.xlu0
        %v3813 = vpop.trf.xlu0
        %v3814 = vpop.trf.xlu0
        %v3815 = vpop.trf.xlu0
        %v3816 = vpop.trf.xlu0
        %v3817 = vpop.trf.xlu0
        %3818 = vxpose.xlu0.c.b16.start [1/8] %v3060, 128
        %3819 = vxpose.xlu0.c.b16.cont [2/8] 0, 128
        %3820 = vxpose.xlu0.c.b16.cont [3/8] 0, 128
        %3821 = vxpose.xlu0.c.b16.cont [4/8] 0, 128
        %3822 = vxpose.xlu0.c.b16.cont [5/8] 0, 128
        %3823 = vxpose.xlu0.c.b16.cont [6/8] 0, 128
        %3824 = vxpose.xlu0.c.b16.cont [7/8] 0, 128
        %3825 = vxpose.xlu0.c.b16.end [8/8] 0, 128
        %v3826 = vpop.trf.xlu0
        %v3827 = vpop.trf.xlu0
        %v3828 = vpop.trf.xlu0
        %v3829 = vpop.trf.xlu0
        %v3830 = vpop.trf.xlu0
        %v3831 = vpop.trf.xlu0
        %v3832 = vpop.trf.xlu0
        %v3833 = vpop.trf.xlu0
        %3834 = vxpose.xlu0.c.b16.start [1/8] %v3061, 128
        %3835 = vxpose.xlu0.c.b16.cont [2/8] 0, 128
        %3836 = vxpose.xlu0.c.b16.cont [3/8] 0, 128
        %3837 = vxpose.xlu0.c.b16.cont [4/8] 0, 128
        %3838 = vxpose.xlu0.c.b16.cont [5/8] 0, 128
        %3839 = vxpose.xlu0.c.b16.cont [6/8] 0, 128
        %3840 = vxpose.xlu0.c.b16.cont [7/8] 0, 128
        %3841 = vxpose.xlu0.c.b16.end [8/8] 0, 128
        %v3842 = vpop.trf.xlu0
        %v3843 = vpop.trf.xlu0
        %v3844 = vpop.trf.xlu0
        %v3845 = vpop.trf.xlu0
        %v3846 = vpop.trf.xlu0
        %v3847 = vpop.trf.xlu0
        %v3848 = vpop.trf.xlu0
        %v3849 = vpop.trf.xlu0
        %3850 = vxpose.xlu0.c.b16.start [1/8] %v3062, 128
        %3851 = vxpose.xlu0.c.b16.cont [2/8] 0, 128
        %3852 = vxpose.xlu0.c.b16.cont [3/8] 0, 128
        %3853 = vxpose.xlu0.c.b16.cont [4/8] 0, 128
        %3854 = vxpose.xlu0.c.b16.cont [5/8] 0, 128
        %3855 = vxpose.xlu0.c.b16.cont [6/8] 0, 128
        %3856 = vxpose.xlu0.c.b16.cont [7/8] 0, 128
        %3857 = vxpose.xlu0.c.b16.end [8/8] 0, 128
        %v3858 = vpop.trf.xlu0
        %v3859 = vpop.trf.xlu0
        %v3860 = vpop.trf.xlu0
        %v3861 = vpop.trf.xlu0
        %v3862 = vpop.trf.xlu0
        %v3863 = vpop.trf.xlu0
        %v3864 = vpop.trf.xlu0
        %v3865 = vpop.trf.xlu0
        %3866 = vxpose.xlu0.c.b16.start [1/8] %v3063, 128
        %3867 = vxpose.xlu0.c.b16.cont [2/8] 0, 128
        %3868 = vxpose.xlu0.c.b16.cont [3/8] 0, 128
        %3869 = vxpose.xlu0.c.b16.cont [4/8] 0, 128
        %3870 = vxpose.xlu0.c.b16.cont [5/8] 0, 128
        %3871 = vxpose.xlu0.c.b16.cont [6/8] 0, 128
        %3872 = vxpose.xlu0.c.b16.cont [7/8] 0, 128
        %3873 = vxpose.xlu0.c.b16.end [8/8] 0, 128
        %v3874 = vpop.trf.xlu0
        %v3875 = vpop.trf.xlu0
        %v3876 = vpop.trf.xlu0
        %v3877 = vpop.trf.xlu0
        %v3878 = vpop.trf.xlu0
        %v3879 = vpop.trf.xlu0
        %v3880 = vpop.trf.xlu0
        %v3881 = vpop.trf.xlu0
        %3882 = vxpose.xlu0.c.b16.start [1/8] %v3064, 128
        %3883 = vxpose.xlu0.c.b16.cont [2/8] 0, 128
        %3884 = vxpose.xlu0.c.b16.cont [3/8] 0, 128
        %3885 = vxpose.xlu0.c.b16.cont [4/8] 0, 128
        %3886 = vxpose.xlu0.c.b16.cont [5/8] 0, 128
        %3887 = vxpose.xlu0.c.b16.cont [6/8] 0, 128
        %3888 = vxpose.xlu0.c.b16.cont [7/8] 0, 128
        %3889 = vxpose.xlu0.c.b16.end [8/8] 0, 128
        %v3890 = vpop.trf.xlu0
        %v3891 = vpop.trf.xlu0
        %v3892 = vpop.trf.xlu0
        %v3893 = vpop.trf.xlu0
        %v3894 = vpop.trf.xlu0
        %v3895 = vpop.trf.xlu0
        %v3896 = vpop.trf.xlu0
        %v3897 = vpop.trf.xlu0
        %3898 = vxpose.xlu0.c.b16.start [1/8] %v3065, 128
        %3899 = vxpose.xlu0.c.b16.cont [2/8] 0, 128
        %3900 = vxpose.xlu0.c.b16.cont [3/8] 0, 128
        %3901 = vxpose.xlu0.c.b16.cont [4/8] 0, 128
        %3902 = vxpose.xlu0.c.b16.cont [5/8] 0, 128
        %3903 = vxpose.xlu0.c.b16.cont [6/8] 0, 128
        %3904 = vxpose.xlu0.c.b16.cont [7/8] 0, 128
        %3905 = vxpose.xlu0.c.b16.end [8/8] 0, 128
        %v3906 = vpop.trf.xlu0
        %v3907 = vpop.trf.xlu0
        %v3908 = vpop.trf.xlu0
        %v3909 = vpop.trf.xlu0
        %v3910 = vpop.trf.xlu0
        %v3911 = vpop.trf.xlu0
        %v3912 = vpop.trf.xlu0
        %v3913 = vpop.trf.xlu0
        %v3914 = vcombine.low %v3794, %v3858
        %v3916 = vunpack.c.l.s4 1983009808
        %v3917 = vunpack.c.0.s8 %v3916
        %v3918 = vlaneseq
        %v3919 = vshrl.u32 %v3918, 7
        %v3920 = vsub.s32 %v3917, %v3919
        %v3921 = vrot.slane %v3914, %v3920
        %v3922 = vcombine.low %v3826, %v3890
        %v3924 = vunpack.c.l.s4 1983009808
        %v3925 = vunpack.c.0.s8 %v3924
        %v3926 = vlaneseq
        %v3927 = vshrl.u32 %v3926, 7
        %v3928 = vsub.s32 %v3925, %v3927
        %v3929 = vrot.slane %v3922, %v3928
        %v3930 = vcombine.low %v3921, %v3929
        %v3931 = vcombine.high %v3921, %v3929
        %v3933 = vunpack.c.l.s4 1934713408
        %v3934 = vunpack.c.0.s8 %v3933
        %v3935 = vlaneseq
        %v3936 = vshrl.u32 %v3935, 7
        %v3937 = vsub.s32 %v3934, %v3936
        %v3938 = vrot.slane %v3930, %v3937
        %v3940 = vunpack.c.l.s4 1934713408
        %v3941 = vunpack.c.0.s8 %v3940
        %v3942 = vlaneseq
        %v3943 = vshrl.u32 %v3942, 7
        %v3944 = vsub.s32 %v3941, %v3943
        %v3945 = vrot.slane %v3931, %v3944
        %v3946 = vcombine.high %v3938, 0
        %v3947 = vcombine.high %v3945, 0
        %v3948 = vcombine.low %v3810, %v3874
        %v3950 = vunpack.c.l.s4 1983009808
        %v3951 = vunpack.c.0.s8 %v3950
        %v3952 = vlaneseq
        %v3953 = vshrl.u32 %v3952, 7
        %v3954 = vsub.s32 %v3951, %v3953
        %v3955 = vrot.slane %v3948, %v3954
        %v3956 = vcombine.low %v3842, %v3906
        %v3958 = vunpack.c.l.s4 1983009808
        %v3959 = vunpack.c.0.s8 %v3958
        %v3960 = vlaneseq
        %v3961 = vshrl.u32 %v3960, 7
        %v3962 = vsub.s32 %v3959, %v3961
        %v3963 = vrot.slane %v3956, %v3962
        %v3964 = vcombine.low %v3955, %v3963
        %v3965 = vcombine.high %v3955, %v3963
        %v3967 = vunpack.c.l.s4 1934713408
        %v3968 = vunpack.c.0.s8 %v3967
        %v3969 = vlaneseq
        %v3970 = vshrl.u32 %v3969, 7
        %v3971 = vsub.s32 %v3968, %v3970
        %v3972 = vrot.slane %v3964, %v3971
        %v3974 = vunpack.c.l.s4 1934713408
        %v3975 = vunpack.c.0.s8 %v3974
        %v3976 = vlaneseq
        %v3977 = vshrl.u32 %v3976, 7
        %v3978 = vsub.s32 %v3975, %v3977
        %v3979 = vrot.slane %v3965, %v3978
        %v3980 = vcombine.high %v3972, 0
        %v3981 = vcombine.high %v3979, 0
        %v3984 = vpack.i.b16 %v3972, %v3938
        %v3986 = vshrl.u32 %v3938, 16
        %v3987 = vshrl.u32 %v3972, 16
        %v3988 = vpack.i.b16 %v3987, %v3986
        %v3992 = vpack.i.b16 %v3980, %v3946
        %v3994 = vshrl.u32 %v3946, 16
        %v3995 = vshrl.u32 %v3980, 16
        %v3996 = vpack.i.b16 %v3995, %v3994
        %v4000 = vpack.i.b16 %v3979, %v3945
        %v4002 = vshrl.u32 %v3945, 16
        %v4003 = vshrl.u32 %v3979, 16
        %v4004 = vpack.i.b16 %v4003, %v4002
        %v4008 = vpack.i.b16 %v3981, %v3947
        %v4010 = vshrl.u32 %v3947, 16
        %v4011 = vshrl.u32 %v3981, 16
        %v4012 = vpack.i.b16 %v4011, %v4010
        %4014 = vxpose.xlu0.c.b16.start [1/8] %v3984, 128
        %4015 = vxpose.xlu0.c.b16.cont [2/8] 0, 128
        %4016 = vxpose.xlu0.c.b16.cont [3/8] 0, 128
        %4017 = vxpose.xlu0.c.b16.cont [4/8] 0, 128
        %4018 = vxpose.xlu0.c.b16.cont [5/8] 0, 128
        %4019 = vxpose.xlu0.c.b16.cont [6/8] 0, 128
        %4020 = vxpose.xlu0.c.b16.cont [7/8] 0, 128
        %4021 = vxpose.xlu0.c.b16.end [8/8] 0, 128
        %v4022 = vpop.trf.xlu0
        %v4023 = vpop.trf.xlu0
        %v4024 = vpop.trf.xlu0
        %v4025 = vpop.trf.xlu0
        %v4026 = vpop.trf.xlu0
        %v4027 = vpop.trf.xlu0
        %v4028 = vpop.trf.xlu0
        %v4029 = vpop.trf.xlu0
        %4030 = vxpose.xlu0.c.b16.start [1/8] %v3988, 128
        %4031 = vxpose.xlu0.c.b16.cont [2/8] 0, 128
        %4032 = vxpose.xlu0.c.b16.cont [3/8] 0, 128
        %4033 = vxpose.xlu0.c.b16.cont [4/8] 0, 128
        %4034 = vxpose.xlu0.c.b16.cont [5/8] 0, 128
        %4035 = vxpose.xlu0.c.b16.cont [6/8] 0, 128
        %4036 = vxpose.xlu0.c.b16.cont [7/8] 0, 128
        %4037 = vxpose.xlu0.c.b16.end [8/8] 0, 128
        %v4038 = vpop.trf.xlu0
        %v4039 = vpop.trf.xlu0
        %v4040 = vpop.trf.xlu0
        %v4041 = vpop.trf.xlu0
        %v4042 = vpop.trf.xlu0
        %v4043 = vpop.trf.xlu0
        %v4044 = vpop.trf.xlu0
        %v4045 = vpop.trf.xlu0
        %4046 = vxpose.xlu0.c.b16.start [1/8] %v3992, 128
        %4047 = vxpose.xlu0.c.b16.cont [2/8] 0, 128
        %4048 = vxpose.xlu0.c.b16.cont [3/8] 0, 128
        %4049 = vxpose.xlu0.c.b16.cont [4/8] 0, 128
        %4050 = vxpose.xlu0.c.b16.cont [5/8] 0, 128
        %4051 = vxpose.xlu0.c.b16.cont [6/8] 0, 128
        %4052 = vxpose.xlu0.c.b16.cont [7/8] 0, 128
        %4053 = vxpose.xlu0.c.b16.end [8/8] 0, 128
        %v4054 = vpop.trf.xlu0
        %v4055 = vpop.trf.xlu0
        %v4056 = vpop.trf.xlu0
        %v4057 = vpop.trf.xlu0
        %v4058 = vpop.trf.xlu0
        %v4059 = vpop.trf.xlu0
        %v4060 = vpop.trf.xlu0
        %v4061 = vpop.trf.xlu0
        %4062 = vxpose.xlu0.c.b16.start [1/8] %v3996, 128
        %4063 = vxpose.xlu0.c.b16.cont [2/8] 0, 128
        %4064 = vxpose.xlu0.c.b16.cont [3/8] 0, 128
        %4065 = vxpose.xlu0.c.b16.cont [4/8] 0, 128
        %4066 = vxpose.xlu0.c.b16.cont [5/8] 0, 128
        %4067 = vxpose.xlu0.c.b16.cont [6/8] 0, 128
        %4068 = vxpose.xlu0.c.b16.cont [7/8] 0, 128
        %4069 = vxpose.xlu0.c.b16.end [8/8] 0, 128
        %v4070 = vpop.trf.xlu0
        %v4071 = vpop.trf.xlu0
        %v4072 = vpop.trf.xlu0
        %v4073 = vpop.trf.xlu0
        %v4074 = vpop.trf.xlu0
        %v4075 = vpop.trf.xlu0
        %v4076 = vpop.trf.xlu0
        %v4077 = vpop.trf.xlu0
        %4078 = vxpose.xlu0.c.b16.start [1/8] %v4000, 128
        %4079 = vxpose.xlu0.c.b16.cont [2/8] 0, 128
        %4080 = vxpose.xlu0.c.b16.cont [3/8] 0, 128
        %4081 = vxpose.xlu0.c.b16.cont [4/8] 0, 128
        %4082 = vxpose.xlu0.c.b16.cont [5/8] 0, 128
        %4083 = vxpose.xlu0.c.b16.cont [6/8] 0, 128
        %4084 = vxpose.xlu0.c.b16.cont [7/8] 0, 128
        %4085 = vxpose.xlu0.c.b16.end [8/8] 0, 128
        %v4086 = vpop.trf.xlu0
        %v4087 = vpop.trf.xlu0
        %v4088 = vpop.trf.xlu0
        %v4089 = vpop.trf.xlu0
        %v4090 = vpop.trf.xlu0
        %v4091 = vpop.trf.xlu0
        %v4092 = vpop.trf.xlu0
        %v4093 = vpop.trf.xlu0
        %4094 = vxpose.xlu0.c.b16.start [1/8] %v4004, 128
        %4095 = vxpose.xlu0.c.b16.cont [2/8] 0, 128
        %4096 = vxpose.xlu0.c.b16.cont [3/8] 0, 128
        %4097 = vxpose.xlu0.c.b16.cont [4/8] 0, 128
        %4098 = vxpose.xlu0.c.b16.cont [5/8] 0, 128
        %4099 = vxpose.xlu0.c.b16.cont [6/8] 0, 128
        %4100 = vxpose.xlu0.c.b16.cont [7/8] 0, 128
        %4101 = vxpose.xlu0.c.b16.end [8/8] 0, 128
        %v4102 = vpop.trf.xlu0
        %v4103 = vpop.trf.xlu0
        %v4104 = vpop.trf.xlu0
        %v4105 = vpop.trf.xlu0
        %v4106 = vpop.trf.xlu0
        %v4107 = vpop.trf.xlu0
        %v4108 = vpop.trf.xlu0
        %v4109 = vpop.trf.xlu0
        %4110 = vxpose.xlu0.c.b16.start [1/8] %v4008, 128
        %4111 = vxpose.xlu0.c.b16.cont [2/8] 0, 128
        %4112 = vxpose.xlu0.c.b16.cont [3/8] 0, 128
        %4113 = vxpose.xlu0.c.b16.cont [4/8] 0, 128
        %4114 = vxpose.xlu0.c.b16.cont [5/8] 0, 128
        %4115 = vxpose.xlu0.c.b16.cont [6/8] 0, 128
        %4116 = vxpose.xlu0.c.b16.cont [7/8] 0, 128
        %4117 = vxpose.xlu0.c.b16.end [8/8] 0, 128
        %v4118 = vpop.trf.xlu0
        %v4119 = vpop.trf.xlu0
        %v4120 = vpop.trf.xlu0
        %v4121 = vpop.trf.xlu0
        %v4122 = vpop.trf.xlu0
        %v4123 = vpop.trf.xlu0
        %v4124 = vpop.trf.xlu0
        %v4125 = vpop.trf.xlu0
        %4126 = vxpose.xlu0.c.b16.start [1/8] %v4012, 128
        %4127 = vxpose.xlu0.c.b16.cont [2/8] 0, 128
        %4128 = vxpose.xlu0.c.b16.cont [3/8] 0, 128
        %4129 = vxpose.xlu0.c.b16.cont [4/8] 0, 128
        %4130 = vxpose.xlu0.c.b16.cont [5/8] 0, 128
        %4131 = vxpose.xlu0.c.b16.cont [6/8] 0, 128
        %4132 = vxpose.xlu0.c.b16.cont [7/8] 0, 128
        %4133 = vxpose.xlu0.c.b16.end [8/8] 0, 128
        %v4134 = vpop.trf.xlu0
        %v4135 = vpop.trf.xlu0
        %v4136 = vpop.trf.xlu0
        %v4137 = vpop.trf.xlu0
        %v4138 = vpop.trf.xlu0
        %v4139 = vpop.trf.xlu0
        %v4140 = vpop.trf.xlu0
        %v4141 = vpop.trf.xlu0
        %v4142 = vcombine.low %v4022, %v4086
        %v4144 = vunpack.c.l.s4 1983009808
        %v4145 = vunpack.c.0.s8 %v4144
        %v4146 = vlaneseq
        %v4147 = vshrl.u32 %v4146, 7
        %v4148 = vsub.s32 %v4145, %v4147
        %v4149 = vrot.slane %v4142, %v4148
        %v4150 = vcombine.low %v4054, %v4118
        %v4152 = vunpack.c.l.s4 1983009808
        %v4153 = vunpack.c.0.s8 %v4152
        %v4154 = vlaneseq
        %v4155 = vshrl.u32 %v4154, 7
        %v4156 = vsub.s32 %v4153, %v4155
        %v4157 = vrot.slane %v4150, %v4156
        %v4158 = vcombine.low %v4149, %v4157
        %v4160 = vunpack.c.l.s4 1934713408
        %v4161 = vunpack.c.0.s8 %v4160
        %v4162 = vlaneseq
        %v4163 = vshrl.u32 %v4162, 7
        %v4164 = vsub.s32 %v4161, %v4163
        %v4165 = vrot.slane %v4158, %v4164
        %v4166 = vcombine.high %v4165, 0
        %v4167 = vcombine.low %v4038, %v4102
        %v4169 = vunpack.c.l.s4 1983009808
        %v4170 = vunpack.c.0.s8 %v4169
        %v4171 = vlaneseq
        %v4172 = vshrl.u32 %v4171, 7
        %v4173 = vsub.s32 %v4170, %v4172
        %v4174 = vrot.slane %v4167, %v4173
        %v4175 = vcombine.low %v4070, %v4134
        %v4177 = vunpack.c.l.s4 1983009808
        %v4178 = vunpack.c.0.s8 %v4177
        %v4179 = vlaneseq
        %v4180 = vshrl.u32 %v4179, 7
        %v4181 = vsub.s32 %v4178, %v4180
        %v4182 = vrot.slane %v4175, %v4181
        %v4183 = vcombine.low %v4174, %v4182
        %v4185 = vunpack.c.l.s4 1934713408
        %v4186 = vunpack.c.0.s8 %v4185
        %v4187 = vlaneseq
        %v4188 = vshrl.u32 %v4187, 7
        %v4189 = vsub.s32 %v4186, %v4188
        %v4190 = vrot.slane %v4183, %v4189
        %v4191 = vcombine.high %v4190, 0
        %v4194 = vpack.i.b16 %v4190, %v4165
        %v4195 = vshrl.u32 %v4165, 16
        %v4196 = vshrl.u32 %v4190, 16
        %v4197 = vpack.i.b16 %v4196, %v4195
        %v4200 = vpack.i.b16 %v4191, %v4166
        %v4201 = vshrl.u32 %v4166, 16
        %v4202 = vshrl.u32 %v4191, 16
        %v4203 = vpack.i.b16 %v4202, %v4201
        %v4205 = vsel %vm1372, %v4194, 0
        %v4208 = vsel %vm1372, %v3782, 0
        %4210 = vmatprep.subr.bf16.mxu0 0
        %4211 = vmatpush1.bf16.xpose.msra.mxu0 %v4208
        %4212 = vmatprep.subr.bf16.mxu0 0
        %4213 = vmatpush1.bf16.xpose.msra.mxu0 0
        %4214 = vmatprep.subr.bf16.mxu0 0
        %4215 = vmatpush1.bf16.xpose.msra.mxu0 0
        %4216 = vmatprep.subr.bf16.mxu0 0
        %4217 = vmatpush1.bf16.xpose.msra.mxu0 0
        %4218 = vmatprep.subr.bf16.mxu0 0
        %4219 = vmatpush1.bf16.xpose.msra.mxu0 0
        %4220 = vmatprep.subr.bf16.mxu0 0
        %4221 = vmatpush1.bf16.xpose.msra.mxu0 0
        %4222 = vmatprep.subr.bf16.mxu0 0
        %4223 = vmatpush1.bf16.xpose.msra.mxu0 0
        %4224 = vmatprep.subr.bf16.mxu0 0
        %4225 = vmatpush1.bf16.xpose.msra.mxu0 0
        %4226 = vmatprep.subr.bf16.mxu0 0
        %4227 = vmatpush1.bf16.xpose.msra.mxu0 0
        %4228 = vmatprep.subr.bf16.mxu0 0
        %4229 = vmatpush1.bf16.xpose.msra.mxu0 0
        %4230 = vmatprep.subr.bf16.mxu0 0
        %4231 = vmatpush1.bf16.xpose.msra.mxu0 0
        %4232 = vmatprep.subr.bf16.mxu0 0
        %4233 = vmatpush1.bf16.xpose.msra.mxu0 0
        %4234 = vmatprep.subr.bf16.mxu0 0
        %4235 = vmatpush1.bf16.xpose.msra.mxu0 0
        %4236 = vmatprep.subr.bf16.mxu0 0
        %4237 = vmatpush1.bf16.xpose.msra.mxu0 0
        %4238 = vmatprep.subr.bf16.mxu0 0
        %4239 = vmatpush1.bf16.xpose.msra.mxu0 0
        %4240 = vmatprep.subr.bf16.mxu0 0
        %4241 = vmatpush1.bf16.xpose.msra.mxu0 0
        %4242 = vmatprep.mubr.bf16.mxu0 0
        %4243 = vmatmul.mubr.bf16.gmra.mrb[0].mxu0 %v4205
        %v4244 = vpop.f32.mrb[0].mxu0
        %v4245 = vadd.f32 0.0, %v4244
        %v4246 = vpop.f32.mrb[0].mxu0
        %v4247 = vpop.f32.mrb[0].mxu0
        %v4248 = vpop.f32.mrb[0].mxu0
        %4249 = vdwg.mxu0
        %v4251 = vsel %vm1372, %v4197, 0
        %v4254 = vsel %vm1372, %v3783, 0
        %4256 = vmatprep.subr.bf16.mxu0 0
        %4257 = vmatpush1.bf16.xpose.msra.mxu0 %v4254
        %4258 = vmatprep.subr.bf16.mxu0 0
        %4259 = vmatpush1.bf16.xpose.msra.mxu0 0
        %4260 = vmatprep.subr.bf16.mxu0 0
        %4261 = vmatpush1.bf16.xpose.msra.mxu0 0
        %4262 = vmatprep.subr.bf16.mxu0 0
        %4263 = vmatpush1.bf16.xpose.msra.mxu0 0
        %4264 = vmatprep.subr.bf16.mxu0 0
        %4265 = vmatpush1.bf16.xpose.msra.mxu0 0
        %4266 = vmatprep.subr.bf16.mxu0 0
        %4267 = vmatpush1.bf16.xpose.msra.mxu0 0
        %4268 = vmatprep.subr.bf16.mxu0 0
        %4269 = vmatpush1.bf16.xpose.msra.mxu0 0
        %4270 = vmatprep.subr.bf16.mxu0 0
        %4271 = vmatpush1.bf16.xpose.msra.mxu0 0
        %4272 = vmatprep.subr.bf16.mxu0 0
        %4273 = vmatpush1.bf16.xpose.msra.mxu0 0
        %4274 = vmatprep.subr.bf16.mxu0 0
        %4275 = vmatpush1.bf16.xpose.msra.mxu0 0
        %4276 = vmatprep.subr.bf16.mxu0 0
        %4277 = vmatpush1.bf16.xpose.msra.mxu0 0
        %4278 = vmatprep.subr.bf16.mxu0 0
        %4279 = vmatpush1.bf16.xpose.msra.mxu0 0
        %4280 = vmatprep.subr.bf16.mxu0 0
        %4281 = vmatpush1.bf16.xpose.msra.mxu0 0
        %4282 = vmatprep.subr.bf16.mxu0 0
        %4283 = vmatpush1.bf16.xpose.msra.mxu0 0
        %4284 = vmatprep.subr.bf16.mxu0 0
        %4285 = vmatpush1.bf16.xpose.msra.mxu0 0
        %4286 = vmatprep.subr.bf16.mxu0 0
        %4287 = vmatpush1.bf16.xpose.msra.mxu0 0
        %4288 = vmatprep.mubr.bf16.mxu0 0
        %4289 = vmatmul.mubr.bf16.gmra.mrb[0].mxu0 %v4251
        %v4290 = vpop.f32.mrb[0].mxu0
        %v4291 = vadd.f32 0.0, %v4290
        %v4292 = vpop.f32.mrb[0].mxu0
        %v4293 = vpop.f32.mrb[0].mxu0
        %v4294 = vpop.f32.mrb[0].mxu0
        %4295 = vdwg.mxu0
        %v4297 = vsel %vm1372, %v4200, 0
        %v4300 = vsel %vm1372, %v3784, 0
        %4302 = vmatprep.subr.bf16.mxu0 0
        %4303 = vmatpush1.bf16.xpose.msra.mxu0 %v4300
        %4304 = vmatprep.subr.bf16.mxu0 0
        %4305 = vmatpush1.bf16.xpose.msra.mxu0 0
        %4306 = vmatprep.subr.bf16.mxu0 0
        %4307 = vmatpush1.bf16.xpose.msra.mxu0 0
        %4308 = vmatprep.subr.bf16.mxu0 0
        %4309 = vmatpush1.bf16.xpose.msra.mxu0 0
        %4310 = vmatprep.subr.bf16.mxu0 0
        %4311 = vmatpush1.bf16.xpose.msra.mxu0 0
        %4312 = vmatprep.subr.bf16.mxu0 0
        %4313 = vmatpush1.bf16.xpose.msra.mxu0 0
        %4314 = vmatprep.subr.bf16.mxu0 0
        %4315 = vmatpush1.bf16.xpose.msra.mxu0 0
        %4316 = vmatprep.subr.bf16.mxu0 0
        %4317 = vmatpush1.bf16.xpose.msra.mxu0 0
        %4318 = vmatprep.subr.bf16.mxu0 0
        %4319 = vmatpush1.bf16.xpose.msra.mxu0 0
        %4320 = vmatprep.subr.bf16.mxu0 0
        %4321 = vmatpush1.bf16.xpose.msra.mxu0 0
        %4322 = vmatprep.subr.bf16.mxu0 0
        %4323 = vmatpush1.bf16.xpose.msra.mxu0 0
        %4324 = vmatprep.subr.bf16.mxu0 0
        %4325 = vmatpush1.bf16.xpose.msra.mxu0 0
        %4326 = vmatprep.subr.bf16.mxu0 0
        %4327 = vmatpush1.bf16.xpose.msra.mxu0 0
        %4328 = vmatprep.subr.bf16.mxu0 0
        %4329 = vmatpush1.bf16.xpose.msra.mxu0 0
        %4330 = vmatprep.subr.bf16.mxu0 0
        %4331 = vmatpush1.bf16.xpose.msra.mxu0 0
        %4332 = vmatprep.subr.bf16.mxu0 0
        %4333 = vmatpush1.bf16.xpose.msra.mxu0 0
        %4334 = vmatprep.mubr.bf16.mxu0 0
        %4335 = vmatmul.mubr.bf16.gmra.mrb[0].mxu0 %v4297
        %v4336 = vpop.f32.mrb[0].mxu0
        %v4337 = vadd.f32 0.0, %v4336
        %v4338 = vpop.f32.mrb[0].mxu0
        %v4339 = vpop.f32.mrb[0].mxu0
        %v4340 = vpop.f32.mrb[0].mxu0
        %4341 = vdwg.mxu0
        %v4343 = vsel %vm1372, %v4203, 0
        %v4346 = vsel %vm1372, %v3785, 0
        %4348 = vmatprep.subr.bf16.mxu0 0
        %4349 = vmatpush1.bf16.xpose.msra.mxu0 %v4346
        %4350 = vmatprep.subr.bf16.mxu0 0
        %4351 = vmatpush1.bf16.xpose.msra.mxu0 0
        %4352 = vmatprep.subr.bf16.mxu0 0
        %4353 = vmatpush1.bf16.xpose.msra.mxu0 0
        %4354 = vmatprep.subr.bf16.mxu0 0
        %4355 = vmatpush1.bf16.xpose.msra.mxu0 0
        %4356 = vmatprep.subr.bf16.mxu0 0
        %4357 = vmatpush1.bf16.xpose.msra.mxu0 0
        %4358 = vmatprep.subr.bf16.mxu0 0
        %4359 = vmatpush1.bf16.xpose.msra.mxu0 0
        %4360 = vmatprep.subr.bf16.mxu0 0
        %4361 = vmatpush1.bf16.xpose.msra.mxu0 0
        %4362 = vmatprep.subr.bf16.mxu0 0
        %4363 = vmatpush1.bf16.xpose.msra.mxu0 0
        %4364 = vmatprep.subr.bf16.mxu0 0
        %4365 = vmatpush1.bf16.xpose.msra.mxu0 0
        %4366 = vmatprep.subr.bf16.mxu0 0
        %4367 = vmatpush1.bf16.xpose.msra.mxu0 0
        %4368 = vmatprep.subr.bf16.mxu0 0
        %4369 = vmatpush1.bf16.xpose.msra.mxu0 0
        %4370 = vmatprep.subr.bf16.mxu0 0
        %4371 = vmatpush1.bf16.xpose.msra.mxu0 0
        %4372 = vmatprep.subr.bf16.mxu0 0
        %4373 = vmatpush1.bf16.xpose.msra.mxu0 0
        %4374 = vmatprep.subr.bf16.mxu0 0
        %4375 = vmatpush1.bf16.xpose.msra.mxu0 0
        %4376 = vmatprep.subr.bf16.mxu0 0
        %4377 = vmatpush1.bf16.xpose.msra.mxu0 0
        %4378 = vmatprep.subr.bf16.mxu0 0
        %4379 = vmatpush1.bf16.xpose.msra.mxu0 0
        %4380 = vmatprep.mubr.bf16.mxu0 0
        %4381 = vmatmul.mubr.bf16.gmra.mrb[0].mxu0 %v4343
        %v4382 = vpop.f32.mrb[0].mxu0
        %v4383 = vadd.f32 0.0, %v4382
        %v4384 = vpop.f32.mrb[0].mxu0
        %v4385 = vpop.f32.mrb[0].mxu0
        %v4386 = vpop.f32.mrb[0].mxu0
        %4387 = vdwg.mxu0
        %4388 = vxpose.xlu0.b32.start [1/16] %v4245, 128
        %4389 = vxpose.xlu0.b32.cont [2/16] 0.0, 128
        %4390 = vxpose.xlu0.b32.cont [3/16] 0.0, 128
        %4391 = vxpose.xlu0.b32.cont [4/16] 0.0, 128
        %4392 = vxpose.xlu0.b32.cont [5/16] 0.0, 128
        %4393 = vxpose.xlu0.b32.cont [6/16] 0.0, 128
        %4394 = vxpose.xlu0.b32.cont [7/16] 0.0, 128
        %4395 = vxpose.xlu0.b32.cont [8/16] 0.0, 128
        %4396 = vxpose.xlu0.b32.cont [9/16] 0.0, 128
        %4397 = vxpose.xlu0.b32.cont [10/16] 0.0, 128
        %4398 = vxpose.xlu0.b32.cont [11/16] 0.0, 128
        %4399 = vxpose.xlu0.b32.cont [12/16] 0.0, 128
        %4400 = vxpose.xlu0.b32.cont [13/16] 0.0, 128
        %4401 = vxpose.xlu0.b32.cont [14/16] 0.0, 128
        %4402 = vxpose.xlu0.b32.cont [15/16] 0.0, 128
        %4403 = vxpose.xlu0.b32.end [16/16] 0.0, 128
        %v4404 = vpop.trf.xlu0
        %v4405 = vpop.trf.xlu0
        %v4406 = vpop.trf.xlu0
        %v4407 = vpop.trf.xlu0
        %v4408 = vpop.trf.xlu0
        %v4409 = vpop.trf.xlu0
        %v4410 = vpop.trf.xlu0
        %v4411 = vpop.trf.xlu0
        %v4412 = vpop.trf.xlu0
        %v4413 = vpop.trf.xlu0
        %v4414 = vpop.trf.xlu0
        %v4415 = vpop.trf.xlu0
        %v4416 = vpop.trf.xlu0
        %v4417 = vpop.trf.xlu0
        %v4418 = vpop.trf.xlu0
        %v4419 = vpop.trf.xlu0
        %4420 = vxpose.xlu0.b32.start [1/16] %v4291, 128
        %4421 = vxpose.xlu0.b32.cont [2/16] 0.0, 128
        %4422 = vxpose.xlu0.b32.cont [3/16] 0.0, 128
        %4423 = vxpose.xlu0.b32.cont [4/16] 0.0, 128
        %4424 = vxpose.xlu0.b32.cont [5/16] 0.0, 128
        %4425 = vxpose.xlu0.b32.cont [6/16] 0.0, 128
        %4426 = vxpose.xlu0.b32.cont [7/16] 0.0, 128
        %4427 = vxpose.xlu0.b32.cont [8/16] 0.0, 128
        %4428 = vxpose.xlu0.b32.cont [9/16] 0.0, 128
        %4429 = vxpose.xlu0.b32.cont [10/16] 0.0, 128
        %4430 = vxpose.xlu0.b32.cont [11/16] 0.0, 128
        %4431 = vxpose.xlu0.b32.cont [12/16] 0.0, 128
        %4432 = vxpose.xlu0.b32.cont [13/16] 0.0, 128
        %4433 = vxpose.xlu0.b32.cont [14/16] 0.0, 128
        %4434 = vxpose.xlu0.b32.cont [15/16] 0.0, 128
        %4435 = vxpose.xlu0.b32.end [16/16] 0.0, 128
        %v4436 = vpop.trf.xlu0
        %v4437 = vpop.trf.xlu0
        %v4438 = vpop.trf.xlu0
        %v4439 = vpop.trf.xlu0
        %v4440 = vpop.trf.xlu0
        %v4441 = vpop.trf.xlu0
        %v4442 = vpop.trf.xlu0
        %v4443 = vpop.trf.xlu0
        %v4444 = vpop.trf.xlu0
        %v4445 = vpop.trf.xlu0
        %v4446 = vpop.trf.xlu0
        %v4447 = vpop.trf.xlu0
        %v4448 = vpop.trf.xlu0
        %v4449 = vpop.trf.xlu0
        %v4450 = vpop.trf.xlu0
        %v4451 = vpop.trf.xlu0
        %4452 = vxpose.xlu0.b32.start [1/16] %v4337, 128
        %4453 = vxpose.xlu0.b32.cont [2/16] 0.0, 128
        %4454 = vxpose.xlu0.b32.cont [3/16] 0.0, 128
        %4455 = vxpose.xlu0.b32.cont [4/16] 0.0, 128
        %4456 = vxpose.xlu0.b32.cont [5/16] 0.0, 128
        %4457 = vxpose.xlu0.b32.cont [6/16] 0.0, 128
        %4458 = vxpose.xlu0.b32.cont [7/16] 0.0, 128
        %4459 = vxpose.xlu0.b32.cont [8/16] 0.0, 128
        %4460 = vxpose.xlu0.b32.cont [9/16] 0.0, 128
        %4461 = vxpose.xlu0.b32.cont [10/16] 0.0, 128
        %4462 = vxpose.xlu0.b32.cont [11/16] 0.0, 128
        %4463 = vxpose.xlu0.b32.cont [12/16] 0.0, 128
        %4464 = vxpose.xlu0.b32.cont [13/16] 0.0, 128
        %4465 = vxpose.xlu0.b32.cont [14/16] 0.0, 128
        %4466 = vxpose.xlu0.b32.cont [15/16] 0.0, 128
        %4467 = vxpose.xlu0.b32.end [16/16] 0.0, 128
        %v4468 = vpop.trf.xlu0
        %v4469 = vpop.trf.xlu0
        %v4470 = vpop.trf.xlu0
        %v4471 = vpop.trf.xlu0
        %v4472 = vpop.trf.xlu0
        %v4473 = vpop.trf.xlu0
        %v4474 = vpop.trf.xlu0
        %v4475 = vpop.trf.xlu0
        %v4476 = vpop.trf.xlu0
        %v4477 = vpop.trf.xlu0
        %v4478 = vpop.trf.xlu0
        %v4479 = vpop.trf.xlu0
        %v4480 = vpop.trf.xlu0
        %v4481 = vpop.trf.xlu0
        %v4482 = vpop.trf.xlu0
        %v4483 = vpop.trf.xlu0
        %4484 = vxpose.xlu0.b32.start [1/16] %v4383, 128
        %4485 = vxpose.xlu0.b32.cont [2/16] 0.0, 128
        %4486 = vxpose.xlu0.b32.cont [3/16] 0.0, 128
        %4487 = vxpose.xlu0.b32.cont [4/16] 0.0, 128
        %4488 = vxpose.xlu0.b32.cont [5/16] 0.0, 128
        %4489 = vxpose.xlu0.b32.cont [6/16] 0.0, 128
        %4490 = vxpose.xlu0.b32.cont [7/16] 0.0, 128
        %4491 = vxpose.xlu0.b32.cont [8/16] 0.0, 128
        %4492 = vxpose.xlu0.b32.cont [9/16] 0.0, 128
        %4493 = vxpose.xlu0.b32.cont [10/16] 0.0, 128
        %4494 = vxpose.xlu0.b32.cont [11/16] 0.0, 128
        %4495 = vxpose.xlu0.b32.cont [12/16] 0.0, 128
        %4496 = vxpose.xlu0.b32.cont [13/16] 0.0, 128
        %4497 = vxpose.xlu0.b32.cont [14/16] 0.0, 128
        %4498 = vxpose.xlu0.b32.cont [15/16] 0.0, 128
        %4499 = vxpose.xlu0.b32.end [16/16] 0.0, 128
        %v4500 = vpop.trf.xlu0
        %v4501 = vpop.trf.xlu0
        %v4502 = vpop.trf.xlu0
        %v4503 = vpop.trf.xlu0
        %v4504 = vpop.trf.xlu0
        %v4505 = vpop.trf.xlu0
        %v4506 = vpop.trf.xlu0
        %v4507 = vpop.trf.xlu0
        %v4508 = vpop.trf.xlu0
        %v4509 = vpop.trf.xlu0
        %v4510 = vpop.trf.xlu0
        %v4511 = vpop.trf.xlu0
        %v4512 = vpop.trf.xlu0
        %v4513 = vpop.trf.xlu0
        %v4514 = vpop.trf.xlu0
        %v4515 = vpop.trf.xlu0
        %v4516 = vcombine.low %v4404, %v4468
        %v4517 = vcombine.high %v4404, %v4468
        %v4519 = vunpack.c.l.s4 1983009808
        %v4520 = vunpack.c.0.s8 %v4519
        %v4521 = vlaneseq
        %v4522 = vshrl.u32 %v4521, 7
        %v4523 = vsub.s32 %v4520, %v4522
        %v4524 = vrot.slane %v4516, %v4523
        %v4526 = vunpack.c.l.s4 1983009808
        %v4527 = vunpack.c.0.s8 %v4526
        %v4528 = vlaneseq
        %v4529 = vshrl.u32 %v4528, 7
        %v4530 = vsub.s32 %v4527, %v4529
        %v4531 = vrot.slane %v4517, %v4530
        %v4532 = vcombine.low %v4436, %v4500
        %v4533 = vcombine.high %v4436, %v4500
        %v4535 = vunpack.c.l.s4 1983009808
        %v4536 = vunpack.c.0.s8 %v4535
        %v4537 = vlaneseq
        %v4538 = vshrl.u32 %v4537, 7
        %v4539 = vsub.s32 %v4536, %v4538
        %v4540 = vrot.slane %v4532, %v4539
        %v4542 = vunpack.c.l.s4 1983009808
        %v4543 = vunpack.c.0.s8 %v4542
        %v4544 = vlaneseq
        %v4545 = vshrl.u32 %v4544, 7
        %v4546 = vsub.s32 %v4543, %v4545
        %v4547 = vrot.slane %v4533, %v4546
        %v4548 = vcombine.low %v4524, %v4540
        %v4549 = vcombine.high %v4524, %v4540
        %v4551 = vunpack.c.l.s4 1934713408
        %v4552 = vunpack.c.0.s8 %v4551
        %v4553 = vlaneseq
        %v4554 = vshrl.u32 %v4553, 7
        %v4555 = vsub.s32 %v4552, %v4554
        %v4556 = vrot.slane %v4548, %v4555
        %v4558 = vunpack.c.l.s4 1934713408
        %v4559 = vunpack.c.0.s8 %v4558
        %v4560 = vlaneseq
        %v4561 = vshrl.u32 %v4560, 7
        %v4562 = vsub.s32 %v4559, %v4561
        %v4563 = vrot.slane %v4549, %v4562
        %v4564 = vcombine.low %v4531, %v4547
        %v4565 = vcombine.high %v4531, %v4547
        %v4567 = vunpack.c.l.s4 1934713408
        %v4568 = vunpack.c.0.s8 %v4567
        %v4569 = vlaneseq
        %v4570 = vshrl.u32 %v4569, 7
        %v4571 = vsub.s32 %v4568, %v4570
        %v4572 = vrot.slane %v4564, %v4571
        %v4574 = vunpack.c.l.s4 1934713408
        %v4575 = vunpack.c.0.s8 %v4574
        %v4576 = vlaneseq
        %v4577 = vshrl.u32 %v4576, 7
        %v4578 = vsub.s32 %v4575, %v4577
        %v4579 = vrot.slane %v4565, %v4578
        %v4580 = vcombine.high %v4556, 0.0
        %v4581 = vcombine.high %v4563, 0.0
        %v4582 = vcombine.high %v4572, 0.0
        %v4583 = vcombine.high %v4579, 0.0
        %v4584 = vcombine.low %v4556, %v4563
        %v4586 = vunpack.c.l.s4 1983009808
        %v4587 = vunpack.c.0.s8 %v4586
        %v4588 = vlaneseq
        %v4589 = vshrl.u32 %v4588, 7
        %v4590 = vsub.s32 %v4587, %v4589
        %v4591 = vrot.slane %v4584, %v4590
        %v4592 = vcombine.low %v4580, %v4581
        %v4594 = vunpack.c.l.s4 1983009808
        %v4595 = vunpack.c.0.s8 %v4594
        %v4596 = vlaneseq
        %v4597 = vshrl.u32 %v4596, 7
        %v4598 = vsub.s32 %v4595, %v4597
        %v4599 = vrot.slane %v4592, %v4598
        %v4600 = vcombine.low %v4572, %v4579
        %v4602 = vunpack.c.l.s4 1983009808
        %v4603 = vunpack.c.0.s8 %v4602
        %v4604 = vlaneseq
        %v4605 = vshrl.u32 %v4604, 7
        %v4606 = vsub.s32 %v4603, %v4605
        %v4607 = vrot.slane %v4600, %v4606
        %v4608 = vcombine.low %v4582, %v4583
        %v4610 = vunpack.c.l.s4 1983009808
        %v4611 = vunpack.c.0.s8 %v4610
        %v4612 = vlaneseq
        %v4613 = vshrl.u32 %v4612, 7
        %v4614 = vsub.s32 %v4611, %v4613
        %v4615 = vrot.slane %v4608, %v4614
        %v4616 = vcombine.low %v4591, %v4599
        %v4617 = vcombine.high %v4591, %v4599
        %v4619 = vunpack.c.l.s4 1934713408
        %v4620 = vunpack.c.0.s8 %v4619
        %v4621 = vlaneseq
        %v4622 = vshrl.u32 %v4621, 7
        %v4623 = vsub.s32 %v4620, %v4622
        %v4624 = vrot.slane %v4616, %v4623
        %v4626 = vunpack.c.l.s4 1934713408
        %v4627 = vunpack.c.0.s8 %v4626
        %v4628 = vlaneseq
        %v4629 = vshrl.u32 %v4628, 7
        %v4630 = vsub.s32 %v4627, %v4629
        %v4631 = vrot.slane %v4617, %v4630
        %v4632 = vcombine.low %v4607, %v4615
        %v4633 = vcombine.high %v4607, %v4615
        %v4635 = vunpack.c.l.s4 1934713408
        %v4636 = vunpack.c.0.s8 %v4635
        %v4637 = vlaneseq
        %v4638 = vshrl.u32 %v4637, 7
        %v4639 = vsub.s32 %v4636, %v4638
        %v4640 = vrot.slane %v4632, %v4639
        %v4642 = vunpack.c.l.s4 1934713408
        %v4643 = vunpack.c.0.s8 %v4642
        %v4644 = vlaneseq
        %v4645 = vshrl.u32 %v4644, 7
        %v4646 = vsub.s32 %v4643, %v4645
        %v4647 = vrot.slane %v4633, %v4646
        %v4648 = vcombine.low %v4624, %v4640
        %v4649 = vcombine.high %v4624, %v4640
        %v4650 = vcombine.low %v4631, %v4647
        %v4651 = vcombine.high %v4631, %v4647
        %4653 = vrot.lane.b32.xlu0 %v4649, 8
        %v4654 = vpop.permute.xlu0 %4653
        %4657 = vrot.lane.b32.xlu0 %v4650, 16
        %v4658 = vpop.permute.xlu0 %4657
        %4661 = vrot.lane.b32.xlu0 %v4651, 24
        %v4662 = vpop.permute.xlu0 %4661
        %v4664 = vsel %vm1372, %v4648, %v4654
        %v4665 = vsel %vm2499, %v4664, %v4658
        %v4666 = vsel %vm2501, %v4665, %v4662
        %v4667 = vpack.c.bf16 %v4666, %v4666
        %v4669 = vsel %vm586, %v4667, 0
        %4671 = vmatprep.subr.bf16.mxu0 0
        %4672 = vmatpush1.bf16.msra.mxu0 %v2518
        %4673 = vmatprep.subr.bf16.mxu0 0
        %4674 = vmatpush1.bf16.msra.mxu0 %v2519
        %4675 = vmatprep.subr.bf16.mxu0 0
        %4676 = vmatpush1.bf16.msra.mxu0 0
        %4677 = vmatprep.subr.bf16.mxu0 0
        %4678 = vmatpush1.bf16.msra.mxu0 0
        %4679 = vmatprep.subr.bf16.mxu0 0
        %4680 = vmatpush1.bf16.msra.mxu0 0
        %4681 = vmatprep.subr.bf16.mxu0 0
        %4682 = vmatpush1.bf16.msra.mxu0 0
        %4683 = vmatprep.subr.bf16.mxu0 0
        %4684 = vmatpush1.bf16.msra.mxu0 0
        %4685 = vmatprep.subr.bf16.mxu0 0
        %4686 = vmatpush1.bf16.msra.mxu0 0
        %4687 = vmatprep.subr.bf16.mxu0 0
        %4688 = vmatpush1.bf16.msra.mxu0 0
        %4689 = vmatprep.subr.bf16.mxu0 0
        %4690 = vmatpush1.bf16.msra.mxu0 0
        %4691 = vmatprep.subr.bf16.mxu0 0
        %4692 = vmatpush1.bf16.msra.mxu0 0
        %4693 = vmatprep.subr.bf16.mxu0 0
        %4694 = vmatpush1.bf16.msra.mxu0 0
        %4695 = vmatprep.subr.bf16.mxu0 0
        %4696 = vmatpush1.bf16.msra.mxu0 0
        %4697 = vmatprep.subr.bf16.mxu0 0
        %4698 = vmatpush1.bf16.msra.mxu0 0
        %4699 = vmatprep.subr.bf16.mxu0 0
        %4700 = vmatpush1.bf16.msra.mxu0 0
        %4701 = vmatprep.subr.bf16.mxu0 0
        %4702 = vmatpush1.bf16.msra.mxu0 0
        %4703 = vmatprep.mubr.bf16.mxu0 0
        %4704 = vmatmul.mubr.bf16.gmra.mrb[0].mxu0 %v4669
        %v4705 = vpop.f32.mrb[0].mxu0
        %v4706 = vadd.f32 %v2508, %v4705
        %v4707 = vpop.f32.mrb[0].mxu0
        %v4708 = vpop.f32.mrb[0].mxu0
        %v4709 = vpop.f32.mrb[0].mxu0
        %4710 = vdwg.mxu0
        %v4711 = vadd.f32 %v2759, %v4706
        %v4712 = vsel %vm586, %v4711, 0.0
        %4713 = vadd.xlane.f32.xlu0 %v4712
        %v4714 = vpop.xlane.xlu0 %4713
        %v4715 = vmul.f32 %v4714, %v2569
        %v4716 = vsub.f32 %v4711, %v4715
        %v4717 = vmul.f32 %v4716, %v4716
        %v4718 = vsel %vm586, %v4717, 0.0
        %4719 = vadd.xlane.f32.xlu0 %v4718
        %v4720 = vpop.xlane.xlu0 %4719
        %v4721 = vmul.f32 %v4720, %v2569
        %v4722 = vadd.f32 %v4721, 1e-05
        %v4723 = vrsqrt.pop %v4722
        %v4724 = vmul.f32 %v4716, %v4723
        %v4725 = vmul.f32 %v4724, %v2584
        %v4726 = vadd.f32 %v4725, %v2591
        %v4727 = vpack.c.bf16 %v4726, %v4726
        %v4729 = vsel %vm586, %v4727, 0
        %4731 = vmatprep.subr.bf16.mxu0 0
        %4732 = vmatpush1.bf16.msra.mxu0 %v2609
        %4733 = vmatprep.subr.bf16.mxu0 0
        %4734 = vmatpush1.bf16.msra.mxu0 %v2610
        %4735 = vmatprep.subr.bf16.mxu0 0
        %4736 = vmatpush1.bf16.msra.mxu0 0
        %4737 = vmatprep.subr.bf16.mxu0 0
        %4738 = vmatpush1.bf16.msra.mxu0 0
        %4739 = vmatprep.subr.bf16.mxu0 0
        %4740 = vmatpush1.bf16.msra.mxu0 0
        %4741 = vmatprep.subr.bf16.mxu0 0
        %4742 = vmatpush1.bf16.msra.mxu0 0
        %4743 = vmatprep.subr.bf16.mxu0 0
        %4744 = vmatpush1.bf16.msra.mxu0 0
        %4745 = vmatprep.subr.bf16.mxu0 0
        %4746 = vmatpush1.bf16.msra.mxu0 0
        %4747 = vmatprep.subr.bf16.mxu0 0
        %4748 = vmatpush1.bf16.msra.mxu0 0
        %4749 = vmatprep.subr.bf16.mxu0 0
        %4750 = vmatpush1.bf16.msra.mxu0 0
        %4751 = vmatprep.subr.bf16.mxu0 0
        %4752 = vmatpush1.bf16.msra.mxu0 0
        %4753 = vmatprep.subr.bf16.mxu0 0
        %4754 = vmatpush1.bf16.msra.mxu0 0
        %4755 = vmatprep.subr.bf16.mxu0 0
        %4756 = vmatpush1.bf16.msra.mxu0 0
        %4757 = vmatprep.subr.bf16.mxu0 0
        %4758 = vmatpush1.bf16.msra.mxu0 0
        %4759 = vmatprep.subr.bf16.mxu0 0
        %4760 = vmatpush1.bf16.msra.mxu0 0
        %4761 = vmatprep.subr.bf16.mxu0 0
        %4762 = vmatpush1.bf16.msra.mxu0 0
        %4763 = vmatprep.mubr.bf16.mxu0 0
        %4764 = vmatmul.mubr.bf16.gmra.mrb[0].mxu0 %v4729
        %v4765 = vpop.f32.mrb[0].mxu0
        %v4766 = vadd.f32 %v2599, %v4765
        %v4767 = vpop.f32.mrb[0].mxu0
        %v4768 = vpop.f32.mrb[0].mxu0
        %v4769 = vpop.f32.mrb[0].mxu0
        %4770 = vdwg.mxu0
        %v4771 = vmax.f32 %v4766, 0.0
        %v4772 = vpack.c.bf16 %v4771, %v4771
        %v4774 = vsel %vm2688, %v4772, 0
        %4776 = vmatprep.subr.bf16.mxu0 0
        %4777 = vmatpush1.bf16.msra.mxu0 %v2680
        %4778 = vmatprep.subr.bf16.mxu0 0
        %4779 = vmatpush1.bf16.msra.mxu0 %v2681
        %4780 = vmatprep.subr.bf16.mxu0 0
        %4781 = vmatpush1.bf16.msra.mxu0 %v2682
        %4782 = vmatprep.subr.bf16.mxu0 0
        %4783 = vmatpush1.bf16.msra.mxu0 %v2683
        %4784 = vmatprep.subr.bf16.mxu0 0
        %4785 = vmatpush1.bf16.msra.mxu0 0
        %4786 = vmatprep.subr.bf16.mxu0 0
        %4787 = vmatpush1.bf16.msra.mxu0 0
        %4788 = vmatprep.subr.bf16.mxu0 0
        %4789 = vmatpush1.bf16.msra.mxu0 0
        %4790 = vmatprep.subr.bf16.mxu0 0
        %4791 = vmatpush1.bf16.msra.mxu0 0
        %4792 = vmatprep.subr.bf16.mxu0 0
        %4793 = vmatpush1.bf16.msra.mxu0 0
        %4794 = vmatprep.subr.bf16.mxu0 0
        %4795 = vmatpush1.bf16.msra.mxu0 0
        %4796 = vmatprep.subr.bf16.mxu0 0
        %4797 = vmatpush1.bf16.msra.mxu0 0
        %4798 = vmatprep.subr.bf16.mxu0 0
        %4799 = vmatpush1.bf16.msra.mxu0 0
        %4800 = vmatprep.subr.bf16.mxu0 0
        %4801 = vmatpush1.bf16.msra.mxu0 0
        %4802 = vmatprep.subr.bf16.mxu0 0
        %4803 = vmatpush1.bf16.msra.mxu0 0
        %4804 = vmatprep.subr.bf16.mxu0 0
        %4805 = vmatpush1.bf16.msra.mxu0 0
        %4806 = vmatprep.subr.bf16.mxu0 0
        %4807 = vmatpush1.bf16.msra.mxu0 0
        %4808 = vmatprep.mubr.bf16.mxu0 0
        %4809 = vmatmul.mubr.bf16.gmra.mrb[0].mxu0 %v4774
        %v4810 = vpop.f32.mrb[0].mxu0
        %v4811 = vadd.f32 %v2662, %v4810
        %v4812 = vpop.f32.mrb[0].mxu0
        %v4813 = vpop.f32.mrb[0].mxu0
        %v4814 = vpop.f32.mrb[0].mxu0
        %4815 = vdwg.mxu0
        %v4816 = vadd.f32 %v4726, %v4811
        %v4817 = vsel %vm586, %v4816, 0.0
        %4818 = vadd.xlane.f32.xlu0 %v4817
        %v4819 = vpop.xlane.xlu0 %4818
        %v4820 = vmul.f32 %v4819, %v2569
        %v4821 = vsub.f32 %v4816, %v4820
        %v4822 = vmul.f32 %v4821, %v4821
        %v4823 = vsel %vm586, %v4822, 0.0
        %4824 = vadd.xlane.f32.xlu0 %v4823
        %v4825 = vpop.xlane.xlu0 %4824
        %v4826 = vmul.f32 %v4825, %v2569
        %v4827 = vadd.f32 %v4826, 1e-05
        %v4828 = vrsqrt.pop %v4827
        %v4829 = vmul.f32 %v4821, %v4828
        %v4830 = vmul.f32 %v4829, %v2750
        %v4831 = vadd.f32 %v4830, %v2757
        %4832 = vst.msk [vmem:[%s524] sm:$0xff] %vm586, %v4831
        %s4833 = sand.u32 %s364, 1
        %s4834 = scalar_lea.sflag [#allocation4], %s4833
        %s4835 = sand.u32 %s364, 1
        %s4836 = smul.addr %s4835, 8
        %s4837 = scalar_lea.vmem [#allocation7], %s4836
        // Predicated region
        $region89: #{tpu_custom_call.1} parent=79 // pred_check
          %p4838 = pneg %p374
        $region90: #{tpu_custom_call.1} parent=79 // pred_check_branch
          %4840 = sbr.rel (%p4838) target = $region92
        $region91: #{tpu_custom_call.1} parent=79 // pred_region
          %s4842 = ssub.s32 128, 128
          %4843 = vsyncadd %s4834, %s4842
          %s4844 = smul.addr %s31, 128
          %s4845 = scalar_lea.hbm %s15, %s4844
          %s4847 = sshll.u32 %s4837, 4
          %s4848 = int_to_ptr.vmem [resolvable:$true] %s4847
          %4850 = dma.vmem_to_hbm [thread:$0]  %s4848, 128, %s4845, %s4834
        $region92: #{tpu_custom_call.1} parent=79 // pred_fallthru
          _
      $region80: #{tpu_custom_call.1} parent=5 // pred_fallthru
        _
      %p4851 = scmp.le.s32.totalorder 2, %s26
      // Predicated region
      $region93: #{tpu_custom_call.1} parent=5 // pred_check
        %p4852 = pneg %p4851
      $region94: #{tpu_custom_call.1} parent=5 // pred_check_branch
        %4854 = sbr.rel (%p4852) target = $region96
      $region95: #{tpu_custom_call.1} parent=5 // pred_region
        %s4855 = ssub.s32 %s26, 2
        // Predicated region
        $region97: #{tpu_custom_call.1} parent=95 // pred_check
          %p4856 = pneg %p380
        $region98: #{tpu_custom_call.1} parent=95 // pred_check_branch
          %4858 = sbr.rel (%p4856) target = $region100
        $region99: #{tpu_custom_call.1} parent=95 // pred_region
          %s4859 = sand.u32 %s365, 1
          %s4860 = scalar_lea.sflag [#allocation4], %s4859
          %s4861 = sand.u32 %s365, 1
          %s4862 = smul.addr %s4861, 8
          %s4863 = scalar_lea.vmem [#allocation7], %s4862
          %4864 = dma.done %s4860, 128
        $region100: #{tpu_custom_call.1} parent=95 // pred_fallthru
          _
      $region96: #{tpu_custom_call.1} parent=5 // pred_fallthru
        _
    $region6: #{tpu_custom_call.1} parent=1 // loop_footer
      %s30 = sadd.s32 1, %s26
    $region7: #{tpu_custom_call.1} parent=1 // loop_footer_branch
      %25 = sbr.rel target = $region3
    $region8: #{tpu_custom_call.1} parent=1 // loop_exit
      _
    %4865 = vsyncpa [#allocation3], 1
    %s4866 = scalar_lea.sflag [#allocation3], 1
    %4867 = vsyncpa %s4866, 1
    %4868 = vsyncpa [#allocation6], 1
    %4869 = vsyncpa [#allocation4], 1
    %s4870 = scalar_lea.sflag [#allocation4], 1
    %4871 = vsyncpa %s4870, 1

</llo_original>
